<compile_context>
chip_gen: v5e
topology: v5e:2x2
jax: 0.10.0
libtpu: 0.0.40
codegen_flags: <defaults>
</compile_context>

<pallas_src>
import functools

import jax
import jax.numpy as jnp
from jax.experimental import pallas as pl
from jax.experimental.pallas import tpu as pltpu


# -----------------------------------------------------------------------------
# Fused kernel: input assembly + full GATConv stack + output transpose.
# -----------------------------------------------------------------------------
def _base_avg_kernel(x2d_ref, ptx_ref, sbuf_ref, img_ref, ptx_out_ref, *,
                     layer_cfg, off, n_points, hw, in_ch, use_bf16):
    mxu_dt = jnp.bfloat16 if use_bf16 else jnp.float32
    n = n_points + hw
    fout = layer_cfg[-1][0] * layer_cfg[-1][1]

    def blk(name, r, c):
        s = off[name]                       # static, 8-aligned row offset
        return sbuf_ref[s:s + r, :c]

    # ---- static-graph tensors, unpacked once from the packed buffer ----------
    adj = blk("adj", n, n)                                        # [N, N]
    # additive mask: 0 on edges, -1e30 off-graph (finite, robust vs -inf).
    adj_bias = (adj - 1.0) * jnp.float32(1e30)
    eye_hw = blk("eye", hw, hw)                                   # [HW, HW]

    # ---- input assembly (formerly XLA glue, now fused) ------------------------
    # pixel nodes = x2d.T, done on the MXU via the packed identity (avoids an
    # XLU transpose of an odd-shaped tile); then stack under the point nodes.
    x_nodes = jax.lax.dot_general(
        eye_hw, x2d_ref[...], (((1,), (1,)), ((), ())),
        preferred_element_type=jnp.float32)                       # [HW, C]
    feat = jnp.concatenate([ptx_ref[...], x_nodes], axis=0)       # [N, C]

    def elu(v):
        # alpha = 1; clamp the dead branch so exp never overflows.
        return jnp.where(v > 0.0, v, jnp.exp(jnp.minimum(v, 0.0)) - 1.0)

    fin = in_ch
    for li, (heads, out_ch) in enumerate(layer_cfg):
        hc = heads * out_ch
        w = blk(f"w{li}", fin, hc).astype(mxu_dt)                 # [Fin, HC]
        asrc_t = blk(f"asrc{li}", heads, hc)                      # [H, HC]
        adst_bd = blk(f"adst{li}", hc, heads)                     # [HC, H]

        # Linear transform for all heads at once (MXU, f32 accumulate).
        h = jnp.dot(feat.astype(mxu_dt), w,
                    preferred_element_type=jnp.float32)           # [N, HC]

        # Per-node attention scores for every head with two MXU matmuls,
        # orientations chosen so no transposes are needed downstream.
        a_s_t = jax.lax.dot_general(
            asrc_t, h, (((1,), (1,)), ((), ())),
            preferred_element_type=jnp.float32)                   # [H, N]
        a_d = jnp.dot(h, adst_bd, preferred_element_type=jnp.float32)  # [N, H]

        # Stacked raw scores e[hd, i, j] = a_dst[i, hd] + a_src[j, hd]; the
        # whole LeakyReLU -> mask -> softmax chain then runs ONCE over all
        # heads instead of per head.
        e = jnp.stack([a_d[:, hd:hd + 1] + a_s_t[hd:hd + 1, :]
                       for hd in range(heads)], axis=0)           # [H, N, N]
        e = jnp.where(e > 0.0, e, 0.2 * e) + adj_bias[None]
        m = jnp.max(e, axis=-1, keepdims=True)                    # [H, N, 1]
        # keep probs unnormalized; `* adj` guarantees exact zeros off-graph
        # (zero in-degree rows then aggregate to 0, not NaN as in torch).
        p = jnp.exp(e - m) * adj[None]                            # [H, N, N]
        denom = jnp.sum(p, axis=-1, keepdims=True)                # [H, N, 1]
        # EUP approx reciprocal (~2^-12 rel. error on the softmax denom).
        inv = pl.reciprocal(denom + 1e-16, approx=True)           # [H, N, 1]

        # Aggregate neighbours per head at full output width (MXU); the
        # precomputed per-head lane mask (packed constant, no per-head iota)
        # selects this head's block, normalization folded post-matmul.
        h_agg = h.astype(mxu_dt)
        masks = blk(f"mask_{heads}_{out_ch}", heads, hc) if heads > 1 else None
        out = None
        for hd in range(heads):
            contrib = jnp.dot(p[hd].astype(mxu_dt), h_agg,
                              preferred_element_type=jnp.float32)  # [N, HC]
            scale = inv[hd] if heads == 1 else masks[hd:hd + 1, :] * inv[hd]
            term = contrib * scale
            out = term if out is None else out + term

        feat = elu(out)                 # ELU after every layer (incl. last)
        fin = hc

    # ---- outputs (post-glue fused) --------------------------------------------
    ptx_out_ref[...] = feat[:n_points, :]
    # image written channel-major [F, H*W] (MXU transpose via identity) so the
    # wrapper only needs a free reshape to NCHW.
    eye_f = blk("eye", fout, fout)      # top-left corner of eye(hw)
    img_ref[...] = jax.lax.dot_general(
        eye_f, feat[n_points:, :], (((1,), (1,)), ((), ())),
        preferred_element_type=jnp.float32)


def base_avg_call(x2d, ptx, sbuf, *, layer_cfg, off, hw, use_bf16):
    n_points, in_ch = ptx.shape
    fout = layer_cfg[-1][0] * layer_cfg[-1][1]
    vmem = pl.BlockSpec(memory_space=pltpu.MemorySpace.VMEM)
    kernel = functools.partial(
        _base_avg_kernel, layer_cfg=layer_cfg, off=off, n_points=n_points,
        hw=hw, in_ch=in_ch, use_bf16=use_bf16)
    # Single shot (no grid): everything fits whole-in-VMEM at N = 80 and the
    # original module asserts bs == 1.
    # TODO(synk): batched variant -> leading sample grid axis with
    # dimension_semantics=("parallel",) + lane-dense packed output slab.
    return pl.pallas_call(
        kernel,
        out_shape=(jax.ShapeDtypeStruct((fout, hw), jnp.float32),
                   jax.ShapeDtypeStruct((n_points, fout), jnp.float32)),
        in_specs=[vmem, vmem, vmem],
        out_specs=[vmem, vmem],
    )(x2d, ptx, sbuf)


# -----------------------------------------------------------------------------
# Parameter init + host-side static packing (done once, outside the hot path).
# -----------------------------------------------------------------------------
def init_params(key, in_channels, layer_cfg):
    params = []
    fin = in_channels
    for hd, ch in layer_cfg:
        key, k_w, k_s, k_d = jax.random.split(key, 4)
        w = 0.2 * jax.random.normal(k_w, (fin, hd * ch), jnp.float32)
        att_src = 0.2 * jax.random.normal(k_s, (hd, ch), jnp.float32)
        att_dst = 0.2 * jax.random.normal(k_d, (hd, ch), jnp.float32)

        att_src_t = jnp.zeros((hd, hd * ch), jnp.float32)     # [H, H*C]
        att_dst_bd = jnp.zeros((hd * ch, hd), jnp.float32)    # [H*C, H]
        for head in range(hd):
            att_src_t = att_src_t.at[head, head * ch:(head + 1) * ch].set(att_src[head])
            att_dst_bd = att_dst_bd.at[head * ch:(head + 1) * ch, head].set(att_dst[head])

        params.append(dict(w=w, att_src_t=att_src_t, att_dst_bd=att_dst_bd))
        fin = hd * ch
    return params


def build_adjacency(point_edges, n):
    """Dense adjacency from edge_index (row 0 = src, row 1 = dst). Built once."""
    src = point_edges[0]
    dst = point_edges[1]
    return jnp.zeros((n, n), jnp.float32).at[dst, src].set(1.0)


def pack_static(params, adj, layer_cfg, hw):
    """Pack every weight / attention matrix, per-head lane masks, a shared
    identity (for MXU-side transposes) and the dense adjacency into ONE
    [rows, 128] f32 buffer with static 8-aligned row offsets, so the
    pallas_call takes 3 inputs instead of 11."""
    lanes = 128
    blocks, off = [], {}

    def add(name, arr):
        arr = jnp.asarray(arr, jnp.float32)
        r, c = arr.shape
        assert c <= lanes, f"{name} too wide to pack: {c} > {lanes}"
        start = sum(int(b.shape[0]) for b in blocks)
        padded = jnp.zeros(((r + 7) // 8 * 8, lanes), jnp.float32).at[:r, :c].set(arr)
        blocks.append(padded)
        off[name] = start

    for li, p in enumerate(params):
        add(f"w{li}", p["w"])
        add(f"asrc{li}", p["att_src_t"])
        add(f"adst{li}", p["att_dst_bd"])
    # per-head lane masks for every distinct multi-head configuration
    for hd, ch in sorted(set(cfg for cfg in layer_cfg if cfg[0] > 1)):
        msk = jnp.zeros((hd, hd * ch), jnp.float32)
        for k in range(hd):
            msk = msk.at[k, k * ch:(k + 1) * ch].set(1.0)
        add(f"mask_{hd}_{ch}", msk)
    fout = layer_cfg[-1][0] * layer_cfg[-1][1]
    add("eye", jnp.eye(max(hw, fout), dtype=jnp.float32))
    add("adj", adj)
    return jnp.concatenate(blocks, axis=0), off


def mxu_prefers_bf16():
    """bf16 MXU inputs pay off on v6e/v7x; on v5e and older they only add cast
    work (review guidance), so stay f32 there."""
    try:
        kind = jax.devices()[0].device_kind.lower()
    except Exception:
        return False
    if "tpu" not in kind:
        return False
    return not any(t in kind for t in ("v2", "v3", "v4", "v5"))


# -----------------------------------------------------------------------------
# Forward glue: only FREE contiguous reshapes remain outside the kernel.
# -----------------------------------------------------------------------------
def base_avg_forward(sbuf, x, ptx, *, layer_cfg, off, bs, height, width, use_bf16):
    # TODO(synk): the gather_csr / segment_csr / list_to_map + pixel_tgt_idx
    # masking path of the reference has no clean Pallas equivalent and is
    # approximated by this dense-graph formulation (mask branch not exercised).
    assert bs == 1                                   # as in the original module
    c = x.shape[1]
    hw = height * width
    x2d = x.reshape(c, hw)                           # free reshape of NCHW input
    img, ptx_out = base_avg_call(x2d, ptx, sbuf, layer_cfg=layer_cfg, off=off,
                                 hw=hw, use_bf16=use_bf16)
    fout = layer_cfg[-1][0] * layer_cfg[-1][1]
    x_out = img.reshape(bs, fout, height, width)     # free reshape (already CHW)
    return x_out, ptx_out


# -----------------------------------------------------------------------------
if __name__ == "__main__":
    key = jax.random.PRNGKey(0)
    bs, in_channels, height, width = 1, 4, 8, 8
    n_points = 16
    n_nodes = n_points + height * width
    layer_cfg = ((4, 8), (4, 8), (1, 16))     # (heads, out_channels) per GATConv

    k_x, k_p, k_w = jax.random.split(key, 3)
    x = jax.random.normal(k_x, (bs, in_channels, height, width), jnp.float32)
    ptx = jax.random.normal(k_p, (n_points, in_channels), jnp.float32)

    # Deterministic synthetic edge set: each node receives 3 incoming edges.
    d = jnp.arange(n_nodes, dtype=jnp.int32)
    srcs = jnp.concatenate([(d + 1) % n_nodes, (d + 7) % n_nodes,
                            (d + 13) % n_nodes])
    dsts = jnp.concatenate([d, d, d])
    point_edges = jnp.stack([srcs, dsts], axis=0)            # [2, E]

    # Edges and weights are static -> dense adjacency + packed buffer built ONCE.
    adj = build_adjacency(point_edges, n_nodes)
    params = init_params(k_w, in_channels, layer_cfg)
    sbuf, off = pack_static(params, adj, layer_cfg, hw=height * width)
    use_bf16 = mxu_prefers_bf16()

    forward = jax.jit(functools.partial(
        base_avg_forward, layer_cfg=layer_cfg, off=off, bs=bs,
        height=height, width=width, use_bf16=use_bf16))
    out_img, out_ptx = forward(sbuf, x, ptx)
    jax.block_until_ready((out_img, out_ptx))

    assert out_img.shape == (bs, 16, height, width)
    assert out_ptx.shape == (n_points, 16)
    print("KERNEL_OK")
</pallas_src>

<mosaic_0001>
module attributes {stable_mosaic.version = 11 : i64} {
  func.func @_base_avg_kernel(%arg0: memref<4x64xf32, #tpu.memory_space<vmem>>, %arg1: memref<16x4xf32, #tpu.memory_space<vmem>>, %arg2: memref<328x128xf32, #tpu.memory_space<vmem>>, %arg3: memref<16x64xf32, #tpu.memory_space<vmem>>, %arg4: memref<16x16xf32, #tpu.memory_space<vmem>>) attributes {dimension_semantics = [], scalar_prefetch = 0 : i64, scratch_operands = 0 : i64, tpu.core_type = #tpu.core_type<tc>} {
    %c248 = arith.constant 248 : index
    %c0 = arith.constant 0 : index
    %0 = vector.load %arg2[%c248, %c0] : memref<328x128xf32, #tpu.memory_space<vmem>>, vector<80x80xf32>
    %cst = arith.constant 1.000000e+00 : f32
    %1 = vector.broadcast %cst : f32 to vector<80x80xf32>
    %2 = arith.subf %0, %1 : vector<80x80xf32>
    %cst_0 = arith.constant 1.000000e+30 : f32
    %3 = vector.broadcast %cst_0 : f32 to vector<80x80xf32>
    %4 = arith.mulf %2, %3 : vector<80x80xf32>
    %c184 = arith.constant 184 : index
    %c0_1 = arith.constant 0 : index
    %5 = vector.load %arg2[%c184, %c0_1] : memref<328x128xf32, #tpu.memory_space<vmem>>, vector<64x64xf32>
    %c0_2 = arith.constant 0 : index
    %c0_3 = arith.constant 0 : index
    %6 = vector.load %arg0[%c0_2, %c0_3] : memref<4x64xf32, #tpu.memory_space<vmem>>, vector<4x64xf32>
    %cst_4 = arith.constant dense<0.000000e+00> : vector<64x4xf32>
    %7 = tpu.matmul %5, %6, %cst_4 {dimension_numbers = #tpu.dot_dimension_numbers<[1], [1], [0], [0], [0, 0, 1, 0], [], []>} : vector<64x64xf32>, vector<4x64xf32>, vector<64x4xf32> -> vector<64x4xf32>
    %c0_5 = arith.constant 0 : index
    %c0_6 = arith.constant 0 : index
    %8 = vector.load %arg1[%c0_5, %c0_6] : memref<16x4xf32, #tpu.memory_space<vmem>>, vector<16x4xf32>
    %9 = tpu.concatenate %8, %7 in 0 : vector<16x4xf32>, vector<64x4xf32> -> vector<80x4xf32>
    %c0_7 = arith.constant 0 : index
    %c0_8 = arith.constant 0 : index
    %10 = vector.load %arg2[%c0_7, %c0_8] : memref<328x128xf32, #tpu.memory_space<vmem>>, vector<4x32xf32>
    %c8 = arith.constant 8 : index
    %c0_9 = arith.constant 0 : index
    %11 = vector.load %arg2[%c8, %c0_9] : memref<328x128xf32, #tpu.memory_space<vmem>>, vector<4x32xf32>
    %c16 = arith.constant 16 : index
    %c0_10 = arith.constant 0 : index
    %12 = vector.load %arg2[%c16, %c0_10] : memref<328x128xf32, #tpu.memory_space<vmem>>, vector<32x4xf32>
    %cst_11 = arith.constant dense<0.000000e+00> : vector<80x32xf32>
    %13 = tpu.matmul %9, %10, %cst_11 {dimension_numbers = #tpu.dot_dimension_numbers<[1], [0], [0], [1], [0, 0, 1, 1], [], []>} : vector<80x4xf32>, vector<4x32xf32>, vector<80x32xf32> -> vector<80x32xf32>
    %cst_12 = arith.constant dense<0.000000e+00> : vector<4x80xf32>
    %14 = tpu.matmul %11, %13, %cst_12 {dimension_numbers = #tpu.dot_dimension_numbers<[1], [1], [0], [0], [0, 0, 1, 0], [], []>} : vector<4x32xf32>, vector<80x32xf32>, vector<4x80xf32> -> vector<4x80xf32>
    %cst_13 = arith.constant dense<0.000000e+00> : vector<80x4xf32>
    %15 = tpu.matmul %13, %12, %cst_13 {dimension_numbers = #tpu.dot_dimension_numbers<[1], [0], [0], [1], [0, 0, 1, 1], [], []>} : vector<80x32xf32>, vector<32x4xf32>, vector<80x4xf32> -> vector<80x4xf32>
    %16 = vector.extract_strided_slice %15 {offsets = [0, 0], sizes = [80, 1], strides = [1, 1]} : vector<80x4xf32> to vector<80x1xf32>
    %17 = vector.extract_strided_slice %14 {offsets = [0, 0], sizes = [1, 80], strides = [1, 1]} : vector<4x80xf32> to vector<1x80xf32>
    %18 = vector.broadcast %16 : vector<80x1xf32> to vector<80x80xf32>
    %19 = vector.broadcast %17 : vector<1x80xf32> to vector<80x80xf32>
    %20 = arith.addf %18, %19 : vector<80x80xf32>
    %21 = vector.extract_strided_slice %15 {offsets = [0, 1], sizes = [80, 1], strides = [1, 1]} : vector<80x4xf32> to vector<80x1xf32>
    %22 = vector.extract_strided_slice %14 {offsets = [1, 0], sizes = [1, 80], strides = [1, 1]} : vector<4x80xf32> to vector<1x80xf32>
    %23 = vector.broadcast %21 : vector<80x1xf32> to vector<80x80xf32>
    %24 = vector.broadcast %22 : vector<1x80xf32> to vector<80x80xf32>
    %25 = arith.addf %23, %24 : vector<80x80xf32>
    %26 = vector.extract_strided_slice %15 {offsets = [0, 2], sizes = [80, 1], strides = [1, 1]} : vector<80x4xf32> to vector<80x1xf32>
    %27 = vector.extract_strided_slice %14 {offsets = [2, 0], sizes = [1, 80], strides = [1, 1]} : vector<4x80xf32> to vector<1x80xf32>
    %28 = vector.broadcast %26 : vector<80x1xf32> to vector<80x80xf32>
    %29 = vector.broadcast %27 : vector<1x80xf32> to vector<80x80xf32>
    %30 = arith.addf %28, %29 : vector<80x80xf32>
    %31 = vector.extract_strided_slice %15 {offsets = [0, 3], sizes = [80, 1], strides = [1, 1]} : vector<80x4xf32> to vector<80x1xf32>
    %32 = vector.extract_strided_slice %14 {offsets = [3, 0], sizes = [1, 80], strides = [1, 1]} : vector<4x80xf32> to vector<1x80xf32>
    %33 = vector.broadcast %31 : vector<80x1xf32> to vector<80x80xf32>
    %34 = vector.broadcast %32 : vector<1x80xf32> to vector<80x80xf32>
    %35 = arith.addf %33, %34 : vector<80x80xf32>
    %36 = vector.shape_cast %20 : vector<80x80xf32> to vector<1x80x80xf32>
    %37 = vector.shape_cast %25 : vector<80x80xf32> to vector<1x80x80xf32>
    %38 = vector.shape_cast %30 : vector<80x80xf32> to vector<1x80x80xf32>
    %39 = vector.shape_cast %35 : vector<80x80xf32> to vector<1x80x80xf32>
    %40 = tpu.concatenate %36, %37, %38, %39 in 0 : vector<1x80x80xf32>, vector<1x80x80xf32>, vector<1x80x80xf32>, vector<1x80x80xf32> -> vector<4x80x80xf32>
    %cst_14 = arith.constant 0.000000e+00 : f32
    %41 = vector.broadcast %cst_14 : f32 to vector<4x80x80xf32>
    %42 = arith.cmpf ogt, %40, %41 : vector<4x80x80xf32>
    %cst_15 = arith.constant 2.000000e-01 : f32
    %43 = vector.broadcast %cst_15 : f32 to vector<4x80x80xf32>
    %44 = arith.mulf %43, %40 : vector<4x80x80xf32>
    %45 = arith.select %42, %40, %44 : vector<4x80x80xi1>, vector<4x80x80xf32>
    %46 = vector.shape_cast %4 : vector<80x80xf32> to vector<1x80x80xf32>
    %47 = vector.broadcast %46 : vector<1x80x80xf32> to vector<4x80x80xf32>
    %48 = arith.addf %45, %47 : vector<4x80x80xf32>
    %cst_16 = arith.constant dense<0xFF800000> : vector<4x80xf32>
    %49 = vector.multi_reduction <maximumf>, %48, %cst_16 [2] : vector<4x80x80xf32> to vector<4x80xf32>
    %50 = vector.shape_cast %49 : vector<4x80xf32> to vector<4x80x1xf32>
    %51 = vector.broadcast %50 : vector<4x80x1xf32> to vector<4x80x80xf32>
    %52 = arith.subf %48, %51 : vector<4x80x80xf32>
    %53 = math.exp %52 : vector<4x80x80xf32>
    %54 = vector.shape_cast %0 : vector<80x80xf32> to vector<1x80x80xf32>
    %55 = vector.broadcast %54 : vector<1x80x80xf32> to vector<4x80x80xf32>
    %56 = arith.mulf %53, %55 : vector<4x80x80xf32>
    %cst_17 = arith.constant dense<0.000000e+00> : vector<4x80xf32>
    %57 = vector.multi_reduction <add>, %56, %cst_17 [2] : vector<4x80x80xf32> to vector<4x80xf32>
    %58 = vector.shape_cast %57 : vector<4x80xf32> to vector<4x80x1xf32>
    %cst_18 = arith.constant 1.000000e-16 : f32
    %59 = vector.broadcast %cst_18 : f32 to vector<4x80x1xf32>
    %60 = arith.addf %58, %59 : vector<4x80x1xf32>
    %61 = tpu.reciprocal %60 {approx = true} : vector<4x80x1xf32> -> vector<4x80x1xf32>
    %c176 = arith.constant 176 : index
    %c0_19 = arith.constant 0 : index
    %62 = vector.load %arg2[%c176, %c0_19] : memref<328x128xf32, #tpu.memory_space<vmem>>, vector<4x32xf32>
    %63 = vector.extract_strided_slice %56 {offsets = [0, 0, 0], sizes = [1, 80, 80], strides = [1, 1, 1]} : vector<4x80x80xf32> to vector<1x80x80xf32>
    %64 = vector.shape_cast %63 : vector<1x80x80xf32> to vector<80x80xf32>
    %cst_20 = arith.constant dense<0.000000e+00> : vector<80x32xf32>
    %65 = tpu.matmul %64, %13, %cst_20 {dimension_numbers = #tpu.dot_dimension_numbers<[1], [0], [0], [1], [0, 0, 1, 1], [], []>} : vector<80x80xf32>, vector<80x32xf32>, vector<80x32xf32> -> vector<80x32xf32>
    %66 = vector.extract_strided_slice %62 {offsets = [0, 0], sizes = [1, 32], strides = [1, 1]} : vector<4x32xf32> to vector<1x32xf32>
    %67 = vector.extract_strided_slice %61 {offsets = [0, 0, 0], sizes = [1, 80, 1], strides = [1, 1, 1]} : vector<4x80x1xf32> to vector<1x80x1xf32>
    %68 = vector.shape_cast %67 : vector<1x80x1xf32> to vector<80x1xf32>
    %69 = vector.broadcast %66 : vector<1x32xf32> to vector<80x32xf32>
    %70 = vector.broadcast %68 : vector<80x1xf32> to vector<80x32xf32>
    %71 = arith.mulf %69, %70 : vector<80x32xf32>
    %72 = arith.mulf %65, %71 : vector<80x32xf32>
    %73 = vector.extract_strided_slice %56 {offsets = [1, 0, 0], sizes = [1, 80, 80], strides = [1, 1, 1]} : vector<4x80x80xf32> to vector<1x80x80xf32>
    %74 = vector.shape_cast %73 : vector<1x80x80xf32> to vector<80x80xf32>
    %cst_21 = arith.constant dense<0.000000e+00> : vector<80x32xf32>
    %75 = tpu.matmul %74, %13, %cst_21 {dimension_numbers = #tpu.dot_dimension_numbers<[1], [0], [0], [1], [0, 0, 1, 1], [], []>} : vector<80x80xf32>, vector<80x32xf32>, vector<80x32xf32> -> vector<80x32xf32>
    %76 = vector.extract_strided_slice %62 {offsets = [1, 0], sizes = [1, 32], strides = [1, 1]} : vector<4x32xf32> to vector<1x32xf32>
    %77 = vector.extract_strided_slice %61 {offsets = [1, 0, 0], sizes = [1, 80, 1], strides = [1, 1, 1]} : vector<4x80x1xf32> to vector<1x80x1xf32>
    %78 = vector.shape_cast %77 : vector<1x80x1xf32> to vector<80x1xf32>
    %79 = vector.broadcast %76 : vector<1x32xf32> to vector<80x32xf32>
    %80 = vector.broadcast %78 : vector<80x1xf32> to vector<80x32xf32>
    %81 = arith.mulf %79, %80 : vector<80x32xf32>
    %82 = arith.mulf %75, %81 : vector<80x32xf32>
    %83 = arith.addf %72, %82 : vector<80x32xf32>
    %84 = vector.extract_strided_slice %56 {offsets = [2, 0, 0], sizes = [1, 80, 80], strides = [1, 1, 1]} : vector<4x80x80xf32> to vector<1x80x80xf32>
    %85 = vector.shape_cast %84 : vector<1x80x80xf32> to vector<80x80xf32>
    %cst_22 = arith.constant dense<0.000000e+00> : vector<80x32xf32>
    %86 = tpu.matmul %85, %13, %cst_22 {dimension_numbers = #tpu.dot_dimension_numbers<[1], [0], [0], [1], [0, 0, 1, 1], [], []>} : vector<80x80xf32>, vector<80x32xf32>, vector<80x32xf32> -> vector<80x32xf32>
    %87 = vector.extract_strided_slice %62 {offsets = [2, 0], sizes = [1, 32], strides = [1, 1]} : vector<4x32xf32> to vector<1x32xf32>
    %88 = vector.extract_strided_slice %61 {offsets = [2, 0, 0], sizes = [1, 80, 1], strides = [1, 1, 1]} : vector<4x80x1xf32> to vector<1x80x1xf32>
    %89 = vector.shape_cast %88 : vector<1x80x1xf32> to vector<80x1xf32>
    %90 = vector.broadcast %87 : vector<1x32xf32> to vector<80x32xf32>
    %91 = vector.broadcast %89 : vector<80x1xf32> to vector<80x32xf32>
    %92 = arith.mulf %90, %91 : vector<80x32xf32>
    %93 = arith.mulf %86, %92 : vector<80x32xf32>
    %94 = arith.addf %83, %93 : vector<80x32xf32>
    %95 = vector.extract_strided_slice %56 {offsets = [3, 0, 0], sizes = [1, 80, 80], strides = [1, 1, 1]} : vector<4x80x80xf32> to vector<1x80x80xf32>
    %96 = vector.shape_cast %95 : vector<1x80x80xf32> to vector<80x80xf32>
    %cst_23 = arith.constant dense<0.000000e+00> : vector<80x32xf32>
    %97 = tpu.matmul %96, %13, %cst_23 {dimension_numbers = #tpu.dot_dimension_numbers<[1], [0], [0], [1], [0, 0, 1, 1], [], []>} : vector<80x80xf32>, vector<80x32xf32>, vector<80x32xf32> -> vector<80x32xf32>
    %98 = vector.extract_strided_slice %62 {offsets = [3, 0], sizes = [1, 32], strides = [1, 1]} : vector<4x32xf32> to vector<1x32xf32>
    %99 = vector.extract_strided_slice %61 {offsets = [3, 0, 0], sizes = [1, 80, 1], strides = [1, 1, 1]} : vector<4x80x1xf32> to vector<1x80x1xf32>
    %100 = vector.shape_cast %99 : vector<1x80x1xf32> to vector<80x1xf32>
    %101 = vector.broadcast %98 : vector<1x32xf32> to vector<80x32xf32>
    %102 = vector.broadcast %100 : vector<80x1xf32> to vector<80x32xf32>
    %103 = arith.mulf %101, %102 : vector<80x32xf32>
    %104 = arith.mulf %97, %103 : vector<80x32xf32>
    %105 = arith.addf %94, %104 : vector<80x32xf32>
    %cst_24 = arith.constant 0.000000e+00 : f32
    %106 = vector.broadcast %cst_24 : f32 to vector<80x32xf32>
    %107 = arith.cmpf ogt, %105, %106 : vector<80x32xf32>
    %cst_25 = arith.constant 0.000000e+00 : f32
    %108 = vector.broadcast %cst_25 : f32 to vector<80x32xf32>
    %109 = arith.minimumf %105, %108 : vector<80x32xf32>
    %110 = math.exp %109 : vector<80x32xf32>
    %cst_26 = arith.constant 1.000000e+00 : f32
    %111 = vector.broadcast %cst_26 : f32 to vector<80x32xf32>
    %112 = arith.subf %110, %111 : vector<80x32xf32>
    %113 = arith.select %107, %105, %112 : vector<80x32xi1>, vector<80x32xf32>
    %c48 = arith.constant 48 : index
    %c0_27 = arith.constant 0 : index
    %114 = vector.load %arg2[%c48, %c0_27] : memref<328x128xf32, #tpu.memory_space<vmem>>, vector<32x32xf32>
    %c80 = arith.constant 80 : index
    %c0_28 = arith.constant 0 : index
    %115 = vector.load %arg2[%c80, %c0_28] : memref<328x128xf32, #tpu.memory_space<vmem>>, vector<4x32xf32>
    %c88 = arith.constant 88 : index
    %c0_29 = arith.constant 0 : index
    %116 = vector.load %arg2[%c88, %c0_29] : memref<328x128xf32, #tpu.memory_space<vmem>>, vector<32x4xf32>
    %cst_30 = arith.constant dense<0.000000e+00> : vector<80x32xf32>
    %117 = tpu.matmul %113, %114, %cst_30 {dimension_numbers = #tpu.dot_dimension_numbers<[1], [0], [0], [1], [0, 0, 1, 1], [], []>} : vector<80x32xf32>, vector<32x32xf32>, vector<80x32xf32> -> vector<80x32xf32>
    %cst_31 = arith.constant dense<0.000000e+00> : vector<4x80xf32>
    %118 = tpu.matmul %115, %117, %cst_31 {dimension_numbers = #tpu.dot_dimension_numbers<[1], [1], [0], [0], [0, 0, 1, 0], [], []>} : vector<4x32xf32>, vector<80x32xf32>, vector<4x80xf32> -> vector<4x80xf32>
    %cst_32 = arith.constant dense<0.000000e+00> : vector<80x4xf32>
    %119 = tpu.matmul %117, %116, %cst_32 {dimension_numbers = #tpu.dot_dimension_numbers<[1], [0], [0], [1], [0, 0, 1, 1], [], []>} : vector<80x32xf32>, vector<32x4xf32>, vector<80x4xf32> -> vector<80x4xf32>
    %120 = vector.extract_strided_slice %119 {offsets = [0, 0], sizes = [80, 1], strides = [1, 1]} : vector<80x4xf32> to vector<80x1xf32>
    %121 = vector.extract_strided_slice %118 {offsets = [0, 0], sizes = [1, 80], strides = [1, 1]} : vector<4x80xf32> to vector<1x80xf32>
    %122 = vector.broadcast %120 : vector<80x1xf32> to vector<80x80xf32>
    %123 = vector.broadcast %121 : vector<1x80xf32> to vector<80x80xf32>
    %124 = arith.addf %122, %123 : vector<80x80xf32>
    %125 = vector.extract_strided_slice %119 {offsets = [0, 1], sizes = [80, 1], strides = [1, 1]} : vector<80x4xf32> to vector<80x1xf32>
    %126 = vector.extract_strided_slice %118 {offsets = [1, 0], sizes = [1, 80], strides = [1, 1]} : vector<4x80xf32> to vector<1x80xf32>
    %127 = vector.broadcast %125 : vector<80x1xf32> to vector<80x80xf32>
    %128 = vector.broadcast %126 : vector<1x80xf32> to vector<80x80xf32>
    %129 = arith.addf %127, %128 : vector<80x80xf32>
    %130 = vector.extract_strided_slice %119 {offsets = [0, 2], sizes = [80, 1], strides = [1, 1]} : vector<80x4xf32> to vector<80x1xf32>
    %131 = vector.extract_strided_slice %118 {offsets = [2, 0], sizes = [1, 80], strides = [1, 1]} : vector<4x80xf32> to vector<1x80xf32>
    %132 = vector.broadcast %130 : vector<80x1xf32> to vector<80x80xf32>
    %133 = vector.broadcast %131 : vector<1x80xf32> to vector<80x80xf32>
    %134 = arith.addf %132, %133 : vector<80x80xf32>
    %135 = vector.extract_strided_slice %119 {offsets = [0, 3], sizes = [80, 1], strides = [1, 1]} : vector<80x4xf32> to vector<80x1xf32>
    %136 = vector.extract_strided_slice %118 {offsets = [3, 0], sizes = [1, 80], strides = [1, 1]} : vector<4x80xf32> to vector<1x80xf32>
    %137 = vector.broadcast %135 : vector<80x1xf32> to vector<80x80xf32>
    %138 = vector.broadcast %136 : vector<1x80xf32> to vector<80x80xf32>
    %139 = arith.addf %137, %138 : vector<80x80xf32>
    %140 = vector.shape_cast %124 : vector<80x80xf32> to vector<1x80x80xf32>
    %141 = vector.shape_cast %129 : vector<80x80xf32> to vector<1x80x80xf32>
    %142 = vector.shape_cast %134 : vector<80x80xf32> to vector<1x80x80xf32>
    %143 = vector.shape_cast %139 : vector<80x80xf32> to vector<1x80x80xf32>
    %144 = tpu.concatenate %140, %141, %142, %143 in 0 : vector<1x80x80xf32>, vector<1x80x80xf32>, vector<1x80x80xf32>, vector<1x80x80xf32> -> vector<4x80x80xf32>
    %cst_33 = arith.constant 0.000000e+00 : f32
    %145 = vector.broadcast %cst_33 : f32 to vector<4x80x80xf32>
    %146 = arith.cmpf ogt, %144, %145 : vector<4x80x80xf32>
    %cst_34 = arith.constant 2.000000e-01 : f32
    %147 = vector.broadcast %cst_34 : f32 to vector<4x80x80xf32>
    %148 = arith.mulf %147, %144 : vector<4x80x80xf32>
    %149 = arith.select %146, %144, %148 : vector<4x80x80xi1>, vector<4x80x80xf32>
    %150 = vector.shape_cast %4 : vector<80x80xf32> to vector<1x80x80xf32>
    %151 = vector.broadcast %150 : vector<1x80x80xf32> to vector<4x80x80xf32>
    %152 = arith.addf %149, %151 : vector<4x80x80xf32>
    %cst_35 = arith.constant dense<0xFF800000> : vector<4x80xf32>
    %153 = vector.multi_reduction <maximumf>, %152, %cst_35 [2] : vector<4x80x80xf32> to vector<4x80xf32>
    %154 = vector.shape_cast %153 : vector<4x80xf32> to vector<4x80x1xf32>
    %155 = vector.broadcast %154 : vector<4x80x1xf32> to vector<4x80x80xf32>
    %156 = arith.subf %152, %155 : vector<4x80x80xf32>
    %157 = math.exp %156 : vector<4x80x80xf32>
    %158 = vector.shape_cast %0 : vector<80x80xf32> to vector<1x80x80xf32>
    %159 = vector.broadcast %158 : vector<1x80x80xf32> to vector<4x80x80xf32>
    %160 = arith.mulf %157, %159 : vector<4x80x80xf32>
    %cst_36 = arith.constant dense<0.000000e+00> : vector<4x80xf32>
    %161 = vector.multi_reduction <add>, %160, %cst_36 [2] : vector<4x80x80xf32> to vector<4x80xf32>
    %162 = vector.shape_cast %161 : vector<4x80xf32> to vector<4x80x1xf32>
    %cst_37 = arith.constant 1.000000e-16 : f32
    %163 = vector.broadcast %cst_37 : f32 to vector<4x80x1xf32>
    %164 = arith.addf %162, %163 : vector<4x80x1xf32>
    %165 = tpu.reciprocal %164 {approx = true} : vector<4x80x1xf32> -> vector<4x80x1xf32>
    %c176_38 = arith.constant 176 : index
    %c0_39 = arith.constant 0 : index
    %166 = vector.load %arg2[%c176_38, %c0_39] : memref<328x128xf32, #tpu.memory_space<vmem>>, vector<4x32xf32>
    %167 = vector.extract_strided_slice %160 {offsets = [0, 0, 0], sizes = [1, 80, 80], strides = [1, 1, 1]} : vector<4x80x80xf32> to vector<1x80x80xf32>
    %168 = vector.shape_cast %167 : vector<1x80x80xf32> to vector<80x80xf32>
    %cst_40 = arith.constant dense<0.000000e+00> : vector<80x32xf32>
    %169 = tpu.matmul %168, %117, %cst_40 {dimension_numbers = #tpu.dot_dimension_numbers<[1], [0], [0], [1], [0, 0, 1, 1], [], []>} : vector<80x80xf32>, vector<80x32xf32>, vector<80x32xf32> -> vector<80x32xf32>
    %170 = vector.extract_strided_slice %166 {offsets = [0, 0], sizes = [1, 32], strides = [1, 1]} : vector<4x32xf32> to vector<1x32xf32>
    %171 = vector.extract_strided_slice %165 {offsets = [0, 0, 0], sizes = [1, 80, 1], strides = [1, 1, 1]} : vector<4x80x1xf32> to vector<1x80x1xf32>
    %172 = vector.shape_cast %171 : vector<1x80x1xf32> to vector<80x1xf32>
    %173 = vector.broadcast %170 : vector<1x32xf32> to vector<80x32xf32>
    %174 = vector.broadcast %172 : vector<80x1xf32> to vector<80x32xf32>
    %175 = arith.mulf %173, %174 : vector<80x32xf32>
    %176 = arith.mulf %169, %175 : vector<80x32xf32>
    %177 = vector.extract_strided_slice %160 {offsets = [1, 0, 0], sizes = [1, 80, 80], strides = [1, 1, 1]} : vector<4x80x80xf32> to vector<1x80x80xf32>
    %178 = vector.shape_cast %177 : vector<1x80x80xf32> to vector<80x80xf32>
    %cst_41 = arith.constant dense<0.000000e+00> : vector<80x32xf32>
    %179 = tpu.matmul %178, %117, %cst_41 {dimension_numbers = #tpu.dot_dimension_numbers<[1], [0], [0], [1], [0, 0, 1, 1], [], []>} : vector<80x80xf32>, vector<80x32xf32>, vector<80x32xf32> -> vector<80x32xf32>
    %180 = vector.extract_strided_slice %166 {offsets = [1, 0], sizes = [1, 32], strides = [1, 1]} : vector<4x32xf32> to vector<1x32xf32>
    %181 = vector.extract_strided_slice %165 {offsets = [1, 0, 0], sizes = [1, 80, 1], strides = [1, 1, 1]} : vector<4x80x1xf32> to vector<1x80x1xf32>
    %182 = vector.shape_cast %181 : vector<1x80x1xf32> to vector<80x1xf32>
    %183 = vector.broadcast %180 : vector<1x32xf32> to vector<80x32xf32>
    %184 = vector.broadcast %182 : vector<80x1xf32> to vector<80x32xf32>
    %185 = arith.mulf %183, %184 : vector<80x32xf32>
    %186 = arith.mulf %179, %185 : vector<80x32xf32>
    %187 = arith.addf %176, %186 : vector<80x32xf32>
    %188 = vector.extract_strided_slice %160 {offsets = [2, 0, 0], sizes = [1, 80, 80], strides = [1, 1, 1]} : vector<4x80x80xf32> to vector<1x80x80xf32>
    %189 = vector.shape_cast %188 : vector<1x80x80xf32> to vector<80x80xf32>
    %cst_42 = arith.constant dense<0.000000e+00> : vector<80x32xf32>
    %190 = tpu.matmul %189, %117, %cst_42 {dimension_numbers = #tpu.dot_dimension_numbers<[1], [0], [0], [1], [0, 0, 1, 1], [], []>} : vector<80x80xf32>, vector<80x32xf32>, vector<80x32xf32> -> vector<80x32xf32>
    %191 = vector.extract_strided_slice %166 {offsets = [2, 0], sizes = [1, 32], strides = [1, 1]} : vector<4x32xf32> to vector<1x32xf32>
    %192 = vector.extract_strided_slice %165 {offsets = [2, 0, 0], sizes = [1, 80, 1], strides = [1, 1, 1]} : vector<4x80x1xf32> to vector<1x80x1xf32>
    %193 = vector.shape_cast %192 : vector<1x80x1xf32> to vector<80x1xf32>
    %194 = vector.broadcast %191 : vector<1x32xf32> to vector<80x32xf32>
    %195 = vector.broadcast %193 : vector<80x1xf32> to vector<80x32xf32>
    %196 = arith.mulf %194, %195 : vector<80x32xf32>
    %197 = arith.mulf %190, %196 : vector<80x32xf32>
    %198 = arith.addf %187, %197 : vector<80x32xf32>
    %199 = vector.extract_strided_slice %160 {offsets = [3, 0, 0], sizes = [1, 80, 80], strides = [1, 1, 1]} : vector<4x80x80xf32> to vector<1x80x80xf32>
    %200 = vector.shape_cast %199 : vector<1x80x80xf32> to vector<80x80xf32>
    %cst_43 = arith.constant dense<0.000000e+00> : vector<80x32xf32>
    %201 = tpu.matmul %200, %117, %cst_43 {dimension_numbers = #tpu.dot_dimension_numbers<[1], [0], [0], [1], [0, 0, 1, 1], [], []>} : vector<80x80xf32>, vector<80x32xf32>, vector<80x32xf32> -> vector<80x32xf32>
    %202 = vector.extract_strided_slice %166 {offsets = [3, 0], sizes = [1, 32], strides = [1, 1]} : vector<4x32xf32> to vector<1x32xf32>
    %203 = vector.extract_strided_slice %165 {offsets = [3, 0, 0], sizes = [1, 80, 1], strides = [1, 1, 1]} : vector<4x80x1xf32> to vector<1x80x1xf32>
    %204 = vector.shape_cast %203 : vector<1x80x1xf32> to vector<80x1xf32>
    %205 = vector.broadcast %202 : vector<1x32xf32> to vector<80x32xf32>
    %206 = vector.broadcast %204 : vector<80x1xf32> to vector<80x32xf32>
    %207 = arith.mulf %205, %206 : vector<80x32xf32>
    %208 = arith.mulf %201, %207 : vector<80x32xf32>
    %209 = arith.addf %198, %208 : vector<80x32xf32>
    %cst_44 = arith.constant 0.000000e+00 : f32
    %210 = vector.broadcast %cst_44 : f32 to vector<80x32xf32>
    %211 = arith.cmpf ogt, %209, %210 : vector<80x32xf32>
    %cst_45 = arith.constant 0.000000e+00 : f32
    %212 = vector.broadcast %cst_45 : f32 to vector<80x32xf32>
    %213 = arith.minimumf %209, %212 : vector<80x32xf32>
    %214 = math.exp %213 : vector<80x32xf32>
    %cst_46 = arith.constant 1.000000e+00 : f32
    %215 = vector.broadcast %cst_46 : f32 to vector<80x32xf32>
    %216 = arith.subf %214, %215 : vector<80x32xf32>
    %217 = arith.select %211, %209, %216 : vector<80x32xi1>, vector<80x32xf32>
    %c120 = arith.constant 120 : index
    %c0_47 = arith.constant 0 : index
    %218 = vector.load %arg2[%c120, %c0_47] : memref<328x128xf32, #tpu.memory_space<vmem>>, vector<32x16xf32>
    %c152 = arith.constant 152 : index
    %c0_48 = arith.constant 0 : index
    %219 = vector.load %arg2[%c152, %c0_48] : memref<328x128xf32, #tpu.memory_space<vmem>>, vector<1x16xf32>
    %c160 = arith.constant 160 : index
    %c0_49 = arith.constant 0 : index
    %220 = vector.load %arg2[%c160, %c0_49] : memref<328x128xf32, #tpu.memory_space<vmem>>, vector<16x1xf32>
    %cst_50 = arith.constant dense<0.000000e+00> : vector<80x16xf32>
    %221 = tpu.matmul %217, %218, %cst_50 {dimension_numbers = #tpu.dot_dimension_numbers<[1], [0], [0], [1], [0, 0, 1, 1], [], []>} : vector<80x32xf32>, vector<32x16xf32>, vector<80x16xf32> -> vector<80x16xf32>
    %cst_51 = arith.constant dense<0.000000e+00> : vector<1x80xf32>
    %222 = tpu.matmul %219, %221, %cst_51 {dimension_numbers = #tpu.dot_dimension_numbers<[1], [1], [0], [0], [0, 0, 1, 0], [], []>} : vector<1x16xf32>, vector<80x16xf32>, vector<1x80xf32> -> vector<1x80xf32>
    %cst_52 = arith.constant dense<0.000000e+00> : vector<80x1xf32>
    %223 = tpu.matmul %221, %220, %cst_52 {dimension_numbers = #tpu.dot_dimension_numbers<[1], [0], [0], [1], [0, 0, 1, 1], [], []>} : vector<80x16xf32>, vector<16x1xf32>, vector<80x1xf32> -> vector<80x1xf32>
    %224 = vector.broadcast %223 : vector<80x1xf32> to vector<80x80xf32>
    %225 = vector.broadcast %222 : vector<1x80xf32> to vector<80x80xf32>
    %226 = arith.addf %224, %225 : vector<80x80xf32>
    %227 = vector.shape_cast %226 : vector<80x80xf32> to vector<1x80x80xf32>
    %cst_53 = arith.constant 0.000000e+00 : f32
    %228 = vector.broadcast %cst_53 : f32 to vector<1x80x80xf32>
    %229 = arith.cmpf ogt, %227, %228 : vector<1x80x80xf32>
    %cst_54 = arith.constant 2.000000e-01 : f32
    %230 = vector.broadcast %cst_54 : f32 to vector<1x80x80xf32>
    %231 = arith.mulf %230, %227 : vector<1x80x80xf32>
    %232 = arith.select %229, %227, %231 : vector<1x80x80xi1>, vector<1x80x80xf32>
    %233 = vector.shape_cast %4 : vector<80x80xf32> to vector<1x80x80xf32>
    %234 = arith.addf %232, %233 : vector<1x80x80xf32>
    %cst_55 = arith.constant dense<0xFF800000> : vector<1x80xf32>
    %235 = vector.multi_reduction <maximumf>, %234, %cst_55 [2] : vector<1x80x80xf32> to vector<1x80xf32>
    %236 = vector.shape_cast %235 : vector<1x80xf32> to vector<1x80x1xf32>
    %237 = vector.broadcast %236 : vector<1x80x1xf32> to vector<1x80x80xf32>
    %238 = arith.subf %234, %237 : vector<1x80x80xf32>
    %239 = math.exp %238 : vector<1x80x80xf32>
    %240 = vector.shape_cast %0 : vector<80x80xf32> to vector<1x80x80xf32>
    %241 = arith.mulf %239, %240 : vector<1x80x80xf32>
    %cst_56 = arith.constant dense<0.000000e+00> : vector<1x80xf32>
    %242 = vector.multi_reduction <add>, %241, %cst_56 [2] : vector<1x80x80xf32> to vector<1x80xf32>
    %243 = vector.shape_cast %242 : vector<1x80xf32> to vector<1x80x1xf32>
    %cst_57 = arith.constant 1.000000e-16 : f32
    %244 = vector.broadcast %cst_57 : f32 to vector<1x80x1xf32>
    %245 = arith.addf %243, %244 : vector<1x80x1xf32>
    %246 = tpu.reciprocal %245 {approx = true} : vector<1x80x1xf32> -> vector<1x80x1xf32>
    %247 = vector.shape_cast %241 : vector<1x80x80xf32> to vector<80x80xf32>
    %cst_58 = arith.constant dense<0.000000e+00> : vector<80x16xf32>
    %248 = tpu.matmul %247, %221, %cst_58 {dimension_numbers = #tpu.dot_dimension_numbers<[1], [0], [0], [1], [0, 0, 1, 1], [], []>} : vector<80x80xf32>, vector<80x16xf32>, vector<80x16xf32> -> vector<80x16xf32>
    %249 = vector.shape_cast %246 : vector<1x80x1xf32> to vector<80x1xf32>
    %250 = vector.broadcast %249 : vector<80x1xf32> to vector<80x16xf32>
    %251 = arith.mulf %248, %250 : vector<80x16xf32>
    %cst_59 = arith.constant 0.000000e+00 : f32
    %252 = vector.broadcast %cst_59 : f32 to vector<80x16xf32>
    %253 = arith.cmpf ogt, %251, %252 : vector<80x16xf32>
    %cst_60 = arith.constant 0.000000e+00 : f32
    %254 = vector.broadcast %cst_60 : f32 to vector<80x16xf32>
    %255 = arith.minimumf %251, %254 : vector<80x16xf32>
    %256 = math.exp %255 : vector<80x16xf32>
    %cst_61 = arith.constant 1.000000e+00 : f32
    %257 = vector.broadcast %cst_61 : f32 to vector<80x16xf32>
    %258 = arith.subf %256, %257 : vector<80x16xf32>
    %259 = arith.select %253, %251, %258 : vector<80x16xi1>, vector<80x16xf32>
    %260 = vector.extract_strided_slice %259 {offsets = [0, 0], sizes = [16, 16], strides = [1, 1]} : vector<80x16xf32> to vector<16x16xf32>
    %c0_62 = arith.constant 0 : index
    %c0_63 = arith.constant 0 : index
    %261 = vector.load %arg4[%c0_62, %c0_63] : memref<16x16xf32, #tpu.memory_space<vmem>>, vector<16x16xf32>
    tpu.vector_store %arg4[%c0_62, %c0_63], %260 {strides = array<i32>} : memref<16x16xf32, #tpu.memory_space<vmem>>, vector<16x16xf32>,
    %c184_64 = arith.constant 184 : index
    %c0_65 = arith.constant 0 : index
    %262 = vector.load %arg2[%c184_64, %c0_65] : memref<328x128xf32, #tpu.memory_space<vmem>>, vector<16x16xf32>
    %263 = vector.extract_strided_slice %259 {offsets = [16, 0], sizes = [64, 16], strides = [1, 1]} : vector<80x16xf32> to vector<64x16xf32>
    %cst_66 = arith.constant dense<0.000000e+00> : vector<16x64xf32>
    %264 = tpu.matmul %262, %263, %cst_66 {dimension_numbers = #tpu.dot_dimension_numbers<[1], [1], [0], [0], [0, 0, 1, 0], [], []>} : vector<16x16xf32>, vector<64x16xf32>, vector<16x64xf32> -> vector<16x64xf32>
    %c0_67 = arith.constant 0 : index
    %c0_68 = arith.constant 0 : index
    %265 = vector.load %arg3[%c0_67, %c0_68] : memref<16x64xf32, #tpu.memory_space<vmem>>, vector<16x64xf32>
    tpu.vector_store %arg3[%c0_67, %c0_68], %264 {strides = array<i32>} : memref<16x64xf32, #tpu.memory_space<vmem>>, vector<16x64xf32>,
    return
  }
}

</mosaic_0001>

<llo_original>
// kernel: base_avg_forward.1
$region0: #{base_avg_forward.1}
  #allocation0 [shape = 'u32[]', space=smem, size = 0x4, offset = 0x4, fixed_abs, tag = 'smem constant byte address 0x4 - core index']
  #allocation1 [shape = 'u32[72,128]{1,0:T(1,128)}', space=vmem, size = 0x9000, scoped, tag = 'internal scratch']
  %s0 = inlined_call_operand.vmem [shape: f32[4,64], index: 0, kind: input, shape index: {}]
  %s1 = inlined_call_operand.vmem [shape: f32[16,4], index: 1, kind: input, shape index: {}]
  %s2 = inlined_call_operand.hbm [shape: f32[328,128], index: 2, kind: input, shape index: {}]
  %s3 = inlined_call_operand.vmem [shape: f32[16,64], index: 3, kind: output, shape index: {0}]
  %s4 = inlined_call_operand.hbm [shape: f32[16,16], index: 4, kind: output, shape index: {1}]
  %5 = xla_tuple %s3, %s4
  %s6 = sld [smem:[#allocation0]]
  $region34: #{base_avg_forward.1} parent=0
    _
  %s8 = ssub.s32 1, %s6
  %s9 = scalar_select 0, %s8, %s6
  $region1: #{base_avg_forward.1} parent=0
    #allocation2 [shape = 'u8[167936]{0}', space=vmem, size = 0x29000, scoped, tag = 'input window, operand 2, single buffered']
    #allocation3 [shape = 's32[1]{0}', space=sflag, size = 0x4, scoped, tag = 'scoped memory for base_avg_forward.1']
    #allocation4 [shape = 's32[1]{0}', space=sflag, size = 0x4, scoped, tag = 'scoped memory for base_avg_forward.1']
    #allocation5 [shape = 'u8[8192]{0}', space=vmem, size = 0x2000, scoped, tag = 'output window, operand 1, single buffered']
    %10 = vsyncpa [#allocation3], 0
    %11 = vsyncpa [#allocation4], 0
    // Predicated region
    $region2: #{base_avg_forward.1} parent=1 // pred_check
      _
    $region3: #{base_avg_forward.1} parent=1 // pred_check_branch
      %13 = sbr.rel (0) target = $region5
    $region4: #{base_avg_forward.1} parent=1 // pred_region
      _
    $region5: #{base_avg_forward.1} parent=1 // pred_fallthru
      _
    // Predicated region
    $region6: #{base_avg_forward.1} parent=1 // pred_check
      _
    $region7: #{base_avg_forward.1} parent=1 // pred_check_branch
      %15 = sbr.rel (0) target = $region9
    $region8: #{base_avg_forward.1} parent=1 // pred_region
      _
    $region9: #{base_avg_forward.1} parent=1 // pred_fallthru
      _
    // Predicated region
    $region10: #{base_avg_forward.1} parent=1 // pred_check
      _
    $region11: #{base_avg_forward.1} parent=1 // pred_check_branch
      %17 = sbr.rel (0) target = $region13
    $region12: #{base_avg_forward.1} parent=1 // pred_region
      %19 = vsyncadd [#allocation3], 0
      %s20 = sshll.u32 %s2, 4
      %s21 = int_to_ptr.hbm [resolvable:$true] %s20
      %s22 = sshll.u32 [#allocation2], 4
      %s23 = int_to_ptr.vmem [resolvable:$true] %s22
      %28 = dma.hbm_to_vmem [thread:$0]  %s21, 5248, %s23, [#allocation3], 128, 128, 8
    $region13: #{base_avg_forward.1} parent=1 // pred_fallthru
      _
    // Predicated region
    $region14: #{base_avg_forward.1} parent=1 // pred_check
      _
    $region15: #{base_avg_forward.1} parent=1 // pred_check_branch
      %30 = sbr.rel (0) target = $region17
    $region16: #{base_avg_forward.1} parent=1 // pred_region
      %32 = dma.done [#allocation3], 5248
    $region17: #{base_avg_forward.1} parent=1 // pred_fallthru
      _
    %v33 = vld [vmem:[#allocation2 + $0xf8] sm:$0xff]
    %v34 = vld [vmem:[#allocation2 + $0x100] sm:$0xff]
    %v35 = vld [vmem:[#allocation2 + $0x108] sm:$0xff]
    %v36 = vld [vmem:[#allocation2 + $0x110] sm:$0xff]
    %v37 = vld [vmem:[#allocation2 + $0x118] sm:$0xff]
    %v38 = vld [vmem:[#allocation2 + $0x120] sm:$0xff]
    %v39 = vld [vmem:[#allocation2 + $0x128] sm:$0xff]
    %v40 = vld [vmem:[#allocation2 + $0x130] sm:$0xff]
    %v41 = vld [vmem:[#allocation2 + $0x138] sm:$0xff]
    %v42 = vld [vmem:[#allocation2 + $0x140] sm:$0xff]
    %v43 = vsub.f32 %v33, 1.0
    %v44 = vsub.f32 %v34, 1.0
    %v45 = vsub.f32 %v35, 1.0
    %v46 = vsub.f32 %v36, 1.0
    %v47 = vsub.f32 %v37, 1.0
    %v48 = vsub.f32 %v38, 1.0
    %v49 = vsub.f32 %v39, 1.0
    %v50 = vsub.f32 %v40, 1.0
    %v51 = vsub.f32 %v41, 1.0
    %v52 = vsub.f32 %v42, 1.0
    %v53 = vmul.f32 %v43, 1e+30
    %v54 = vmul.f32 %v44, 1e+30
    %v55 = vmul.f32 %v45, 1e+30
    %v56 = vmul.f32 %v46, 1e+30
    %v57 = vmul.f32 %v47, 1e+30
    %v58 = vmul.f32 %v48, 1e+30
    %v59 = vmul.f32 %v49, 1e+30
    %v60 = vmul.f32 %v50, 1e+30
    %v61 = vmul.f32 %v51, 1e+30
    %v62 = vmul.f32 %v52, 1e+30
    %v63 = vld [vmem:[#allocation2 + $0xb8] sm:$0xff]
    %v64 = vld [vmem:[#allocation2 + $0xc0] sm:$0xff]
    %v65 = vld [vmem:[#allocation2 + $0xc8] sm:$0xff]
    %v66 = vld [vmem:[#allocation2 + $0xd0] sm:$0xff]
    %v67 = vld [vmem:[#allocation2 + $0xd8] sm:$0xff]
    %v68 = vld [vmem:[#allocation2 + $0xe0] sm:$0xff]
    %v69 = vld [vmem:[#allocation2 + $0xe8] sm:$0xff]
    %v70 = vld [vmem:[#allocation2 + $0xf0] sm:$0xff]
    %v71 = vld [vmem:[%s0] sm:$0xf]
    %vm72 = vcmask 523264
    %v74 = vsel %vm72, %v63, 0
    %v77 = vsel %vm72, %v64, 0
    %v80 = vsel %vm72, %v65, 0
    %v83 = vsel %vm72, %v66, 0
    %v86 = vsel %vm72, %v67, 0
    %v89 = vsel %vm72, %v68, 0
    %v92 = vsel %vm72, %v69, 0
    %v95 = vsel %vm72, %v70, 0
    %v98 = vsel %vm72, %v71, 0
    %100 = vmatpush.xpose.msra.mxu0 0.0
    %101 = vmatpush.xpose.msra.mxu0 0.0
    %102 = vmatpush.xpose.msra.mxu0 0.0
    %103 = vmatpush.xpose.msra.mxu0 0.0
    %104 = vmatpush.xpose.msra.mxu0 0.0
    %105 = vmatpush.xpose.msra.mxu0 0.0
    %106 = vmatpush.xpose.msra.mxu0 0.0
    %107 = vmatpush.xpose.msra.mxu0 0.0
    %108 = vmatpush.xpose.msra.mxu0 0.0
    %109 = vmatpush.xpose.msra.mxu0 0.0
    %110 = vmatpush.xpose.msra.mxu0 0.0
    %111 = vmatpush.xpose.msra.mxu0 0.0
    %112 = vmatpush.xpose.msra.mxu0 0.0
    %113 = vmatpush.xpose.msra.mxu0 0.0
    %114 = vmatpush.xpose.msra.mxu0 0.0
    %115 = vmatpush.xpose.msra.mxu0 %v98
    %116 = vmatmul.f32.gmra.mxu0 %v74
    %v117 = vpop.f32.mrf.mxu0
    %v118 = vadd.f32 0.0, %v117
    %119 = vmatmul.f32.gmra.mxu0 %v77
    %v120 = vpop.f32.mrf.mxu0
    %v121 = vadd.f32 0.0, %v120
    %122 = vmatmul.f32.gmra.mxu0 %v80
    %v123 = vpop.f32.mrf.mxu0
    %v124 = vadd.f32 0.0, %v123
    %125 = vmatmul.f32.gmra.mxu0 %v83
    %v126 = vpop.f32.mrf.mxu0
    %v127 = vadd.f32 0.0, %v126
    %128 = vmatmul.f32.gmra.mxu0 %v86
    %v129 = vpop.f32.mrf.mxu0
    %v130 = vadd.f32 0.0, %v129
    %131 = vmatmul.f32.gmra.mxu0 %v89
    %v132 = vpop.f32.mrf.mxu0
    %v133 = vadd.f32 0.0, %v132
    %134 = vmatmul.f32.gmra.mxu0 %v92
    %v135 = vpop.f32.mrf.mxu0
    %v136 = vadd.f32 0.0, %v135
    %137 = vmatmul.f32.gmra.mxu0 %v95
    %v138 = vpop.f32.mrf.mxu0
    %v139 = vadd.f32 0.0, %v138
    %140 = vdwg.mxu0
    %v141 = vld [vmem:[%s1] sm:$0xff]
    %v142 = vld [vmem:[%s1 + $0x8] sm:$0xff]
    %v143 = vld [vmem:[#allocation2] sm:$0xf]
    %v144 = vld [vmem:[#allocation2 + $0x8] sm:$0xf]
    %v145 = vld [vmem:[#allocation2 + $0x10] sm:$0xff]
    %v146 = vld [vmem:[#allocation2 + $0x18] sm:$0xff]
    %v147 = vld [vmem:[#allocation2 + $0x20] sm:$0xff]
    %v148 = vld [vmem:[#allocation2 + $0x28] sm:$0xff]
    %vm149 = vcmask 31744
    %v151 = vsel %vm149, %v141, 0
    %v154 = vsel %vm149, %v142, 0
    %v157 = vsel %vm149, %v118, 0
    %v160 = vsel %vm149, %v121, 0
    %v163 = vsel %vm149, %v124, 0
    %v166 = vsel %vm149, %v127, 0
    %v169 = vsel %vm149, %v130, 0
    %v172 = vsel %vm149, %v133, 0
    %v175 = vsel %vm149, %v136, 0
    %v178 = vsel %vm149, %v139, 0
    %vm180 = vcmask 1043456
    %v182 = vsel %vm180, %v143, 0
    %184 = vmatpush.msra.mxu0 0.0
    %185 = vmatpush.msra.mxu0 0.0
    %186 = vmatpush.msra.mxu0 0.0
    %187 = vmatpush.msra.mxu0 0.0
    %188 = vmatpush.msra.mxu0 0.0
    %189 = vmatpush.msra.mxu0 0.0
    %190 = vmatpush.msra.mxu0 0.0
    %191 = vmatpush.msra.mxu0 0.0
    %192 = vmatpush.msra.mxu0 0.0
    %193 = vmatpush.msra.mxu0 0.0
    %194 = vmatpush.msra.mxu0 0.0
    %195 = vmatpush.msra.mxu0 0.0
    %196 = vmatpush.msra.mxu0 0.0
    %197 = vmatpush.msra.mxu0 0.0
    %198 = vmatpush.msra.mxu0 0.0
    %199 = vmatpush.msra.mxu0 %v182
    %200 = vmatmul.f32.gmra.mxu0 %v151
    %v201 = vpop.f32.mrf.mxu0
    %v202 = vadd.f32 0.0, %v201
    %203 = vmatmul.f32.gmra.mxu0 %v154
    %v204 = vpop.f32.mrf.mxu0
    %v205 = vadd.f32 0.0, %v204
    %206 = vmatmul.f32.gmra.mxu0 %v157
    %v207 = vpop.f32.mrf.mxu0
    %v208 = vadd.f32 0.0, %v207
    %209 = vmatmul.f32.gmra.mxu0 %v160
    %v210 = vpop.f32.mrf.mxu0
    %v211 = vadd.f32 0.0, %v210
    %212 = vmatmul.f32.gmra.mxu0 %v163
    %v213 = vpop.f32.mrf.mxu0
    %v214 = vadd.f32 0.0, %v213
    %215 = vmatmul.f32.gmra.mxu0 %v166
    %v216 = vpop.f32.mrf.mxu0
    %v217 = vadd.f32 0.0, %v216
    %218 = vmatmul.f32.gmra.mxu0 %v169
    %v219 = vpop.f32.mrf.mxu0
    %v220 = vadd.f32 0.0, %v219
    %221 = vmatmul.f32.gmra.mxu0 %v172
    %v222 = vpop.f32.mrf.mxu0
    %v223 = vadd.f32 0.0, %v222
    %224 = vmatmul.f32.gmra.mxu0 %v175
    %v225 = vpop.f32.mrf.mxu0
    %v226 = vadd.f32 0.0, %v225
    %227 = vmatmul.f32.gmra.mxu0 %v178
    %v228 = vpop.f32.mrf.mxu0
    %v229 = vadd.f32 0.0, %v228
    %230 = vdwg.mxu0
    %vm231 = vcmask 261120
    %v233 = vsel %vm231, %v144, 0
    %v236 = vsel %vm231, %v202, 0
    %v239 = vsel %vm231, %v205, 0
    %v242 = vsel %vm231, %v208, 0
    %v245 = vsel %vm231, %v211, 0
    %v248 = vsel %vm231, %v214, 0
    %v251 = vsel %vm231, %v217, 0
    %v254 = vsel %vm231, %v220, 0
    %v257 = vsel %vm231, %v223, 0
    %v260 = vsel %vm231, %v226, 0
    %v263 = vsel %vm231, %v229, 0
    %265 = vmatpush.xpose.msra.mxu0 0.0
    %266 = vmatpush.xpose.msra.mxu0 0.0
    %267 = vmatpush.xpose.msra.mxu0 0.0
    %268 = vmatpush.xpose.msra.mxu0 0.0
    %269 = vmatpush.xpose.msra.mxu0 0.0
    %270 = vmatpush.xpose.msra.mxu0 0.0
    %271 = vmatpush.xpose.msra.mxu0 %v263
    %272 = vmatpush.xpose.msra.mxu0 %v260
    %273 = vmatpush.xpose.msra.mxu0 %v257
    %274 = vmatpush.xpose.msra.mxu0 %v254
    %275 = vmatpush.xpose.msra.mxu0 %v251
    %276 = vmatpush.xpose.msra.mxu0 %v248
    %277 = vmatpush.xpose.msra.mxu0 %v245
    %278 = vmatpush.xpose.msra.mxu0 %v242
    %279 = vmatpush.xpose.msra.mxu0 %v239
    %280 = vmatpush.xpose.msra.mxu0 %v236
    %281 = vmatmul.f32.gmra.mxu0 %v233
    %v282 = vpop.f32.mrf.mxu0
    %v283 = vadd.f32 0.0, %v282
    %284 = vdwg.mxu0
    %285 = vmatpush.msra.mxu0 0.0
    %286 = vmatpush.msra.mxu0 0.0
    %287 = vmatpush.msra.mxu0 0.0
    %288 = vmatpush.msra.mxu0 0.0
    %289 = vmatpush.msra.mxu0 0.0
    %290 = vmatpush.msra.mxu0 0.0
    %291 = vmatpush.msra.mxu0 0.0
    %292 = vmatpush.msra.mxu0 0.0
    %293 = vmatpush.msra.mxu0 0.0
    %294 = vmatpush.msra.mxu0 0.0
    %295 = vmatpush.msra.mxu0 0.0
    %296 = vmatpush.msra.mxu0 0.0
    %297 = vmatpush.msra.mxu0 %v148
    %298 = vmatpush.msra.mxu0 %v147
    %299 = vmatpush.msra.mxu0 %v146
    %300 = vmatpush.msra.mxu0 %v145
    %301 = vmatmul.f32.gmra.mxu0 %v236
    %v302 = vpop.f32.mrf.mxu0
    %v303 = vadd.f32 0.0, %v302
    %304 = vmatmul.f32.gmra.mxu0 %v239
    %v305 = vpop.f32.mrf.mxu0
    %v306 = vadd.f32 0.0, %v305
    %307 = vmatmul.f32.gmra.mxu0 %v242
    %v308 = vpop.f32.mrf.mxu0
    %v309 = vadd.f32 0.0, %v308
    %310 = vmatmul.f32.gmra.mxu0 %v245
    %v311 = vpop.f32.mrf.mxu0
    %v312 = vadd.f32 0.0, %v311
    %313 = vmatmul.f32.gmra.mxu0 %v248
    %v314 = vpop.f32.mrf.mxu0
    %v315 = vadd.f32 0.0, %v314
    %316 = vmatmul.f32.gmra.mxu0 %v251
    %v317 = vpop.f32.mrf.mxu0
    %v318 = vadd.f32 0.0, %v317
    %319 = vmatmul.f32.gmra.mxu0 %v254
    %v320 = vpop.f32.mrf.mxu0
    %v321 = vadd.f32 0.0, %v320
    %322 = vmatmul.f32.gmra.mxu0 %v257
    %v323 = vpop.f32.mrf.mxu0
    %v324 = vadd.f32 0.0, %v323
    %325 = vmatmul.f32.gmra.mxu0 %v260
    %v326 = vpop.f32.mrf.mxu0
    %v327 = vadd.f32 0.0, %v326
    %328 = vmatmul.f32.gmra.mxu0 %v263
    %v329 = vpop.f32.mrf.mxu0
    %v330 = vadd.f32 0.0, %v329
    %331 = vdwg.mxu0
    %333 = vset.pattern.permute.xlu0 0
    %334 = vperm.xlu0 %333, %v303
    %v335 = vpop.permute.xlu0 %334
    %338 = vset.pattern.permute.xlu0 0
    %339 = vperm.xlu0 %338, %v306
    %v340 = vpop.permute.xlu0 %339
    %343 = vset.pattern.permute.xlu0 0
    %344 = vperm.xlu0 %343, %v309
    %v345 = vpop.permute.xlu0 %344
    %348 = vset.pattern.permute.xlu0 0
    %349 = vperm.xlu0 %348, %v312
    %v350 = vpop.permute.xlu0 %349
    %353 = vset.pattern.permute.xlu0 0
    %354 = vperm.xlu0 %353, %v315
    %v355 = vpop.permute.xlu0 %354
    %358 = vset.pattern.permute.xlu0 0
    %359 = vperm.xlu0 %358, %v318
    %v360 = vpop.permute.xlu0 %359
    %363 = vset.pattern.permute.xlu0 0
    %364 = vperm.xlu0 %363, %v321
    %v365 = vpop.permute.xlu0 %364
    %368 = vset.pattern.permute.xlu0 0
    %369 = vperm.xlu0 %368, %v324
    %v370 = vpop.permute.xlu0 %369
    %373 = vset.pattern.permute.xlu0 0
    %374 = vperm.xlu0 %373, %v327
    %v375 = vpop.permute.xlu0 %374
    %378 = vset.pattern.permute.xlu0 0
    %379 = vperm.xlu0 %378, %v330
    %v380 = vpop.permute.xlu0 %379
    %v382 = vperm.slane %v283, 0
    %v383 = vadd.f32 %v335, %v382
    %v384 = vadd.f32 %v340, %v382
    %v385 = vadd.f32 %v345, %v382
    %v386 = vadd.f32 %v350, %v382
    %v387 = vadd.f32 %v355, %v382
    %v388 = vadd.f32 %v360, %v382
    %v389 = vadd.f32 %v365, %v382
    %v390 = vadd.f32 %v370, %v382
    %v391 = vadd.f32 %v375, %v382
    %v392 = vadd.f32 %v380, %v382
    %393 = vset.pattern.permute.xlu0 1
    %394 = vperm.xlu0 %393, %v303
    %v395 = vpop.permute.xlu0 %394
    %397 = vset.pattern.permute.xlu0 1
    %398 = vperm.xlu0 %397, %v306
    %v399 = vpop.permute.xlu0 %398
    %401 = vset.pattern.permute.xlu0 1
    %402 = vperm.xlu0 %401, %v309
    %v403 = vpop.permute.xlu0 %402
    %405 = vset.pattern.permute.xlu0 1
    %406 = vperm.xlu0 %405, %v312
    %v407 = vpop.permute.xlu0 %406
    %409 = vset.pattern.permute.xlu0 1
    %410 = vperm.xlu0 %409, %v315
    %v411 = vpop.permute.xlu0 %410
    %413 = vset.pattern.permute.xlu0 1
    %414 = vperm.xlu0 %413, %v318
    %v415 = vpop.permute.xlu0 %414
    %417 = vset.pattern.permute.xlu0 1
    %418 = vperm.xlu0 %417, %v321
    %v419 = vpop.permute.xlu0 %418
    %421 = vset.pattern.permute.xlu0 1
    %422 = vperm.xlu0 %421, %v324
    %v423 = vpop.permute.xlu0 %422
    %425 = vset.pattern.permute.xlu0 1
    %426 = vperm.xlu0 %425, %v327
    %v427 = vpop.permute.xlu0 %426
    %429 = vset.pattern.permute.xlu0 1
    %430 = vperm.xlu0 %429, %v330
    %v431 = vpop.permute.xlu0 %430
    %v433 = vperm.slane %v283, 1
    %v434 = vadd.f32 %v395, %v433
    %v435 = vadd.f32 %v399, %v433
    %v436 = vadd.f32 %v403, %v433
    %v437 = vadd.f32 %v407, %v433
    %v438 = vadd.f32 %v411, %v433
    %v439 = vadd.f32 %v415, %v433
    %v440 = vadd.f32 %v419, %v433
    %v441 = vadd.f32 %v423, %v433
    %v442 = vadd.f32 %v427, %v433
    %v443 = vadd.f32 %v431, %v433
    %444 = vset.pattern.permute.xlu0 2
    %445 = vperm.xlu0 %444, %v303
    %v446 = vpop.permute.xlu0 %445
    %448 = vset.pattern.permute.xlu0 2
    %449 = vperm.xlu0 %448, %v306
    %v450 = vpop.permute.xlu0 %449
    %452 = vset.pattern.permute.xlu0 2
    %453 = vperm.xlu0 %452, %v309
    %v454 = vpop.permute.xlu0 %453
    %456 = vset.pattern.permute.xlu0 2
    %457 = vperm.xlu0 %456, %v312
    %v458 = vpop.permute.xlu0 %457
    %460 = vset.pattern.permute.xlu0 2
    %461 = vperm.xlu0 %460, %v315
    %v462 = vpop.permute.xlu0 %461
    %464 = vset.pattern.permute.xlu0 2
    %465 = vperm.xlu0 %464, %v318
    %v466 = vpop.permute.xlu0 %465
    %468 = vset.pattern.permute.xlu0 2
    %469 = vperm.xlu0 %468, %v321
    %v470 = vpop.permute.xlu0 %469
    %472 = vset.pattern.permute.xlu0 2
    %473 = vperm.xlu0 %472, %v324
    %v474 = vpop.permute.xlu0 %473
    %476 = vset.pattern.permute.xlu0 2
    %477 = vperm.xlu0 %476, %v327
    %v478 = vpop.permute.xlu0 %477
    %480 = vset.pattern.permute.xlu0 2
    %481 = vperm.xlu0 %480, %v330
    %v482 = vpop.permute.xlu0 %481
    %v484 = vperm.slane %v283, 2
    %v485 = vadd.f32 %v446, %v484
    %v486 = vadd.f32 %v450, %v484
    %v487 = vadd.f32 %v454, %v484
    %v488 = vadd.f32 %v458, %v484
    %v489 = vadd.f32 %v462, %v484
    %v490 = vadd.f32 %v466, %v484
    %v491 = vadd.f32 %v470, %v484
    %v492 = vadd.f32 %v474, %v484
    %v493 = vadd.f32 %v478, %v484
    %v494 = vadd.f32 %v482, %v484
    %495 = vset.pattern.permute.xlu0 3
    %496 = vperm.xlu0 %495, %v303
    %v497 = vpop.permute.xlu0 %496
    %499 = vset.pattern.permute.xlu0 3
    %500 = vperm.xlu0 %499, %v306
    %v501 = vpop.permute.xlu0 %500
    %503 = vset.pattern.permute.xlu0 3
    %504 = vperm.xlu0 %503, %v309
    %v505 = vpop.permute.xlu0 %504
    %507 = vset.pattern.permute.xlu0 3
    %508 = vperm.xlu0 %507, %v312
    %v509 = vpop.permute.xlu0 %508
    %511 = vset.pattern.permute.xlu0 3
    %512 = vperm.xlu0 %511, %v315
    %v513 = vpop.permute.xlu0 %512
    %515 = vset.pattern.permute.xlu0 3
    %516 = vperm.xlu0 %515, %v318
    %v517 = vpop.permute.xlu0 %516
    %519 = vset.pattern.permute.xlu0 3
    %520 = vperm.xlu0 %519, %v321
    %v521 = vpop.permute.xlu0 %520
    %523 = vset.pattern.permute.xlu0 3
    %524 = vperm.xlu0 %523, %v324
    %v525 = vpop.permute.xlu0 %524
    %527 = vset.pattern.permute.xlu0 3
    %528 = vperm.xlu0 %527, %v327
    %v529 = vpop.permute.xlu0 %528
    %531 = vset.pattern.permute.xlu0 3
    %532 = vperm.xlu0 %531, %v330
    %v533 = vpop.permute.xlu0 %532
    %v535 = vperm.slane %v283, 3
    %v536 = vadd.f32 %v497, %v535
    %v537 = vadd.f32 %v501, %v535
    %v538 = vadd.f32 %v505, %v535
    %v539 = vadd.f32 %v509, %v535
    %v540 = vadd.f32 %v513, %v535
    %v541 = vadd.f32 %v517, %v535
    %v542 = vadd.f32 %v521, %v535
    %v543 = vadd.f32 %v525, %v535
    %v544 = vadd.f32 %v529, %v535
    %v545 = vadd.f32 %v533, %v535
    %vm546 = vcmp.gt.f32.partialorder %v383, 0.0
    %vm547 = vcmp.gt.f32.partialorder %v384, 0.0
    %vm548 = vcmp.gt.f32.partialorder %v385, 0.0
    %vm549 = vcmp.gt.f32.partialorder %v386, 0.0
    %vm550 = vcmp.gt.f32.partialorder %v387, 0.0
    %vm551 = vcmp.gt.f32.partialorder %v388, 0.0
    %vm552 = vcmp.gt.f32.partialorder %v389, 0.0
    %vm553 = vcmp.gt.f32.partialorder %v390, 0.0
    %vm554 = vcmp.gt.f32.partialorder %v391, 0.0
    %vm555 = vcmp.gt.f32.partialorder %v392, 0.0
    %vm556 = vcmp.gt.f32.partialorder %v434, 0.0
    %vm557 = vcmp.gt.f32.partialorder %v435, 0.0
    %vm558 = vcmp.gt.f32.partialorder %v436, 0.0
    %vm559 = vcmp.gt.f32.partialorder %v437, 0.0
    %vm560 = vcmp.gt.f32.partialorder %v438, 0.0
    %vm561 = vcmp.gt.f32.partialorder %v439, 0.0
    %vm562 = vcmp.gt.f32.partialorder %v440, 0.0
    %vm563 = vcmp.gt.f32.partialorder %v441, 0.0
    %vm564 = vcmp.gt.f32.partialorder %v442, 0.0
    %vm565 = vcmp.gt.f32.partialorder %v443, 0.0
    %vm566 = vcmp.gt.f32.partialorder %v485, 0.0
    %vm567 = vcmp.gt.f32.partialorder %v486, 0.0
    %vm568 = vcmp.gt.f32.partialorder %v487, 0.0
    %vm569 = vcmp.gt.f32.partialorder %v488, 0.0
    %vm570 = vcmp.gt.f32.partialorder %v489, 0.0
    %vm571 = vcmp.gt.f32.partialorder %v490, 0.0
    %vm572 = vcmp.gt.f32.partialorder %v491, 0.0
    %vm573 = vcmp.gt.f32.partialorder %v492, 0.0
    %vm574 = vcmp.gt.f32.partialorder %v493, 0.0
    %vm575 = vcmp.gt.f32.partialorder %v494, 0.0
    %vm576 = vcmp.gt.f32.partialorder %v536, 0.0
    %vm577 = vcmp.gt.f32.partialorder %v537, 0.0
    %vm578 = vcmp.gt.f32.partialorder %v538, 0.0
    %vm579 = vcmp.gt.f32.partialorder %v539, 0.0
    %vm580 = vcmp.gt.f32.partialorder %v540, 0.0
    %vm581 = vcmp.gt.f32.partialorder %v541, 0.0
    %vm582 = vcmp.gt.f32.partialorder %v542, 0.0
    %vm583 = vcmp.gt.f32.partialorder %v543, 0.0
    %vm584 = vcmp.gt.f32.partialorder %v544, 0.0
    %vm585 = vcmp.gt.f32.partialorder %v545, 0.0
    %v586 = vmul.f32 %v383, 0.2
    %v587 = vmul.f32 %v384, 0.2
    %v588 = vmul.f32 %v385, 0.2
    %v589 = vmul.f32 %v386, 0.2
    %v590 = vmul.f32 %v387, 0.2
    %v591 = vmul.f32 %v388, 0.2
    %v592 = vmul.f32 %v389, 0.2
    %v593 = vmul.f32 %v390, 0.2
    %v594 = vmul.f32 %v391, 0.2
    %v595 = vmul.f32 %v392, 0.2
    %v596 = vmul.f32 %v434, 0.2
    %v597 = vmul.f32 %v435, 0.2
    %v598 = vmul.f32 %v436, 0.2
    %v599 = vmul.f32 %v437, 0.2
    %v600 = vmul.f32 %v438, 0.2
    %v601 = vmul.f32 %v439, 0.2
    %v602 = vmul.f32 %v440, 0.2
    %v603 = vmul.f32 %v441, 0.2
    %v604 = vmul.f32 %v442, 0.2
    %v605 = vmul.f32 %v443, 0.2
    %v606 = vmul.f32 %v485, 0.2
    %v607 = vmul.f32 %v486, 0.2
    %v608 = vmul.f32 %v487, 0.2
    %v609 = vmul.f32 %v488, 0.2
    %v610 = vmul.f32 %v489, 0.2
    %v611 = vmul.f32 %v490, 0.2
    %v612 = vmul.f32 %v491, 0.2
    %v613 = vmul.f32 %v492, 0.2
    %v614 = vmul.f32 %v493, 0.2
    %v615 = vmul.f32 %v494, 0.2
    %v616 = vmul.f32 %v536, 0.2
    %v617 = vmul.f32 %v537, 0.2
    %v618 = vmul.f32 %v538, 0.2
    %v619 = vmul.f32 %v539, 0.2
    %v620 = vmul.f32 %v540, 0.2
    %v621 = vmul.f32 %v541, 0.2
    %v622 = vmul.f32 %v542, 0.2
    %v623 = vmul.f32 %v543, 0.2
    %v624 = vmul.f32 %v544, 0.2
    %v625 = vmul.f32 %v545, 0.2
    %v626 = vsel %vm546, %v383, %v586
    %v627 = vsel %vm547, %v384, %v587
    %v628 = vsel %vm548, %v385, %v588
    %v629 = vsel %vm549, %v386, %v589
    %v630 = vsel %vm550, %v387, %v590
    %v631 = vsel %vm551, %v388, %v591
    %v632 = vsel %vm552, %v389, %v592
    %v633 = vsel %vm553, %v390, %v593
    %v634 = vsel %vm554, %v391, %v594
    %v635 = vsel %vm555, %v392, %v595
    %v636 = vsel %vm556, %v434, %v596
    %v637 = vsel %vm557, %v435, %v597
    %v638 = vsel %vm558, %v436, %v598
    %v639 = vsel %vm559, %v437, %v599
    %v640 = vsel %vm560, %v438, %v600
    %v641 = vsel %vm561, %v439, %v601
    %v642 = vsel %vm562, %v440, %v602
    %v643 = vsel %vm563, %v441, %v603
    %v644 = vsel %vm564, %v442, %v604
    %v645 = vsel %vm565, %v443, %v605
    %v646 = vsel %vm566, %v485, %v606
    %v647 = vsel %vm567, %v486, %v607
    %v648 = vsel %vm568, %v487, %v608
    %v649 = vsel %vm569, %v488, %v609
    %v650 = vsel %vm570, %v489, %v610
    %v651 = vsel %vm571, %v490, %v611
    %v652 = vsel %vm572, %v491, %v612
    %v653 = vsel %vm573, %v492, %v613
    %v654 = vsel %vm574, %v493, %v614
    %v655 = vsel %vm575, %v494, %v615
    %v656 = vsel %vm576, %v536, %v616
    %v657 = vsel %vm577, %v537, %v617
    %v658 = vsel %vm578, %v538, %v618
    %v659 = vsel %vm579, %v539, %v619
    %v660 = vsel %vm580, %v540, %v620
    %v661 = vsel %vm581, %v541, %v621
    %v662 = vsel %vm582, %v542, %v622
    %v663 = vsel %vm583, %v543, %v623
    %v664 = vsel %vm584, %v544, %v624
    %v665 = vsel %vm585, %v545, %v625
    %v666 = vadd.f32 %v626, %v53
    %v667 = vadd.f32 %v627, %v54
    %v668 = vadd.f32 %v628, %v55
    %v669 = vadd.f32 %v629, %v56
    %v670 = vadd.f32 %v630, %v57
    %v671 = vadd.f32 %v631, %v58
    %v672 = vadd.f32 %v632, %v59
    %v673 = vadd.f32 %v633, %v60
    %v674 = vadd.f32 %v634, %v61
    %v675 = vadd.f32 %v635, %v62
    %v676 = vadd.f32 %v636, %v53
    %v677 = vadd.f32 %v637, %v54
    %v678 = vadd.f32 %v638, %v55
    %v679 = vadd.f32 %v639, %v56
    %v680 = vadd.f32 %v640, %v57
    %v681 = vadd.f32 %v641, %v58
    %v682 = vadd.f32 %v642, %v59
    %v683 = vadd.f32 %v643, %v60
    %v684 = vadd.f32 %v644, %v61
    %v685 = vadd.f32 %v645, %v62
    %v686 = vadd.f32 %v646, %v53
    %v687 = vadd.f32 %v647, %v54
    %v688 = vadd.f32 %v648, %v55
    %v689 = vadd.f32 %v649, %v56
    %v690 = vadd.f32 %v650, %v57
    %v691 = vadd.f32 %v651, %v58
    %v692 = vadd.f32 %v652, %v59
    %v693 = vadd.f32 %v653, %v60
    %v694 = vadd.f32 %v654, %v61
    %v695 = vadd.f32 %v655, %v62
    %v696 = vadd.f32 %v656, %v53
    %v697 = vadd.f32 %v657, %v54
    %v698 = vadd.f32 %v658, %v55
    %v699 = vadd.f32 %v659, %v56
    %v700 = vadd.f32 %v660, %v57
    %v701 = vadd.f32 %v661, %v58
    %v702 = vadd.f32 %v662, %v59
    %v703 = vadd.f32 %v663, %v60
    %v704 = vadd.f32 %v664, %v61
    %v705 = vadd.f32 %v665, %v62
    %vm706 = vcmask 654336
    %v707 = vsel %vm706, %v666, -inf
    %708 = vmax.xlane.f32.xlu0 %v707
    %v709 = vpop.xlane.xlu0 %708
    %v710 = vsel %vm706, %v667, -inf
    %711 = vmax.xlane.f32.xlu0 %v710
    %v712 = vpop.xlane.xlu0 %711
    %v713 = vsel %vm706, %v668, -inf
    %714 = vmax.xlane.f32.xlu0 %v713
    %v715 = vpop.xlane.xlu0 %714
    %v716 = vsel %vm706, %v669, -inf
    %717 = vmax.xlane.f32.xlu0 %v716
    %v718 = vpop.xlane.xlu0 %717
    %v719 = vsel %vm706, %v670, -inf
    %720 = vmax.xlane.f32.xlu0 %v719
    %v721 = vpop.xlane.xlu0 %720
    %v722 = vsel %vm706, %v671, -inf
    %723 = vmax.xlane.f32.xlu0 %v722
    %v724 = vpop.xlane.xlu0 %723
    %v725 = vsel %vm706, %v672, -inf
    %726 = vmax.xlane.f32.xlu0 %v725
    %v727 = vpop.xlane.xlu0 %726
    %v728 = vsel %vm706, %v673, -inf
    %729 = vmax.xlane.f32.xlu0 %v728
    %v730 = vpop.xlane.xlu0 %729
    %v731 = vsel %vm706, %v674, -inf
    %732 = vmax.xlane.f32.xlu0 %v731
    %v733 = vpop.xlane.xlu0 %732
    %v734 = vsel %vm706, %v675, -inf
    %735 = vmax.xlane.f32.xlu0 %v734
    %v736 = vpop.xlane.xlu0 %735
    %v737 = vsel %vm706, %v676, -inf
    %738 = vmax.xlane.f32.xlu0 %v737
    %v739 = vpop.xlane.xlu0 %738
    %v740 = vsel %vm706, %v677, -inf
    %741 = vmax.xlane.f32.xlu0 %v740
    %v742 = vpop.xlane.xlu0 %741
    %v743 = vsel %vm706, %v678, -inf
    %744 = vmax.xlane.f32.xlu0 %v743
    %v745 = vpop.xlane.xlu0 %744
    %v746 = vsel %vm706, %v679, -inf
    %747 = vmax.xlane.f32.xlu0 %v746
    %v748 = vpop.xlane.xlu0 %747
    %v749 = vsel %vm706, %v680, -inf
    %750 = vmax.xlane.f32.xlu0 %v749
    %v751 = vpop.xlane.xlu0 %750
    %v752 = vsel %vm706, %v681, -inf
    %753 = vmax.xlane.f32.xlu0 %v752
    %v754 = vpop.xlane.xlu0 %753
    %v755 = vsel %vm706, %v682, -inf
    %756 = vmax.xlane.f32.xlu0 %v755
    %v757 = vpop.xlane.xlu0 %756
    %v758 = vsel %vm706, %v683, -inf
    %759 = vmax.xlane.f32.xlu0 %v758
    %v760 = vpop.xlane.xlu0 %759
    %v761 = vsel %vm706, %v684, -inf
    %762 = vmax.xlane.f32.xlu0 %v761
    %v763 = vpop.xlane.xlu0 %762
    %v764 = vsel %vm706, %v685, -inf
    %765 = vmax.xlane.f32.xlu0 %v764
    %v766 = vpop.xlane.xlu0 %765
    %v767 = vsel %vm706, %v686, -inf
    %768 = vmax.xlane.f32.xlu0 %v767
    %v769 = vpop.xlane.xlu0 %768
    %v770 = vsel %vm706, %v687, -inf
    %771 = vmax.xlane.f32.xlu0 %v770
    %v772 = vpop.xlane.xlu0 %771
    %v773 = vsel %vm706, %v688, -inf
    %774 = vmax.xlane.f32.xlu0 %v773
    %v775 = vpop.xlane.xlu0 %774
    %v776 = vsel %vm706, %v689, -inf
    %777 = vmax.xlane.f32.xlu0 %v776
    %v778 = vpop.xlane.xlu0 %777
    %v779 = vsel %vm706, %v690, -inf
    %780 = vmax.xlane.f32.xlu0 %v779
    %v781 = vpop.xlane.xlu0 %780
    %v782 = vsel %vm706, %v691, -inf
    %783 = vmax.xlane.f32.xlu0 %v782
    %v784 = vpop.xlane.xlu0 %783
    %v785 = vsel %vm706, %v692, -inf
    %786 = vmax.xlane.f32.xlu0 %v785
    %v787 = vpop.xlane.xlu0 %786
    %v788 = vsel %vm706, %v693, -inf
    %789 = vmax.xlane.f32.xlu0 %v788
    %v790 = vpop.xlane.xlu0 %789
    %v791 = vsel %vm706, %v694, -inf
    %792 = vmax.xlane.f32.xlu0 %v791
    %v793 = vpop.xlane.xlu0 %792
    %v794 = vsel %vm706, %v695, -inf
    %795 = vmax.xlane.f32.xlu0 %v794
    %v796 = vpop.xlane.xlu0 %795
    %v797 = vsel %vm706, %v696, -inf
    %798 = vmax.xlane.f32.xlu0 %v797
    %v799 = vpop.xlane.xlu0 %798
    %v800 = vsel %vm706, %v697, -inf
    %801 = vmax.xlane.f32.xlu0 %v800
    %v802 = vpop.xlane.xlu0 %801
    %v803 = vsel %vm706, %v698, -inf
    %804 = vmax.xlane.f32.xlu0 %v803
    %v805 = vpop.xlane.xlu0 %804
    %v806 = vsel %vm706, %v699, -inf
    %807 = vmax.xlane.f32.xlu0 %v806
    %v808 = vpop.xlane.xlu0 %807
    %v809 = vsel %vm706, %v700, -inf
    %810 = vmax.xlane.f32.xlu0 %v809
    %v811 = vpop.xlane.xlu0 %810
    %v812 = vsel %vm706, %v701, -inf
    %813 = vmax.xlane.f32.xlu0 %v812
    %v814 = vpop.xlane.xlu0 %813
    %v815 = vsel %vm706, %v702, -inf
    %816 = vmax.xlane.f32.xlu0 %v815
    %v817 = vpop.xlane.xlu0 %816
    %v818 = vsel %vm706, %v703, -inf
    %819 = vmax.xlane.f32.xlu0 %v818
    %v820 = vpop.xlane.xlu0 %819
    %v821 = vsel %vm706, %v704, -inf
    %822 = vmax.xlane.f32.xlu0 %v821
    %v823 = vpop.xlane.xlu0 %822
    %v824 = vsel %vm706, %v705, -inf
    %825 = vmax.xlane.f32.xlu0 %v824
    %v826 = vpop.xlane.xlu0 %825
    %v827 = vsub.f32 %v666, %v709
    %v828 = vsub.f32 %v667, %v712
    %v829 = vsub.f32 %v668, %v715
    %v830 = vsub.f32 %v669, %v718
    %v831 = vsub.f32 %v670, %v721
    %v832 = vsub.f32 %v671, %v724
    %v833 = vsub.f32 %v672, %v727
    %v834 = vsub.f32 %v673, %v730
    %v835 = vsub.f32 %v674, %v733
    %v836 = vsub.f32 %v675, %v736
    %v837 = vsub.f32 %v676, %v739
    %v838 = vsub.f32 %v677, %v742
    %v839 = vsub.f32 %v678, %v745
    %v840 = vsub.f32 %v679, %v748
    %v841 = vsub.f32 %v680, %v751
    %v842 = vsub.f32 %v681, %v754
    %v843 = vsub.f32 %v682, %v757
    %v844 = vsub.f32 %v683, %v760
    %v845 = vsub.f32 %v684, %v763
    %v846 = vsub.f32 %v685, %v766
    %v847 = vsub.f32 %v686, %v769
    %v848 = vsub.f32 %v687, %v772
    %v849 = vsub.f32 %v688, %v775
    %v850 = vsub.f32 %v689, %v778
    %v851 = vsub.f32 %v690, %v781
    %v852 = vsub.f32 %v691, %v784
    %v853 = vsub.f32 %v692, %v787
    %v854 = vsub.f32 %v693, %v790
    %v855 = vsub.f32 %v694, %v793
    %v856 = vsub.f32 %v695, %v796
    %v857 = vsub.f32 %v696, %v799
    %v858 = vsub.f32 %v697, %v802
    %v859 = vsub.f32 %v698, %v805
    %v860 = vsub.f32 %v699, %v808
    %v861 = vsub.f32 %v700, %v811
    %v862 = vsub.f32 %v701, %v814
    %v863 = vsub.f32 %v702, %v817
    %v864 = vsub.f32 %v703, %v820
    %v865 = vsub.f32 %v704, %v823
    %v866 = vsub.f32 %v705, %v826
    %v867 = vmul.f32 %v827, 1.442695
    %v868 = vpow.pop %v867
    %v869 = vmul.f32 %v828, 1.442695
    %v870 = vpow.pop %v869
    %v871 = vmul.f32 %v829, 1.442695
    %v872 = vpow.pop %v871
    %v873 = vmul.f32 %v830, 1.442695
    %v874 = vpow.pop %v873
    %v875 = vmul.f32 %v831, 1.442695
    %v876 = vpow.pop %v875
    %v877 = vmul.f32 %v832, 1.442695
    %v878 = vpow.pop %v877
    %v879 = vmul.f32 %v833, 1.442695
    %v880 = vpow.pop %v879
    %v881 = vmul.f32 %v834, 1.442695
    %v882 = vpow.pop %v881
    %v883 = vmul.f32 %v835, 1.442695
    %v884 = vpow.pop %v883
    %v885 = vmul.f32 %v836, 1.442695
    %v886 = vpow.pop %v885
    %v887 = vmul.f32 %v837, 1.442695
    %v888 = vpow.pop %v887
    %v889 = vmul.f32 %v838, 1.442695
    %v890 = vpow.pop %v889
    %v891 = vmul.f32 %v839, 1.442695
    %v892 = vpow.pop %v891
    %v893 = vmul.f32 %v840, 1.442695
    %v894 = vpow.pop %v893
    %v895 = vmul.f32 %v841, 1.442695
    %v896 = vpow.pop %v895
    %v897 = vmul.f32 %v842, 1.442695
    %v898 = vpow.pop %v897
    %v899 = vmul.f32 %v843, 1.442695
    %v900 = vpow.pop %v899
    %v901 = vmul.f32 %v844, 1.442695
    %v902 = vpow.pop %v901
    %v903 = vmul.f32 %v845, 1.442695
    %v904 = vpow.pop %v903
    %v905 = vmul.f32 %v846, 1.442695
    %v906 = vpow.pop %v905
    %v907 = vmul.f32 %v847, 1.442695
    %v908 = vpow.pop %v907
    %v909 = vmul.f32 %v848, 1.442695
    %v910 = vpow.pop %v909
    %v911 = vmul.f32 %v849, 1.442695
    %v912 = vpow.pop %v911
    %v913 = vmul.f32 %v850, 1.442695
    %v914 = vpow.pop %v913
    %v915 = vmul.f32 %v851, 1.442695
    %v916 = vpow.pop %v915
    %v917 = vmul.f32 %v852, 1.442695
    %v918 = vpow.pop %v917
    %v919 = vmul.f32 %v853, 1.442695
    %v920 = vpow.pop %v919
    %v921 = vmul.f32 %v854, 1.442695
    %v922 = vpow.pop %v921
    %v923 = vmul.f32 %v855, 1.442695
    %v924 = vpow.pop %v923
    %v925 = vmul.f32 %v856, 1.442695
    %v926 = vpow.pop %v925
    %v927 = vmul.f32 %v857, 1.442695
    %v928 = vpow.pop %v927
    %v929 = vmul.f32 %v858, 1.442695
    %v930 = vpow.pop %v929
    %v931 = vmul.f32 %v859, 1.442695
    %v932 = vpow.pop %v931
    %v933 = vmul.f32 %v860, 1.442695
    %v934 = vpow.pop %v933
    %v935 = vmul.f32 %v861, 1.442695
    %v936 = vpow.pop %v935
    %v937 = vmul.f32 %v862, 1.442695
    %v938 = vpow.pop %v937
    %v939 = vmul.f32 %v863, 1.442695
    %v940 = vpow.pop %v939
    %v941 = vmul.f32 %v864, 1.442695
    %v942 = vpow.pop %v941
    %v943 = vmul.f32 %v865, 1.442695
    %v944 = vpow.pop %v943
    %v945 = vmul.f32 %v866, 1.442695
    %v946 = vpow.pop %v945
    %v947 = vmul.f32 %v868, %v33
    %v948 = vmul.f32 %v870, %v34
    %v949 = vmul.f32 %v872, %v35
    %v950 = vmul.f32 %v874, %v36
    %v951 = vmul.f32 %v876, %v37
    %v952 = vmul.f32 %v878, %v38
    %v953 = vmul.f32 %v880, %v39
    %v954 = vmul.f32 %v882, %v40
    %v955 = vmul.f32 %v884, %v41
    %v956 = vmul.f32 %v886, %v42
    %v957 = vmul.f32 %v888, %v33
    %v958 = vmul.f32 %v890, %v34
    %v959 = vmul.f32 %v892, %v35
    %v960 = vmul.f32 %v894, %v36
    %v961 = vmul.f32 %v896, %v37
    %v962 = vmul.f32 %v898, %v38
    %v963 = vmul.f32 %v900, %v39
    %v964 = vmul.f32 %v902, %v40
    %v965 = vmul.f32 %v904, %v41
    %v966 = vmul.f32 %v906, %v42
    %v967 = vmul.f32 %v908, %v33
    %v968 = vmul.f32 %v910, %v34
    %v969 = vmul.f32 %v912, %v35
    %v970 = vmul.f32 %v914, %v36
    %v971 = vmul.f32 %v916, %v37
    %v972 = vmul.f32 %v918, %v38
    %v973 = vmul.f32 %v920, %v39
    %v974 = vmul.f32 %v922, %v40
    %v975 = vmul.f32 %v924, %v41
    %v976 = vmul.f32 %v926, %v42
    %v977 = vmul.f32 %v928, %v33
    %v978 = vmul.f32 %v930, %v34
    %v979 = vmul.f32 %v932, %v35
    %v980 = vmul.f32 %v934, %v36
    %v981 = vmul.f32 %v936, %v37
    %v982 = vmul.f32 %v938, %v38
    %v983 = vmul.f32 %v940, %v39
    %v984 = vmul.f32 %v942, %v40
    %v985 = vmul.f32 %v944, %v41
    %v986 = vmul.f32 %v946, %v42
    %v987 = vsel %vm706, %v947, 0.0
    %988 = vadd.xlane.f32.xlu0 %v987
    %v989 = vpop.xlane.xlu0 %988
    %v990 = vsel %vm706, %v948, 0.0
    %991 = vadd.xlane.f32.xlu0 %v990
    %v992 = vpop.xlane.xlu0 %991
    %v993 = vsel %vm706, %v949, 0.0
    %994 = vadd.xlane.f32.xlu0 %v993
    %v995 = vpop.xlane.xlu0 %994
    %v996 = vsel %vm706, %v950, 0.0
    %997 = vadd.xlane.f32.xlu0 %v996
    %v998 = vpop.xlane.xlu0 %997
    %v999 = vsel %vm706, %v951, 0.0
    %1000 = vadd.xlane.f32.xlu0 %v999
    %v1001 = vpop.xlane.xlu0 %1000
    %v1002 = vsel %vm706, %v952, 0.0
    %1003 = vadd.xlane.f32.xlu0 %v1002
    %v1004 = vpop.xlane.xlu0 %1003
    %v1005 = vsel %vm706, %v953, 0.0
    %1006 = vadd.xlane.f32.xlu0 %v1005
    %v1007 = vpop.xlane.xlu0 %1006
    %v1008 = vsel %vm706, %v954, 0.0
    %1009 = vadd.xlane.f32.xlu0 %v1008
    %v1010 = vpop.xlane.xlu0 %1009
    %v1011 = vsel %vm706, %v955, 0.0
    %1012 = vadd.xlane.f32.xlu0 %v1011
    %v1013 = vpop.xlane.xlu0 %1012
    %v1014 = vsel %vm706, %v956, 0.0
    %1015 = vadd.xlane.f32.xlu0 %v1014
    %v1016 = vpop.xlane.xlu0 %1015
    %v1017 = vsel %vm706, %v957, 0.0
    %1018 = vadd.xlane.f32.xlu0 %v1017
    %v1019 = vpop.xlane.xlu0 %1018
    %v1020 = vsel %vm706, %v958, 0.0
    %1021 = vadd.xlane.f32.xlu0 %v1020
    %v1022 = vpop.xlane.xlu0 %1021
    %v1023 = vsel %vm706, %v959, 0.0
    %1024 = vadd.xlane.f32.xlu0 %v1023
    %v1025 = vpop.xlane.xlu0 %1024
    %v1026 = vsel %vm706, %v960, 0.0
    %1027 = vadd.xlane.f32.xlu0 %v1026
    %v1028 = vpop.xlane.xlu0 %1027
    %v1029 = vsel %vm706, %v961, 0.0
    %1030 = vadd.xlane.f32.xlu0 %v1029
    %v1031 = vpop.xlane.xlu0 %1030
    %v1032 = vsel %vm706, %v962, 0.0
    %1033 = vadd.xlane.f32.xlu0 %v1032
    %v1034 = vpop.xlane.xlu0 %1033
    %v1035 = vsel %vm706, %v963, 0.0
    %1036 = vadd.xlane.f32.xlu0 %v1035
    %v1037 = vpop.xlane.xlu0 %1036
    %v1038 = vsel %vm706, %v964, 0.0
    %1039 = vadd.xlane.f32.xlu0 %v1038
    %v1040 = vpop.xlane.xlu0 %1039
    %v1041 = vsel %vm706, %v965, 0.0
    %1042 = vadd.xlane.f32.xlu0 %v1041
    %v1043 = vpop.xlane.xlu0 %1042
    %v1044 = vsel %vm706, %v966, 0.0
    %1045 = vadd.xlane.f32.xlu0 %v1044
    %v1046 = vpop.xlane.xlu0 %1045
    %v1047 = vsel %vm706, %v967, 0.0
    %1048 = vadd.xlane.f32.xlu0 %v1047
    %v1049 = vpop.xlane.xlu0 %1048
    %v1050 = vsel %vm706, %v968, 0.0
    %1051 = vadd.xlane.f32.xlu0 %v1050
    %v1052 = vpop.xlane.xlu0 %1051
    %v1053 = vsel %vm706, %v969, 0.0
    %1054 = vadd.xlane.f32.xlu0 %v1053
    %v1055 = vpop.xlane.xlu0 %1054
    %v1056 = vsel %vm706, %v970, 0.0
    %1057 = vadd.xlane.f32.xlu0 %v1056
    %v1058 = vpop.xlane.xlu0 %1057
    %v1059 = vsel %vm706, %v971, 0.0
    %1060 = vadd.xlane.f32.xlu0 %v1059
    %v1061 = vpop.xlane.xlu0 %1060
    %v1062 = vsel %vm706, %v972, 0.0
    %1063 = vadd.xlane.f32.xlu0 %v1062
    %v1064 = vpop.xlane.xlu0 %1063
    %v1065 = vsel %vm706, %v973, 0.0
    %1066 = vadd.xlane.f32.xlu0 %v1065
    %v1067 = vpop.xlane.xlu0 %1066
    %v1068 = vsel %vm706, %v974, 0.0
    %1069 = vadd.xlane.f32.xlu0 %v1068
    %v1070 = vpop.xlane.xlu0 %1069
    %v1071 = vsel %vm706, %v975, 0.0
    %1072 = vadd.xlane.f32.xlu0 %v1071
    %v1073 = vpop.xlane.xlu0 %1072
    %v1074 = vsel %vm706, %v976, 0.0
    %1075 = vadd.xlane.f32.xlu0 %v1074
    %v1076 = vpop.xlane.xlu0 %1075
    %v1077 = vsel %vm706, %v977, 0.0
    %1078 = vadd.xlane.f32.xlu0 %v1077
    %v1079 = vpop.xlane.xlu0 %1078
    %v1080 = vsel %vm706, %v978, 0.0
    %1081 = vadd.xlane.f32.xlu0 %v1080
    %v1082 = vpop.xlane.xlu0 %1081
    %v1083 = vsel %vm706, %v979, 0.0
    %1084 = vadd.xlane.f32.xlu0 %v1083
    %v1085 = vpop.xlane.xlu0 %1084
    %v1086 = vsel %vm706, %v980, 0.0
    %1087 = vadd.xlane.f32.xlu0 %v1086
    %v1088 = vpop.xlane.xlu0 %1087
    %v1089 = vsel %vm706, %v981, 0.0
    %1090 = vadd.xlane.f32.xlu0 %v1089
    %v1091 = vpop.xlane.xlu0 %1090
    %v1092 = vsel %vm706, %v982, 0.0
    %1093 = vadd.xlane.f32.xlu0 %v1092
    %v1094 = vpop.xlane.xlu0 %1093
    %v1095 = vsel %vm706, %v983, 0.0
    %1096 = vadd.xlane.f32.xlu0 %v1095
    %v1097 = vpop.xlane.xlu0 %1096
    %v1098 = vsel %vm706, %v984, 0.0
    %1099 = vadd.xlane.f32.xlu0 %v1098
    %v1100 = vpop.xlane.xlu0 %1099
    %v1101 = vsel %vm706, %v985, 0.0
    %1102 = vadd.xlane.f32.xlu0 %v1101
    %v1103 = vpop.xlane.xlu0 %1102
    %v1104 = vsel %vm706, %v986, 0.0
    %1105 = vadd.xlane.f32.xlu0 %v1104
    %v1106 = vpop.xlane.xlu0 %1105
    %v1107 = vadd.f32 %v989, 1e-16
    %v1108 = vadd.f32 %v992, 1e-16
    %v1109 = vadd.f32 %v995, 1e-16
    %v1110 = vadd.f32 %v998, 1e-16
    %v1111 = vadd.f32 %v1001, 1e-16
    %v1112 = vadd.f32 %v1004, 1e-16
    %v1113 = vadd.f32 %v1007, 1e-16
    %v1114 = vadd.f32 %v1010, 1e-16
    %v1115 = vadd.f32 %v1013, 1e-16
    %v1116 = vadd.f32 %v1016, 1e-16
    %v1117 = vadd.f32 %v1019, 1e-16
    %v1118 = vadd.f32 %v1022, 1e-16
    %v1119 = vadd.f32 %v1025, 1e-16
    %v1120 = vadd.f32 %v1028, 1e-16
    %v1121 = vadd.f32 %v1031, 1e-16
    %v1122 = vadd.f32 %v1034, 1e-16
    %v1123 = vadd.f32 %v1037, 1e-16
    %v1124 = vadd.f32 %v1040, 1e-16
    %v1125 = vadd.f32 %v1043, 1e-16
    %v1126 = vadd.f32 %v1046, 1e-16
    %v1127 = vadd.f32 %v1049, 1e-16
    %v1128 = vadd.f32 %v1052, 1e-16
    %v1129 = vadd.f32 %v1055, 1e-16
    %v1130 = vadd.f32 %v1058, 1e-16
    %v1131 = vadd.f32 %v1061, 1e-16
    %v1132 = vadd.f32 %v1064, 1e-16
    %v1133 = vadd.f32 %v1067, 1e-16
    %v1134 = vadd.f32 %v1070, 1e-16
    %v1135 = vadd.f32 %v1073, 1e-16
    %v1136 = vadd.f32 %v1076, 1e-16
    %v1137 = vadd.f32 %v1079, 1e-16
    %v1138 = vadd.f32 %v1082, 1e-16
    %v1139 = vadd.f32 %v1085, 1e-16
    %v1140 = vadd.f32 %v1088, 1e-16
    %v1141 = vadd.f32 %v1091, 1e-16
    %v1142 = vadd.f32 %v1094, 1e-16
    %v1143 = vadd.f32 %v1097, 1e-16
    %v1144 = vadd.f32 %v1100, 1e-16
    %v1145 = vadd.f32 %v1103, 1e-16
    %v1146 = vadd.f32 %v1106, 1e-16
    %v1147 = vrcp.pop %v1107
    %v1148 = vrcp.pop %v1108
    %v1149 = vrcp.pop %v1109
    %v1150 = vrcp.pop %v1110
    %v1151 = vrcp.pop %v1111
    %v1152 = vrcp.pop %v1112
    %v1153 = vrcp.pop %v1113
    %v1154 = vrcp.pop %v1114
    %v1155 = vrcp.pop %v1115
    %v1156 = vrcp.pop %v1116
    %v1157 = vrcp.pop %v1117
    %v1158 = vrcp.pop %v1118
    %v1159 = vrcp.pop %v1119
    %v1160 = vrcp.pop %v1120
    %v1161 = vrcp.pop %v1121
    %v1162 = vrcp.pop %v1122
    %v1163 = vrcp.pop %v1123
    %v1164 = vrcp.pop %v1124
    %v1165 = vrcp.pop %v1125
    %v1166 = vrcp.pop %v1126
    %v1167 = vrcp.pop %v1127
    %v1168 = vrcp.pop %v1128
    %v1169 = vrcp.pop %v1129
    %v1170 = vrcp.pop %v1130
    %v1171 = vrcp.pop %v1131
    %v1172 = vrcp.pop %v1132
    %v1173 = vrcp.pop %v1133
    %v1174 = vrcp.pop %v1134
    %v1175 = vrcp.pop %v1135
    %v1176 = vrcp.pop %v1136
    %v1177 = vrcp.pop %v1137
    %v1178 = vrcp.pop %v1138
    %v1179 = vrcp.pop %v1139
    %v1180 = vrcp.pop %v1140
    %v1181 = vrcp.pop %v1141
    %v1182 = vrcp.pop %v1142
    %v1183 = vrcp.pop %v1143
    %v1184 = vrcp.pop %v1144
    %v1185 = vrcp.pop %v1145
    %v1186 = vrcp.pop %v1146
    %v1187 = vld [vmem:[#allocation2 + $0xb0] sm:$0xf]
    %v1189 = vsel %vm706, %v947, 0
    %v1192 = vsel %vm706, %v948, 0
    %v1195 = vsel %vm706, %v949, 0
    %v1198 = vsel %vm706, %v950, 0
    %v1201 = vsel %vm706, %v951, 0
    %v1204 = vsel %vm706, %v952, 0
    %v1207 = vsel %vm706, %v953, 0
    %v1210 = vsel %vm706, %v954, 0
    %v1213 = vsel %vm706, %v955, 0
    %v1216 = vsel %vm706, %v956, 0
    %1218 = vmatpush.msra.mxu0 0.0
    %1219 = vmatpush.msra.mxu0 0.0
    %1220 = vmatpush.msra.mxu0 0.0
    %1221 = vmatpush.msra.mxu0 0.0
    %1222 = vmatpush.msra.mxu0 0.0
    %1223 = vmatpush.msra.mxu0 0.0
    %1224 = vmatpush.msra.mxu0 %v229
    %1225 = vmatpush.msra.mxu0 %v226
    %1226 = vmatpush.msra.mxu0 %v223
    %1227 = vmatpush.msra.mxu0 %v220
    %1228 = vmatpush.msra.mxu0 %v217
    %1229 = vmatpush.msra.mxu0 %v214
    %1230 = vmatpush.msra.mxu0 %v211
    %1231 = vmatpush.msra.mxu0 %v208
    %1232 = vmatpush.msra.mxu0 %v205
    %1233 = vmatpush.msra.mxu0 %v202
    %1234 = vmatmul.f32.gmra.mxu0 %v1189
    %v1235 = vpop.f32.mrf.mxu0
    %v1236 = vadd.f32 0.0, %v1235
    %1237 = vmatmul.f32.gmra.mxu0 %v1192
    %v1238 = vpop.f32.mrf.mxu0
    %v1239 = vadd.f32 0.0, %v1238
    %1240 = vmatmul.f32.gmra.mxu0 %v1195
    %v1241 = vpop.f32.mrf.mxu0
    %v1242 = vadd.f32 0.0, %v1241
    %1243 = vmatmul.f32.gmra.mxu0 %v1198
    %v1244 = vpop.f32.mrf.mxu0
    %v1245 = vadd.f32 0.0, %v1244
    %1246 = vmatmul.f32.gmra.mxu0 %v1201
    %v1247 = vpop.f32.mrf.mxu0
    %v1248 = vadd.f32 0.0, %v1247
    %1249 = vmatmul.f32.gmra.mxu0 %v1204
    %v1250 = vpop.f32.mrf.mxu0
    %v1251 = vadd.f32 0.0, %v1250
    %1252 = vmatmul.f32.gmra.mxu0 %v1207
    %v1253 = vpop.f32.mrf.mxu0
    %v1254 = vadd.f32 0.0, %v1253
    %1255 = vmatmul.f32.gmra.mxu0 %v1210
    %v1256 = vpop.f32.mrf.mxu0
    %v1257 = vadd.f32 0.0, %v1256
    %1258 = vmatmul.f32.gmra.mxu0 %v1213
    %v1259 = vpop.f32.mrf.mxu0
    %v1260 = vadd.f32 0.0, %v1259
    %1261 = vmatmul.f32.gmra.mxu0 %v1216
    %v1262 = vpop.f32.mrf.mxu0
    %v1263 = vadd.f32 0.0, %v1262
    %1264 = vdwg.mxu0
    %v1265 = vperm.slane %v1187, 0
    %v1266 = vmul.f32 %v1265, %v1147
    %v1267 = vmul.f32 %v1265, %v1148
    %v1268 = vmul.f32 %v1265, %v1149
    %v1269 = vmul.f32 %v1265, %v1150
    %v1270 = vmul.f32 %v1265, %v1151
    %v1271 = vmul.f32 %v1265, %v1152
    %v1272 = vmul.f32 %v1265, %v1153
    %v1273 = vmul.f32 %v1265, %v1154
    %v1274 = vmul.f32 %v1265, %v1155
    %v1275 = vmul.f32 %v1265, %v1156
    %v1276 = vmul.f32 %v1236, %v1266
    %v1277 = vmul.f32 %v1239, %v1267
    %v1278 = vmul.f32 %v1242, %v1268
    %v1279 = vmul.f32 %v1245, %v1269
    %v1280 = vmul.f32 %v1248, %v1270
    %v1281 = vmul.f32 %v1251, %v1271
    %v1282 = vmul.f32 %v1254, %v1272
    %v1283 = vmul.f32 %v1257, %v1273
    %v1284 = vmul.f32 %v1260, %v1274
    %v1285 = vmul.f32 %v1263, %v1275
    %v1287 = vsel %vm706, %v957, 0
    %v1290 = vsel %vm706, %v958, 0
    %v1293 = vsel %vm706, %v959, 0
    %v1296 = vsel %vm706, %v960, 0
    %v1299 = vsel %vm706, %v961, 0
    %v1302 = vsel %vm706, %v962, 0
    %v1305 = vsel %vm706, %v963, 0
    %v1308 = vsel %vm706, %v964, 0
    %v1311 = vsel %vm706, %v965, 0
    %v1314 = vsel %vm706, %v966, 0
    %1316 = vmatpush.msra.mxu0 0.0
    %1317 = vmatpush.msra.mxu0 0.0
    %1318 = vmatpush.msra.mxu0 0.0
    %1319 = vmatpush.msra.mxu0 0.0
    %1320 = vmatpush.msra.mxu0 0.0
    %1321 = vmatpush.msra.mxu0 0.0
    %1322 = vmatpush.msra.mxu0 %v229
    %1323 = vmatpush.msra.mxu0 %v226
    %1324 = vmatpush.msra.mxu0 %v223
    %1325 = vmatpush.msra.mxu0 %v220
    %1326 = vmatpush.msra.mxu0 %v217
    %1327 = vmatpush.msra.mxu0 %v214
    %1328 = vmatpush.msra.mxu0 %v211
    %1329 = vmatpush.msra.mxu0 %v208
    %1330 = vmatpush.msra.mxu0 %v205
    %1331 = vmatpush.msra.mxu0 %v202
    %1332 = vmatmul.f32.gmra.mxu0 %v1287
    %v1333 = vpop.f32.mrf.mxu0
    %v1334 = vadd.f32 0.0, %v1333
    %1335 = vmatmul.f32.gmra.mxu0 %v1290
    %v1336 = vpop.f32.mrf.mxu0
    %v1337 = vadd.f32 0.0, %v1336
    %1338 = vmatmul.f32.gmra.mxu0 %v1293
    %v1339 = vpop.f32.mrf.mxu0
    %v1340 = vadd.f32 0.0, %v1339
    %1341 = vmatmul.f32.gmra.mxu0 %v1296
    %v1342 = vpop.f32.mrf.mxu0
    %v1343 = vadd.f32 0.0, %v1342
    %1344 = vmatmul.f32.gmra.mxu0 %v1299
    %v1345 = vpop.f32.mrf.mxu0
    %v1346 = vadd.f32 0.0, %v1345
    %1347 = vmatmul.f32.gmra.mxu0 %v1302
    %v1348 = vpop.f32.mrf.mxu0
    %v1349 = vadd.f32 0.0, %v1348
    %1350 = vmatmul.f32.gmra.mxu0 %v1305
    %v1351 = vpop.f32.mrf.mxu0
    %v1352 = vadd.f32 0.0, %v1351
    %1353 = vmatmul.f32.gmra.mxu0 %v1308
    %v1354 = vpop.f32.mrf.mxu0
    %v1355 = vadd.f32 0.0, %v1354
    %1356 = vmatmul.f32.gmra.mxu0 %v1311
    %v1357 = vpop.f32.mrf.mxu0
    %v1358 = vadd.f32 0.0, %v1357
    %1359 = vmatmul.f32.gmra.mxu0 %v1314
    %v1360 = vpop.f32.mrf.mxu0
    %v1361 = vadd.f32 0.0, %v1360
    %1362 = vdwg.mxu0
    %v1363 = vperm.slane %v1187, 1
    %v1364 = vmul.f32 %v1363, %v1157
    %v1365 = vmul.f32 %v1363, %v1158
    %v1366 = vmul.f32 %v1363, %v1159
    %v1367 = vmul.f32 %v1363, %v1160
    %v1368 = vmul.f32 %v1363, %v1161
    %v1369 = vmul.f32 %v1363, %v1162
    %v1370 = vmul.f32 %v1363, %v1163
    %v1371 = vmul.f32 %v1363, %v1164
    %v1372 = vmul.f32 %v1363, %v1165
    %v1373 = vmul.f32 %v1363, %v1166
    %v1374 = vmul.f32 %v1334, %v1364
    %v1375 = vmul.f32 %v1337, %v1365
    %v1376 = vmul.f32 %v1340, %v1366
    %v1377 = vmul.f32 %v1343, %v1367
    %v1378 = vmul.f32 %v1346, %v1368
    %v1379 = vmul.f32 %v1349, %v1369
    %v1380 = vmul.f32 %v1352, %v1370
    %v1381 = vmul.f32 %v1355, %v1371
    %v1382 = vmul.f32 %v1358, %v1372
    %v1383 = vmul.f32 %v1361, %v1373
    %v1384 = vadd.f32 %v1276, %v1374
    %v1385 = vadd.f32 %v1277, %v1375
    %v1386 = vadd.f32 %v1278, %v1376
    %v1387 = vadd.f32 %v1279, %v1377
    %v1388 = vadd.f32 %v1280, %v1378
    %v1389 = vadd.f32 %v1281, %v1379
    %v1390 = vadd.f32 %v1282, %v1380
    %v1391 = vadd.f32 %v1283, %v1381
    %v1392 = vadd.f32 %v1284, %v1382
    %v1393 = vadd.f32 %v1285, %v1383
    %v1395 = vsel %vm706, %v967, 0
    %v1398 = vsel %vm706, %v968, 0
    %v1401 = vsel %vm706, %v969, 0
    %v1404 = vsel %vm706, %v970, 0
    %v1407 = vsel %vm706, %v971, 0
    %v1410 = vsel %vm706, %v972, 0
    %v1413 = vsel %vm706, %v973, 0
    %v1416 = vsel %vm706, %v974, 0
    %v1419 = vsel %vm706, %v975, 0
    %v1422 = vsel %vm706, %v976, 0
    %1424 = vmatpush.msra.mxu0 0.0
    %1425 = vmatpush.msra.mxu0 0.0
    %1426 = vmatpush.msra.mxu0 0.0
    %1427 = vmatpush.msra.mxu0 0.0
    %1428 = vmatpush.msra.mxu0 0.0
    %1429 = vmatpush.msra.mxu0 0.0
    %1430 = vmatpush.msra.mxu0 %v229
    %1431 = vmatpush.msra.mxu0 %v226
    %1432 = vmatpush.msra.mxu0 %v223
    %1433 = vmatpush.msra.mxu0 %v220
    %1434 = vmatpush.msra.mxu0 %v217
    %1435 = vmatpush.msra.mxu0 %v214
    %1436 = vmatpush.msra.mxu0 %v211
    %1437 = vmatpush.msra.mxu0 %v208
    %1438 = vmatpush.msra.mxu0 %v205
    %1439 = vmatpush.msra.mxu0 %v202
    %1440 = vmatmul.f32.gmra.mxu0 %v1395
    %v1441 = vpop.f32.mrf.mxu0
    %v1442 = vadd.f32 0.0, %v1441
    %1443 = vmatmul.f32.gmra.mxu0 %v1398
    %v1444 = vpop.f32.mrf.mxu0
    %v1445 = vadd.f32 0.0, %v1444
    %1446 = vmatmul.f32.gmra.mxu0 %v1401
    %v1447 = vpop.f32.mrf.mxu0
    %v1448 = vadd.f32 0.0, %v1447
    %1449 = vmatmul.f32.gmra.mxu0 %v1404
    %v1450 = vpop.f32.mrf.mxu0
    %v1451 = vadd.f32 0.0, %v1450
    %1452 = vmatmul.f32.gmra.mxu0 %v1407
    %v1453 = vpop.f32.mrf.mxu0
    %v1454 = vadd.f32 0.0, %v1453
    %1455 = vmatmul.f32.gmra.mxu0 %v1410
    %v1456 = vpop.f32.mrf.mxu0
    %v1457 = vadd.f32 0.0, %v1456
    %1458 = vmatmul.f32.gmra.mxu0 %v1413
    %v1459 = vpop.f32.mrf.mxu0
    %v1460 = vadd.f32 0.0, %v1459
    %1461 = vmatmul.f32.gmra.mxu0 %v1416
    %v1462 = vpop.f32.mrf.mxu0
    %v1463 = vadd.f32 0.0, %v1462
    %1464 = vmatmul.f32.gmra.mxu0 %v1419
    %v1465 = vpop.f32.mrf.mxu0
    %v1466 = vadd.f32 0.0, %v1465
    %1467 = vmatmul.f32.gmra.mxu0 %v1422
    %v1468 = vpop.f32.mrf.mxu0
    %v1469 = vadd.f32 0.0, %v1468
    %1470 = vdwg.mxu0
    %v1471 = vperm.slane %v1187, 2
    %v1472 = vmul.f32 %v1471, %v1167
    %v1473 = vmul.f32 %v1471, %v1168
    %v1474 = vmul.f32 %v1471, %v1169
    %v1475 = vmul.f32 %v1471, %v1170
    %v1476 = vmul.f32 %v1471, %v1171
    %v1477 = vmul.f32 %v1471, %v1172
    %v1478 = vmul.f32 %v1471, %v1173
    %v1479 = vmul.f32 %v1471, %v1174
    %v1480 = vmul.f32 %v1471, %v1175
    %v1481 = vmul.f32 %v1471, %v1176
    %v1482 = vmul.f32 %v1442, %v1472
    %v1483 = vmul.f32 %v1445, %v1473
    %v1484 = vmul.f32 %v1448, %v1474
    %v1485 = vmul.f32 %v1451, %v1475
    %v1486 = vmul.f32 %v1454, %v1476
    %v1487 = vmul.f32 %v1457, %v1477
    %v1488 = vmul.f32 %v1460, %v1478
    %v1489 = vmul.f32 %v1463, %v1479
    %v1490 = vmul.f32 %v1466, %v1480
    %v1491 = vmul.f32 %v1469, %v1481
    %v1492 = vadd.f32 %v1384, %v1482
    %v1493 = vadd.f32 %v1385, %v1483
    %v1494 = vadd.f32 %v1386, %v1484
    %v1495 = vadd.f32 %v1387, %v1485
    %v1496 = vadd.f32 %v1388, %v1486
    %v1497 = vadd.f32 %v1389, %v1487
    %v1498 = vadd.f32 %v1390, %v1488
    %v1499 = vadd.f32 %v1391, %v1489
    %v1500 = vadd.f32 %v1392, %v1490
    %v1501 = vadd.f32 %v1393, %v1491
    %v1503 = vsel %vm706, %v977, 0
    %v1506 = vsel %vm706, %v978, 0
    %v1509 = vsel %vm706, %v979, 0
    %v1512 = vsel %vm706, %v980, 0
    %v1515 = vsel %vm706, %v981, 0
    %v1518 = vsel %vm706, %v982, 0
    %v1521 = vsel %vm706, %v983, 0
    %v1524 = vsel %vm706, %v984, 0
    %v1527 = vsel %vm706, %v985, 0
    %v1530 = vsel %vm706, %v986, 0
    %1532 = vmatpush.msra.mxu0 0.0
    %1533 = vmatpush.msra.mxu0 0.0
    %1534 = vmatpush.msra.mxu0 0.0
    %1535 = vmatpush.msra.mxu0 0.0
    %1536 = vmatpush.msra.mxu0 0.0
    %1537 = vmatpush.msra.mxu0 0.0
    %1538 = vmatpush.msra.mxu0 %v229
    %1539 = vmatpush.msra.mxu0 %v226
    %1540 = vmatpush.msra.mxu0 %v223
    %1541 = vmatpush.msra.mxu0 %v220
    %1542 = vmatpush.msra.mxu0 %v217
    %1543 = vmatpush.msra.mxu0 %v214
    %1544 = vmatpush.msra.mxu0 %v211
    %1545 = vmatpush.msra.mxu0 %v208
    %1546 = vmatpush.msra.mxu0 %v205
    %1547 = vmatpush.msra.mxu0 %v202
    %1548 = vmatmul.f32.gmra.mxu0 %v1503
    %v1549 = vpop.f32.mrf.mxu0
    %v1550 = vadd.f32 0.0, %v1549
    %1551 = vmatmul.f32.gmra.mxu0 %v1506
    %v1552 = vpop.f32.mrf.mxu0
    %v1553 = vadd.f32 0.0, %v1552
    %1554 = vmatmul.f32.gmra.mxu0 %v1509
    %v1555 = vpop.f32.mrf.mxu0
    %v1556 = vadd.f32 0.0, %v1555
    %1557 = vmatmul.f32.gmra.mxu0 %v1512
    %v1558 = vpop.f32.mrf.mxu0
    %v1559 = vadd.f32 0.0, %v1558
    %1560 = vmatmul.f32.gmra.mxu0 %v1515
    %v1561 = vpop.f32.mrf.mxu0
    %v1562 = vadd.f32 0.0, %v1561
    %1563 = vmatmul.f32.gmra.mxu0 %v1518
    %v1564 = vpop.f32.mrf.mxu0
    %v1565 = vadd.f32 0.0, %v1564
    %1566 = vmatmul.f32.gmra.mxu0 %v1521
    %v1567 = vpop.f32.mrf.mxu0
    %v1568 = vadd.f32 0.0, %v1567
    %1569 = vmatmul.f32.gmra.mxu0 %v1524
    %v1570 = vpop.f32.mrf.mxu0
    %v1571 = vadd.f32 0.0, %v1570
    %1572 = vmatmul.f32.gmra.mxu0 %v1527
    %v1573 = vpop.f32.mrf.mxu0
    %v1574 = vadd.f32 0.0, %v1573
    %1575 = vmatmul.f32.gmra.mxu0 %v1530
    %v1576 = vpop.f32.mrf.mxu0
    %v1577 = vadd.f32 0.0, %v1576
    %1578 = vdwg.mxu0
    %v1579 = vperm.slane %v1187, 3
    %v1580 = vmul.f32 %v1579, %v1177
    %v1581 = vmul.f32 %v1579, %v1178
    %v1582 = vmul.f32 %v1579, %v1179
    %v1583 = vmul.f32 %v1579, %v1180
    %v1584 = vmul.f32 %v1579, %v1181
    %v1585 = vmul.f32 %v1579, %v1182
    %v1586 = vmul.f32 %v1579, %v1183
    %v1587 = vmul.f32 %v1579, %v1184
    %v1588 = vmul.f32 %v1579, %v1185
    %v1589 = vmul.f32 %v1579, %v1186
    %v1590 = vmul.f32 %v1550, %v1580
    %v1591 = vmul.f32 %v1553, %v1581
    %v1592 = vmul.f32 %v1556, %v1582
    %v1593 = vmul.f32 %v1559, %v1583
    %v1594 = vmul.f32 %v1562, %v1584
    %v1595 = vmul.f32 %v1565, %v1585
    %v1596 = vmul.f32 %v1568, %v1586
    %v1597 = vmul.f32 %v1571, %v1587
    %v1598 = vmul.f32 %v1574, %v1588
    %v1599 = vmul.f32 %v1577, %v1589
    %v1600 = vadd.f32 %v1492, %v1590
    %v1601 = vadd.f32 %v1493, %v1591
    %v1602 = vadd.f32 %v1494, %v1592
    %v1603 = vadd.f32 %v1495, %v1593
    %v1604 = vadd.f32 %v1496, %v1594
    %v1605 = vadd.f32 %v1497, %v1595
    %v1606 = vadd.f32 %v1498, %v1596
    %v1607 = vadd.f32 %v1499, %v1597
    %v1608 = vadd.f32 %v1500, %v1598
    %v1609 = vadd.f32 %v1501, %v1599
    %vm1610 = vcmp.gt.f32.partialorder %v1600, 0.0
    %vm1611 = vcmp.gt.f32.partialorder %v1601, 0.0
    %vm1612 = vcmp.gt.f32.partialorder %v1602, 0.0
    %vm1613 = vcmp.gt.f32.partialorder %v1603, 0.0
    %vm1614 = vcmp.gt.f32.partialorder %v1604, 0.0
    %vm1615 = vcmp.gt.f32.partialorder %v1605, 0.0
    %vm1616 = vcmp.gt.f32.partialorder %v1606, 0.0
    %vm1617 = vcmp.gt.f32.partialorder %v1607, 0.0
    %vm1618 = vcmp.gt.f32.partialorder %v1608, 0.0
    %vm1619 = vcmp.gt.f32.partialorder %v1609, 0.0
    %v1620 = vmin.f32 %v1600, 0.0
    %v1621 = vmin.f32 %v1601, 0.0
    %v1622 = vmin.f32 %v1602, 0.0
    %v1623 = vmin.f32 %v1603, 0.0
    %v1624 = vmin.f32 %v1604, 0.0
    %v1625 = vmin.f32 %v1605, 0.0
    %v1626 = vmin.f32 %v1606, 0.0
    %v1627 = vmin.f32 %v1607, 0.0
    %v1628 = vmin.f32 %v1608, 0.0
    %v1629 = vmin.f32 %v1609, 0.0
    %v1630 = vmul.f32 %v1620, 1.442695
    %v1631 = vpow.pop %v1630
    %v1632 = vmul.f32 %v1621, 1.442695
    %v1633 = vpow.pop %v1632
    %v1634 = vmul.f32 %v1622, 1.442695
    %v1635 = vpow.pop %v1634
    %v1636 = vmul.f32 %v1623, 1.442695
    %v1637 = vpow.pop %v1636
    %v1638 = vmul.f32 %v1624, 1.442695
    %v1639 = vpow.pop %v1638
    %v1640 = vmul.f32 %v1625, 1.442695
    %v1641 = vpow.pop %v1640
    %v1642 = vmul.f32 %v1626, 1.442695
    %v1643 = vpow.pop %v1642
    %v1644 = vmul.f32 %v1627, 1.442695
    %v1645 = vpow.pop %v1644
    %v1646 = vmul.f32 %v1628, 1.442695
    %v1647 = vpow.pop %v1646
    %v1648 = vmul.f32 %v1629, 1.442695
    %v1649 = vpow.pop %v1648
    %v1650 = vsub.f32 %v1631, 1.0
    %v1651 = vsub.f32 %v1633, 1.0
    %v1652 = vsub.f32 %v1635, 1.0
    %v1653 = vsub.f32 %v1637, 1.0
    %v1654 = vsub.f32 %v1639, 1.0
    %v1655 = vsub.f32 %v1641, 1.0
    %v1656 = vsub.f32 %v1643, 1.0
    %v1657 = vsub.f32 %v1645, 1.0
    %v1658 = vsub.f32 %v1647, 1.0
    %v1659 = vsub.f32 %v1649, 1.0
    %v1660 = vsel %vm1610, %v1600, %v1650
    %v1661 = vsel %vm1611, %v1601, %v1651
    %v1662 = vsel %vm1612, %v1602, %v1652
    %v1663 = vsel %vm1613, %v1603, %v1653
    %v1664 = vsel %vm1614, %v1604, %v1654
    %v1665 = vsel %vm1615, %v1605, %v1655
    %v1666 = vsel %vm1616, %v1606, %v1656
    %v1667 = vsel %vm1617, %v1607, %v1657
    %v1668 = vsel %vm1618, %v1608, %v1658
    %v1669 = vsel %vm1619, %v1609, %v1659
    %v1670 = vld [vmem:[#allocation2 + $0x30] sm:$0xff]
    %v1671 = vld [vmem:[#allocation2 + $0x38] sm:$0xff]
    %v1672 = vld [vmem:[#allocation2 + $0x40] sm:$0xff]
    %v1673 = vld [vmem:[#allocation2 + $0x48] sm:$0xff]
    %v1674 = vld [vmem:[#allocation2 + $0x50] sm:$0xf]
    %v1675 = vld [vmem:[#allocation2 + $0x58] sm:$0xff]
    %v1676 = vld [vmem:[#allocation2 + $0x60] sm:$0xff]
    %v1677 = vld [vmem:[#allocation2 + $0x68] sm:$0xff]
    %v1678 = vld [vmem:[#allocation2 + $0x70] sm:$0xff]
    %v1680 = vsel %vm231, %v1660, 0
    %v1683 = vsel %vm231, %v1661, 0
    %v1686 = vsel %vm231, %v1662, 0
    %v1689 = vsel %vm231, %v1663, 0
    %v1692 = vsel %vm231, %v1664, 0
    %v1695 = vsel %vm231, %v1665, 0
    %v1698 = vsel %vm231, %v1666, 0
    %v1701 = vsel %vm231, %v1667, 0
    %v1704 = vsel %vm231, %v1668, 0
    %v1707 = vsel %vm231, %v1669, 0
    %1709 = vmatpush.msra.mxu0 0.0
    %1710 = vmatpush.msra.mxu0 0.0
    %1711 = vmatpush.msra.mxu0 0.0
    %1712 = vmatpush.msra.mxu0 0.0
    %1713 = vmatpush.msra.mxu0 0.0
    %1714 = vmatpush.msra.mxu0 0.0
    %1715 = vmatpush.msra.mxu0 0.0
    %1716 = vmatpush.msra.mxu0 0.0
    %1717 = vmatpush.msra.mxu0 0.0
    %1718 = vmatpush.msra.mxu0 0.0
    %1719 = vmatpush.msra.mxu0 0.0
    %1720 = vmatpush.msra.mxu0 0.0
    %1721 = vmatpush.msra.mxu0 %v1673
    %1722 = vmatpush.msra.mxu0 %v1672
    %1723 = vmatpush.msra.mxu0 %v1671
    %1724 = vmatpush.msra.mxu0 %v1670
    %1725 = vmatmul.f32.gmra.mxu0 %v1680
    %v1726 = vpop.f32.mrf.mxu0
    %v1727 = vadd.f32 0.0, %v1726
    %1728 = vmatmul.f32.gmra.mxu0 %v1683
    %v1729 = vpop.f32.mrf.mxu0
    %v1730 = vadd.f32 0.0, %v1729
    %1731 = vmatmul.f32.gmra.mxu0 %v1686
    %v1732 = vpop.f32.mrf.mxu0
    %v1733 = vadd.f32 0.0, %v1732
    %1734 = vmatmul.f32.gmra.mxu0 %v1689
    %v1735 = vpop.f32.mrf.mxu0
    %v1736 = vadd.f32 0.0, %v1735
    %1737 = vmatmul.f32.gmra.mxu0 %v1692
    %v1738 = vpop.f32.mrf.mxu0
    %v1739 = vadd.f32 0.0, %v1738
    %1740 = vmatmul.f32.gmra.mxu0 %v1695
    %v1741 = vpop.f32.mrf.mxu0
    %v1742 = vadd.f32 0.0, %v1741
    %1743 = vmatmul.f32.gmra.mxu0 %v1698
    %v1744 = vpop.f32.mrf.mxu0
    %v1745 = vadd.f32 0.0, %v1744
    %1746 = vmatmul.f32.gmra.mxu0 %v1701
    %v1747 = vpop.f32.mrf.mxu0
    %v1748 = vadd.f32 0.0, %v1747
    %1749 = vmatmul.f32.gmra.mxu0 %v1704
    %v1750 = vpop.f32.mrf.mxu0
    %v1751 = vadd.f32 0.0, %v1750
    %1752 = vmatmul.f32.gmra.mxu0 %v1707
    %v1753 = vpop.f32.mrf.mxu0
    %v1754 = vadd.f32 0.0, %v1753
    %1755 = vdwg.mxu0
    %v1757 = vsel %vm231, %v1674, 0
    %v1760 = vsel %vm231, %v1727, 0
    %v1763 = vsel %vm231, %v1730, 0
    %v1766 = vsel %vm231, %v1733, 0
    %v1769 = vsel %vm231, %v1736, 0
    %v1772 = vsel %vm231, %v1739, 0
    %v1775 = vsel %vm231, %v1742, 0
    %v1778 = vsel %vm231, %v1745, 0
    %v1781 = vsel %vm231, %v1748, 0
    %v1784 = vsel %vm231, %v1751, 0
    %v1787 = vsel %vm231, %v1754, 0
    %1789 = vmatpush.xpose.msra.mxu0 0.0
    %1790 = vmatpush.xpose.msra.mxu0 0.0
    %1791 = vmatpush.xpose.msra.mxu0 0.0
    %1792 = vmatpush.xpose.msra.mxu0 0.0
    %1793 = vmatpush.xpose.msra.mxu0 0.0
    %1794 = vmatpush.xpose.msra.mxu0 0.0
    %1795 = vmatpush.xpose.msra.mxu0 %v1787
    %1796 = vmatpush.xpose.msra.mxu0 %v1784
    %1797 = vmatpush.xpose.msra.mxu0 %v1781
    %1798 = vmatpush.xpose.msra.mxu0 %v1778
    %1799 = vmatpush.xpose.msra.mxu0 %v1775
    %1800 = vmatpush.xpose.msra.mxu0 %v1772
    %1801 = vmatpush.xpose.msra.mxu0 %v1769
    %1802 = vmatpush.xpose.msra.mxu0 %v1766
    %1803 = vmatpush.xpose.msra.mxu0 %v1763
    %1804 = vmatpush.xpose.msra.mxu0 %v1760
    %1805 = vmatmul.f32.gmra.mxu0 %v1757
    %v1806 = vpop.f32.mrf.mxu0
    %v1807 = vadd.f32 0.0, %v1806
    %1808 = vdwg.mxu0
    %1809 = vmatpush.msra.mxu0 0.0
    %1810 = vmatpush.msra.mxu0 0.0
    %1811 = vmatpush.msra.mxu0 0.0
    %1812 = vmatpush.msra.mxu0 0.0
    %1813 = vmatpush.msra.mxu0 0.0
    %1814 = vmatpush.msra.mxu0 0.0
    %1815 = vmatpush.msra.mxu0 0.0
    %1816 = vmatpush.msra.mxu0 0.0
    %1817 = vmatpush.msra.mxu0 0.0
    %1818 = vmatpush.msra.mxu0 0.0
    %1819 = vmatpush.msra.mxu0 0.0
    %1820 = vmatpush.msra.mxu0 0.0
    %1821 = vmatpush.msra.mxu0 %v1678
    %1822 = vmatpush.msra.mxu0 %v1677
    %1823 = vmatpush.msra.mxu0 %v1676
    %1824 = vmatpush.msra.mxu0 %v1675
    %1825 = vmatmul.f32.gmra.mxu0 %v1760
    %v1826 = vpop.f32.mrf.mxu0
    %v1827 = vadd.f32 0.0, %v1826
    %1828 = vmatmul.f32.gmra.mxu0 %v1763
    %v1829 = vpop.f32.mrf.mxu0
    %v1830 = vadd.f32 0.0, %v1829
    %1831 = vmatmul.f32.gmra.mxu0 %v1766
    %v1832 = vpop.f32.mrf.mxu0
    %v1833 = vadd.f32 0.0, %v1832
    %1834 = vmatmul.f32.gmra.mxu0 %v1769
    %v1835 = vpop.f32.mrf.mxu0
    %v1836 = vadd.f32 0.0, %v1835
    %1837 = vmatmul.f32.gmra.mxu0 %v1772
    %v1838 = vpop.f32.mrf.mxu0
    %v1839 = vadd.f32 0.0, %v1838
    %1840 = vmatmul.f32.gmra.mxu0 %v1775
    %v1841 = vpop.f32.mrf.mxu0
    %v1842 = vadd.f32 0.0, %v1841
    %1843 = vmatmul.f32.gmra.mxu0 %v1778
    %v1844 = vpop.f32.mrf.mxu0
    %v1845 = vadd.f32 0.0, %v1844
    %1846 = vmatmul.f32.gmra.mxu0 %v1781
    %v1847 = vpop.f32.mrf.mxu0
    %v1848 = vadd.f32 0.0, %v1847
    %1849 = vmatmul.f32.gmra.mxu0 %v1784
    %v1850 = vpop.f32.mrf.mxu0
    %v1851 = vadd.f32 0.0, %v1850
    %1852 = vmatmul.f32.gmra.mxu0 %v1787
    %v1853 = vpop.f32.mrf.mxu0
    %v1854 = vadd.f32 0.0, %v1853
    %1855 = vdwg.mxu0
    %1857 = vset.pattern.permute.xlu0 0
    %1858 = vperm.xlu0 %1857, %v1827
    %v1859 = vpop.permute.xlu0 %1858
    %1862 = vset.pattern.permute.xlu0 0
    %1863 = vperm.xlu0 %1862, %v1830
    %v1864 = vpop.permute.xlu0 %1863
    %1867 = vset.pattern.permute.xlu0 0
    %1868 = vperm.xlu0 %1867, %v1833
    %v1869 = vpop.permute.xlu0 %1868
    %1872 = vset.pattern.permute.xlu0 0
    %1873 = vperm.xlu0 %1872, %v1836
    %v1874 = vpop.permute.xlu0 %1873
    %1877 = vset.pattern.permute.xlu0 0
    %1878 = vperm.xlu0 %1877, %v1839
    %v1879 = vpop.permute.xlu0 %1878
    %1882 = vset.pattern.permute.xlu0 0
    %1883 = vperm.xlu0 %1882, %v1842
    %v1884 = vpop.permute.xlu0 %1883
    %1887 = vset.pattern.permute.xlu0 0
    %1888 = vperm.xlu0 %1887, %v1845
    %v1889 = vpop.permute.xlu0 %1888
    %1892 = vset.pattern.permute.xlu0 0
    %1893 = vperm.xlu0 %1892, %v1848
    %v1894 = vpop.permute.xlu0 %1893
    %1897 = vset.pattern.permute.xlu0 0
    %1898 = vperm.xlu0 %1897, %v1851
    %v1899 = vpop.permute.xlu0 %1898
    %1902 = vset.pattern.permute.xlu0 0
    %1903 = vperm.xlu0 %1902, %v1854
    %v1904 = vpop.permute.xlu0 %1903
    %v1906 = vperm.slane %v1807, 0
    %v1907 = vadd.f32 %v1859, %v1906
    %v1908 = vadd.f32 %v1864, %v1906
    %v1909 = vadd.f32 %v1869, %v1906
    %v1910 = vadd.f32 %v1874, %v1906
    %v1911 = vadd.f32 %v1879, %v1906
    %v1912 = vadd.f32 %v1884, %v1906
    %v1913 = vadd.f32 %v1889, %v1906
    %v1914 = vadd.f32 %v1894, %v1906
    %v1915 = vadd.f32 %v1899, %v1906
    %v1916 = vadd.f32 %v1904, %v1906
    %1917 = vset.pattern.permute.xlu0 1
    %1918 = vperm.xlu0 %1917, %v1827
    %v1919 = vpop.permute.xlu0 %1918
    %1921 = vset.pattern.permute.xlu0 1
    %1922 = vperm.xlu0 %1921, %v1830
    %v1923 = vpop.permute.xlu0 %1922
    %1925 = vset.pattern.permute.xlu0 1
    %1926 = vperm.xlu0 %1925, %v1833
    %v1927 = vpop.permute.xlu0 %1926
    %1929 = vset.pattern.permute.xlu0 1
    %1930 = vperm.xlu0 %1929, %v1836
    %v1931 = vpop.permute.xlu0 %1930
    %1933 = vset.pattern.permute.xlu0 1
    %1934 = vperm.xlu0 %1933, %v1839
    %v1935 = vpop.permute.xlu0 %1934
    %1937 = vset.pattern.permute.xlu0 1
    %1938 = vperm.xlu0 %1937, %v1842
    %v1939 = vpop.permute.xlu0 %1938
    %1941 = vset.pattern.permute.xlu0 1
    %1942 = vperm.xlu0 %1941, %v1845
    %v1943 = vpop.permute.xlu0 %1942
    %1945 = vset.pattern.permute.xlu0 1
    %1946 = vperm.xlu0 %1945, %v1848
    %v1947 = vpop.permute.xlu0 %1946
    %1949 = vset.pattern.permute.xlu0 1
    %1950 = vperm.xlu0 %1949, %v1851
    %v1951 = vpop.permute.xlu0 %1950
    %1953 = vset.pattern.permute.xlu0 1
    %1954 = vperm.xlu0 %1953, %v1854
    %v1955 = vpop.permute.xlu0 %1954
    %v1957 = vperm.slane %v1807, 1
    %v1958 = vadd.f32 %v1919, %v1957
    %v1959 = vadd.f32 %v1923, %v1957
    %v1960 = vadd.f32 %v1927, %v1957
    %v1961 = vadd.f32 %v1931, %v1957
    %v1962 = vadd.f32 %v1935, %v1957
    %v1963 = vadd.f32 %v1939, %v1957
    %v1964 = vadd.f32 %v1943, %v1957
    %v1965 = vadd.f32 %v1947, %v1957
    %v1966 = vadd.f32 %v1951, %v1957
    %v1967 = vadd.f32 %v1955, %v1957
    %1968 = vset.pattern.permute.xlu0 2
    %1969 = vperm.xlu0 %1968, %v1827
    %v1970 = vpop.permute.xlu0 %1969
    %1972 = vset.pattern.permute.xlu0 2
    %1973 = vperm.xlu0 %1972, %v1830
    %v1974 = vpop.permute.xlu0 %1973
    %1976 = vset.pattern.permute.xlu0 2
    %1977 = vperm.xlu0 %1976, %v1833
    %v1978 = vpop.permute.xlu0 %1977
    %1980 = vset.pattern.permute.xlu0 2
    %1981 = vperm.xlu0 %1980, %v1836
    %v1982 = vpop.permute.xlu0 %1981
    %1984 = vset.pattern.permute.xlu0 2
    %1985 = vperm.xlu0 %1984, %v1839
    %v1986 = vpop.permute.xlu0 %1985
    %1988 = vset.pattern.permute.xlu0 2
    %1989 = vperm.xlu0 %1988, %v1842
    %v1990 = vpop.permute.xlu0 %1989
    %1992 = vset.pattern.permute.xlu0 2
    %1993 = vperm.xlu0 %1992, %v1845
    %v1994 = vpop.permute.xlu0 %1993
    %1996 = vset.pattern.permute.xlu0 2
    %1997 = vperm.xlu0 %1996, %v1848
    %v1998 = vpop.permute.xlu0 %1997
    %2000 = vset.pattern.permute.xlu0 2
    %2001 = vperm.xlu0 %2000, %v1851
    %v2002 = vpop.permute.xlu0 %2001
    %2004 = vset.pattern.permute.xlu0 2
    %2005 = vperm.xlu0 %2004, %v1854
    %v2006 = vpop.permute.xlu0 %2005
    %v2008 = vperm.slane %v1807, 2
    %v2009 = vadd.f32 %v1970, %v2008
    %v2010 = vadd.f32 %v1974, %v2008
    %v2011 = vadd.f32 %v1978, %v2008
    %v2012 = vadd.f32 %v1982, %v2008
    %v2013 = vadd.f32 %v1986, %v2008
    %v2014 = vadd.f32 %v1990, %v2008
    %v2015 = vadd.f32 %v1994, %v2008
    %v2016 = vadd.f32 %v1998, %v2008
    %v2017 = vadd.f32 %v2002, %v2008
    %v2018 = vadd.f32 %v2006, %v2008
    %2019 = vset.pattern.permute.xlu0 3
    %2020 = vperm.xlu0 %2019, %v1827
    %v2021 = vpop.permute.xlu0 %2020
    %2023 = vset.pattern.permute.xlu0 3
    %2024 = vperm.xlu0 %2023, %v1830
    %v2025 = vpop.permute.xlu0 %2024
    %2027 = vset.pattern.permute.xlu0 3
    %2028 = vperm.xlu0 %2027, %v1833
    %v2029 = vpop.permute.xlu0 %2028
    %2031 = vset.pattern.permute.xlu0 3
    %2032 = vperm.xlu0 %2031, %v1836
    %v2033 = vpop.permute.xlu0 %2032
    %2035 = vset.pattern.permute.xlu0 3
    %2036 = vperm.xlu0 %2035, %v1839
    %v2037 = vpop.permute.xlu0 %2036
    %2039 = vset.pattern.permute.xlu0 3
    %2040 = vperm.xlu0 %2039, %v1842
    %v2041 = vpop.permute.xlu0 %2040
    %2043 = vset.pattern.permute.xlu0 3
    %2044 = vperm.xlu0 %2043, %v1845
    %v2045 = vpop.permute.xlu0 %2044
    %2047 = vset.pattern.permute.xlu0 3
    %2048 = vperm.xlu0 %2047, %v1848
    %v2049 = vpop.permute.xlu0 %2048
    %2051 = vset.pattern.permute.xlu0 3
    %2052 = vperm.xlu0 %2051, %v1851
    %v2053 = vpop.permute.xlu0 %2052
    %2055 = vset.pattern.permute.xlu0 3
    %2056 = vperm.xlu0 %2055, %v1854
    %v2057 = vpop.permute.xlu0 %2056
    %v2059 = vperm.slane %v1807, 3
    %v2060 = vadd.f32 %v2021, %v2059
    %v2061 = vadd.f32 %v2025, %v2059
    %v2062 = vadd.f32 %v2029, %v2059
    %v2063 = vadd.f32 %v2033, %v2059
    %v2064 = vadd.f32 %v2037, %v2059
    %v2065 = vadd.f32 %v2041, %v2059
    %v2066 = vadd.f32 %v2045, %v2059
    %v2067 = vadd.f32 %v2049, %v2059
    %v2068 = vadd.f32 %v2053, %v2059
    %v2069 = vadd.f32 %v2057, %v2059
    %vm2070 = vcmp.gt.f32.partialorder %v1907, 0.0
    %vm2071 = vcmp.gt.f32.partialorder %v1908, 0.0
    %vm2072 = vcmp.gt.f32.partialorder %v1909, 0.0
    %vm2073 = vcmp.gt.f32.partialorder %v1910, 0.0
    %vm2074 = vcmp.gt.f32.partialorder %v1911, 0.0
    %vm2075 = vcmp.gt.f32.partialorder %v1912, 0.0
    %vm2076 = vcmp.gt.f32.partialorder %v1913, 0.0
    %vm2077 = vcmp.gt.f32.partialorder %v1914, 0.0
    %vm2078 = vcmp.gt.f32.partialorder %v1915, 0.0
    %vm2079 = vcmp.gt.f32.partialorder %v1916, 0.0
    %vm2080 = vcmp.gt.f32.partialorder %v1958, 0.0
    %vm2081 = vcmp.gt.f32.partialorder %v1959, 0.0
    %vm2082 = vcmp.gt.f32.partialorder %v1960, 0.0
    %vm2083 = vcmp.gt.f32.partialorder %v1961, 0.0
    %vm2084 = vcmp.gt.f32.partialorder %v1962, 0.0
    %vm2085 = vcmp.gt.f32.partialorder %v1963, 0.0
    %vm2086 = vcmp.gt.f32.partialorder %v1964, 0.0
    %vm2087 = vcmp.gt.f32.partialorder %v1965, 0.0
    %vm2088 = vcmp.gt.f32.partialorder %v1966, 0.0
    %vm2089 = vcmp.gt.f32.partialorder %v1967, 0.0
    %vm2090 = vcmp.gt.f32.partialorder %v2009, 0.0
    %vm2091 = vcmp.gt.f32.partialorder %v2010, 0.0
    %vm2092 = vcmp.gt.f32.partialorder %v2011, 0.0
    %vm2093 = vcmp.gt.f32.partialorder %v2012, 0.0
    %vm2094 = vcmp.gt.f32.partialorder %v2013, 0.0
    %vm2095 = vcmp.gt.f32.partialorder %v2014, 0.0
    %vm2096 = vcmp.gt.f32.partialorder %v2015, 0.0
    %vm2097 = vcmp.gt.f32.partialorder %v2016, 0.0
    %vm2098 = vcmp.gt.f32.partialorder %v2017, 0.0
    %vm2099 = vcmp.gt.f32.partialorder %v2018, 0.0
    %vm2100 = vcmp.gt.f32.partialorder %v2060, 0.0
    %vm2101 = vcmp.gt.f32.partialorder %v2061, 0.0
    %vm2102 = vcmp.gt.f32.partialorder %v2062, 0.0
    %vm2103 = vcmp.gt.f32.partialorder %v2063, 0.0
    %vm2104 = vcmp.gt.f32.partialorder %v2064, 0.0
    %vm2105 = vcmp.gt.f32.partialorder %v2065, 0.0
    %vm2106 = vcmp.gt.f32.partialorder %v2066, 0.0
    %vm2107 = vcmp.gt.f32.partialorder %v2067, 0.0
    %vm2108 = vcmp.gt.f32.partialorder %v2068, 0.0
    %vm2109 = vcmp.gt.f32.partialorder %v2069, 0.0
    %v2110 = vmul.f32 %v1907, 0.2
    %v2111 = vmul.f32 %v1908, 0.2
    %v2112 = vmul.f32 %v1909, 0.2
    %v2113 = vmul.f32 %v1910, 0.2
    %v2114 = vmul.f32 %v1911, 0.2
    %v2115 = vmul.f32 %v1912, 0.2
    %v2116 = vmul.f32 %v1913, 0.2
    %v2117 = vmul.f32 %v1914, 0.2
    %v2118 = vmul.f32 %v1915, 0.2
    %v2119 = vmul.f32 %v1916, 0.2
    %v2120 = vmul.f32 %v1958, 0.2
    %v2121 = vmul.f32 %v1959, 0.2
    %v2122 = vmul.f32 %v1960, 0.2
    %v2123 = vmul.f32 %v1961, 0.2
    %v2124 = vmul.f32 %v1962, 0.2
    %v2125 = vmul.f32 %v1963, 0.2
    %v2126 = vmul.f32 %v1964, 0.2
    %v2127 = vmul.f32 %v1965, 0.2
    %v2128 = vmul.f32 %v1966, 0.2
    %v2129 = vmul.f32 %v1967, 0.2
    %v2130 = vmul.f32 %v2009, 0.2
    %v2131 = vmul.f32 %v2010, 0.2
    %v2132 = vmul.f32 %v2011, 0.2
    %v2133 = vmul.f32 %v2012, 0.2
    %v2134 = vmul.f32 %v2013, 0.2
    %v2135 = vmul.f32 %v2014, 0.2
    %v2136 = vmul.f32 %v2015, 0.2
    %v2137 = vmul.f32 %v2016, 0.2
    %v2138 = vmul.f32 %v2017, 0.2
    %v2139 = vmul.f32 %v2018, 0.2
    %v2140 = vmul.f32 %v2060, 0.2
    %v2141 = vmul.f32 %v2061, 0.2
    %v2142 = vmul.f32 %v2062, 0.2
    %v2143 = vmul.f32 %v2063, 0.2
    %v2144 = vmul.f32 %v2064, 0.2
    %v2145 = vmul.f32 %v2065, 0.2
    %v2146 = vmul.f32 %v2066, 0.2
    %v2147 = vmul.f32 %v2067, 0.2
    %v2148 = vmul.f32 %v2068, 0.2
    %v2149 = vmul.f32 %v2069, 0.2
    %v2150 = vsel %vm2070, %v1907, %v2110
    %v2151 = vsel %vm2071, %v1908, %v2111
    %v2152 = vsel %vm2072, %v1909, %v2112
    %v2153 = vsel %vm2073, %v1910, %v2113
    %v2154 = vsel %vm2074, %v1911, %v2114
    %v2155 = vsel %vm2075, %v1912, %v2115
    %v2156 = vsel %vm2076, %v1913, %v2116
    %v2157 = vsel %vm2077, %v1914, %v2117
    %v2158 = vsel %vm2078, %v1915, %v2118
    %v2159 = vsel %vm2079, %v1916, %v2119
    %v2160 = vsel %vm2080, %v1958, %v2120
    %v2161 = vsel %vm2081, %v1959, %v2121
    %v2162 = vsel %vm2082, %v1960, %v2122
    %v2163 = vsel %vm2083, %v1961, %v2123
    %v2164 = vsel %vm2084, %v1962, %v2124
    %v2165 = vsel %vm2085, %v1963, %v2125
    %v2166 = vsel %vm2086, %v1964, %v2126
    %v2167 = vsel %vm2087, %v1965, %v2127
    %v2168 = vsel %vm2088, %v1966, %v2128
    %v2169 = vsel %vm2089, %v1967, %v2129
    %v2170 = vsel %vm2090, %v2009, %v2130
    %v2171 = vsel %vm2091, %v2010, %v2131
    %v2172 = vsel %vm2092, %v2011, %v2132
    %v2173 = vsel %vm2093, %v2012, %v2133
    %v2174 = vsel %vm2094, %v2013, %v2134
    %v2175 = vsel %vm2095, %v2014, %v2135
    %v2176 = vsel %vm2096, %v2015, %v2136
    %v2177 = vsel %vm2097, %v2016, %v2137
    %v2178 = vsel %vm2098, %v2017, %v2138
    %v2179 = vsel %vm2099, %v2018, %v2139
    %v2180 = vsel %vm2100, %v2060, %v2140
    %v2181 = vsel %vm2101, %v2061, %v2141
    %v2182 = vsel %vm2102, %v2062, %v2142
    %v2183 = vsel %vm2103, %v2063, %v2143
    %v2184 = vsel %vm2104, %v2064, %v2144
    %v2185 = vsel %vm2105, %v2065, %v2145
    %v2186 = vsel %vm2106, %v2066, %v2146
    %v2187 = vsel %vm2107, %v2067, %v2147
    %v2188 = vsel %vm2108, %v2068, %v2148
    %v2189 = vsel %vm2109, %v2069, %v2149
    %v2190 = vadd.f32 %v2150, %v53
    %v2191 = vadd.f32 %v2151, %v54
    %v2192 = vadd.f32 %v2152, %v55
    %v2193 = vadd.f32 %v2153, %v56
    %v2194 = vadd.f32 %v2154, %v57
    %v2195 = vadd.f32 %v2155, %v58
    %v2196 = vadd.f32 %v2156, %v59
    %v2197 = vadd.f32 %v2157, %v60
    %v2198 = vadd.f32 %v2158, %v61
    %v2199 = vadd.f32 %v2159, %v62
    %v2200 = vadd.f32 %v2160, %v53
    %v2201 = vadd.f32 %v2161, %v54
    %v2202 = vadd.f32 %v2162, %v55
    %v2203 = vadd.f32 %v2163, %v56
    %v2204 = vadd.f32 %v2164, %v57
    %v2205 = vadd.f32 %v2165, %v58
    %v2206 = vadd.f32 %v2166, %v59
    %v2207 = vadd.f32 %v2167, %v60
    %v2208 = vadd.f32 %v2168, %v61
    %v2209 = vadd.f32 %v2169, %v62
    %v2210 = vadd.f32 %v2170, %v53
    %v2211 = vadd.f32 %v2171, %v54
    %v2212 = vadd.f32 %v2172, %v55
    %v2213 = vadd.f32 %v2173, %v56
    %v2214 = vadd.f32 %v2174, %v57
    %v2215 = vadd.f32 %v2175, %v58
    %v2216 = vadd.f32 %v2176, %v59
    %v2217 = vadd.f32 %v2177, %v60
    %v2218 = vadd.f32 %v2178, %v61
    %v2219 = vadd.f32 %v2179, %v62
    %v2220 = vadd.f32 %v2180, %v53
    %v2221 = vadd.f32 %v2181, %v54
    %v2222 = vadd.f32 %v2182, %v55
    %v2223 = vadd.f32 %v2183, %v56
    %v2224 = vadd.f32 %v2184, %v57
    %v2225 = vadd.f32 %v2185, %v58
    %v2226 = vadd.f32 %v2186, %v59
    %v2227 = vadd.f32 %v2187, %v60
    %v2228 = vadd.f32 %v2188, %v61
    %v2229 = vadd.f32 %v2189, %v62
    %v2230 = vsel %vm706, %v2190, -inf
    %2231 = vmax.xlane.f32.xlu0 %v2230
    %v2232 = vpop.xlane.xlu0 %2231
    %v2233 = vsel %vm706, %v2191, -inf
    %2234 = vmax.xlane.f32.xlu0 %v2233
    %v2235 = vpop.xlane.xlu0 %2234
    %v2236 = vsel %vm706, %v2192, -inf
    %2237 = vmax.xlane.f32.xlu0 %v2236
    %v2238 = vpop.xlane.xlu0 %2237
    %v2239 = vsel %vm706, %v2193, -inf
    %2240 = vmax.xlane.f32.xlu0 %v2239
    %v2241 = vpop.xlane.xlu0 %2240
    %v2242 = vsel %vm706, %v2194, -inf
    %2243 = vmax.xlane.f32.xlu0 %v2242
    %v2244 = vpop.xlane.xlu0 %2243
    %v2245 = vsel %vm706, %v2195, -inf
    %2246 = vmax.xlane.f32.xlu0 %v2245
    %v2247 = vpop.xlane.xlu0 %2246
    %v2248 = vsel %vm706, %v2196, -inf
    %2249 = vmax.xlane.f32.xlu0 %v2248
    %v2250 = vpop.xlane.xlu0 %2249
    %v2251 = vsel %vm706, %v2197, -inf
    %2252 = vmax.xlane.f32.xlu0 %v2251
    %v2253 = vpop.xlane.xlu0 %2252
    %v2254 = vsel %vm706, %v2198, -inf
    %2255 = vmax.xlane.f32.xlu0 %v2254
    %v2256 = vpop.xlane.xlu0 %2255
    %v2257 = vsel %vm706, %v2199, -inf
    %2258 = vmax.xlane.f32.xlu0 %v2257
    %v2259 = vpop.xlane.xlu0 %2258
    %v2260 = vsel %vm706, %v2200, -inf
    %2261 = vmax.xlane.f32.xlu0 %v2260
    %v2262 = vpop.xlane.xlu0 %2261
    %v2263 = vsel %vm706, %v2201, -inf
    %2264 = vmax.xlane.f32.xlu0 %v2263
    %v2265 = vpop.xlane.xlu0 %2264
    %v2266 = vsel %vm706, %v2202, -inf
    %2267 = vmax.xlane.f32.xlu0 %v2266
    %v2268 = vpop.xlane.xlu0 %2267
    %v2269 = vsel %vm706, %v2203, -inf
    %2270 = vmax.xlane.f32.xlu0 %v2269
    %v2271 = vpop.xlane.xlu0 %2270
    %v2272 = vsel %vm706, %v2204, -inf
    %2273 = vmax.xlane.f32.xlu0 %v2272
    %v2274 = vpop.xlane.xlu0 %2273
    %v2275 = vsel %vm706, %v2205, -inf
    %2276 = vmax.xlane.f32.xlu0 %v2275
    %v2277 = vpop.xlane.xlu0 %2276
    %v2278 = vsel %vm706, %v2206, -inf
    %2279 = vmax.xlane.f32.xlu0 %v2278
    %v2280 = vpop.xlane.xlu0 %2279
    %v2281 = vsel %vm706, %v2207, -inf
    %2282 = vmax.xlane.f32.xlu0 %v2281
    %v2283 = vpop.xlane.xlu0 %2282
    %v2284 = vsel %vm706, %v2208, -inf
    %2285 = vmax.xlane.f32.xlu0 %v2284
    %v2286 = vpop.xlane.xlu0 %2285
    %v2287 = vsel %vm706, %v2209, -inf
    %2288 = vmax.xlane.f32.xlu0 %v2287
    %v2289 = vpop.xlane.xlu0 %2288
    %v2290 = vsel %vm706, %v2210, -inf
    %2291 = vmax.xlane.f32.xlu0 %v2290
    %v2292 = vpop.xlane.xlu0 %2291
    %v2293 = vsel %vm706, %v2211, -inf
    %2294 = vmax.xlane.f32.xlu0 %v2293
    %v2295 = vpop.xlane.xlu0 %2294
    %v2296 = vsel %vm706, %v2212, -inf
    %2297 = vmax.xlane.f32.xlu0 %v2296
    %v2298 = vpop.xlane.xlu0 %2297
    %v2299 = vsel %vm706, %v2213, -inf
    %2300 = vmax.xlane.f32.xlu0 %v2299
    %v2301 = vpop.xlane.xlu0 %2300
    %v2302 = vsel %vm706, %v2214, -inf
    %2303 = vmax.xlane.f32.xlu0 %v2302
    %v2304 = vpop.xlane.xlu0 %2303
    %v2305 = vsel %vm706, %v2215, -inf
    %2306 = vmax.xlane.f32.xlu0 %v2305
    %v2307 = vpop.xlane.xlu0 %2306
    %v2308 = vsel %vm706, %v2216, -inf
    %2309 = vmax.xlane.f32.xlu0 %v2308
    %v2310 = vpop.xlane.xlu0 %2309
    %v2311 = vsel %vm706, %v2217, -inf
    %2312 = vmax.xlane.f32.xlu0 %v2311
    %v2313 = vpop.xlane.xlu0 %2312
    %v2314 = vsel %vm706, %v2218, -inf
    %2315 = vmax.xlane.f32.xlu0 %v2314
    %v2316 = vpop.xlane.xlu0 %2315
    %v2317 = vsel %vm706, %v2219, -inf
    %2318 = vmax.xlane.f32.xlu0 %v2317
    %v2319 = vpop.xlane.xlu0 %2318
    %v2320 = vsel %vm706, %v2220, -inf
    %2321 = vmax.xlane.f32.xlu0 %v2320
    %v2322 = vpop.xlane.xlu0 %2321
    %v2323 = vsel %vm706, %v2221, -inf
    %2324 = vmax.xlane.f32.xlu0 %v2323
    %v2325 = vpop.xlane.xlu0 %2324
    %v2326 = vsel %vm706, %v2222, -inf
    %2327 = vmax.xlane.f32.xlu0 %v2326
    %v2328 = vpop.xlane.xlu0 %2327
    %v2329 = vsel %vm706, %v2223, -inf
    %2330 = vmax.xlane.f32.xlu0 %v2329
    %v2331 = vpop.xlane.xlu0 %2330
    %v2332 = vsel %vm706, %v2224, -inf
    %2333 = vmax.xlane.f32.xlu0 %v2332
    %v2334 = vpop.xlane.xlu0 %2333
    %v2335 = vsel %vm706, %v2225, -inf
    %2336 = vmax.xlane.f32.xlu0 %v2335
    %v2337 = vpop.xlane.xlu0 %2336
    %v2338 = vsel %vm706, %v2226, -inf
    %2339 = vmax.xlane.f32.xlu0 %v2338
    %v2340 = vpop.xlane.xlu0 %2339
    %v2341 = vsel %vm706, %v2227, -inf
    %2342 = vmax.xlane.f32.xlu0 %v2341
    %v2343 = vpop.xlane.xlu0 %2342
    %v2344 = vsel %vm706, %v2228, -inf
    %2345 = vmax.xlane.f32.xlu0 %v2344
    %v2346 = vpop.xlane.xlu0 %2345
    %v2347 = vsel %vm706, %v2229, -inf
    %2348 = vmax.xlane.f32.xlu0 %v2347
    %v2349 = vpop.xlane.xlu0 %2348
    %v2350 = vsub.f32 %v2190, %v2232
    %v2351 = vsub.f32 %v2191, %v2235
    %v2352 = vsub.f32 %v2192, %v2238
    %v2353 = vsub.f32 %v2193, %v2241
    %v2354 = vsub.f32 %v2194, %v2244
    %v2355 = vsub.f32 %v2195, %v2247
    %v2356 = vsub.f32 %v2196, %v2250
    %v2357 = vsub.f32 %v2197, %v2253
    %v2358 = vsub.f32 %v2198, %v2256
    %v2359 = vsub.f32 %v2199, %v2259
    %v2360 = vsub.f32 %v2200, %v2262
    %v2361 = vsub.f32 %v2201, %v2265
    %v2362 = vsub.f32 %v2202, %v2268
    %v2363 = vsub.f32 %v2203, %v2271
    %v2364 = vsub.f32 %v2204, %v2274
    %v2365 = vsub.f32 %v2205, %v2277
    %v2366 = vsub.f32 %v2206, %v2280
    %v2367 = vsub.f32 %v2207, %v2283
    %v2368 = vsub.f32 %v2208, %v2286
    %v2369 = vsub.f32 %v2209, %v2289
    %v2370 = vsub.f32 %v2210, %v2292
    %v2371 = vsub.f32 %v2211, %v2295
    %v2372 = vsub.f32 %v2212, %v2298
    %v2373 = vsub.f32 %v2213, %v2301
    %v2374 = vsub.f32 %v2214, %v2304
    %v2375 = vsub.f32 %v2215, %v2307
    %v2376 = vsub.f32 %v2216, %v2310
    %v2377 = vsub.f32 %v2217, %v2313
    %v2378 = vsub.f32 %v2218, %v2316
    %v2379 = vsub.f32 %v2219, %v2319
    %v2380 = vsub.f32 %v2220, %v2322
    %v2381 = vsub.f32 %v2221, %v2325
    %v2382 = vsub.f32 %v2222, %v2328
    %v2383 = vsub.f32 %v2223, %v2331
    %v2384 = vsub.f32 %v2224, %v2334
    %v2385 = vsub.f32 %v2225, %v2337
    %v2386 = vsub.f32 %v2226, %v2340
    %v2387 = vsub.f32 %v2227, %v2343
    %v2388 = vsub.f32 %v2228, %v2346
    %v2389 = vsub.f32 %v2229, %v2349
    %v2390 = vmul.f32 %v2350, 1.442695
    %v2391 = vpow.pop %v2390
    %v2392 = vmul.f32 %v2351, 1.442695
    %v2393 = vpow.pop %v2392
    %v2394 = vmul.f32 %v2352, 1.442695
    %v2395 = vpow.pop %v2394
    %v2396 = vmul.f32 %v2353, 1.442695
    %v2397 = vpow.pop %v2396
    %v2398 = vmul.f32 %v2354, 1.442695
    %v2399 = vpow.pop %v2398
    %v2400 = vmul.f32 %v2355, 1.442695
    %v2401 = vpow.pop %v2400
    %v2402 = vmul.f32 %v2356, 1.442695
    %v2403 = vpow.pop %v2402
    %v2404 = vmul.f32 %v2357, 1.442695
    %v2405 = vpow.pop %v2404
    %v2406 = vmul.f32 %v2358, 1.442695
    %v2407 = vpow.pop %v2406
    %v2408 = vmul.f32 %v2359, 1.442695
    %v2409 = vpow.pop %v2408
    %v2410 = vmul.f32 %v2360, 1.442695
    %v2411 = vpow.pop %v2410
    %v2412 = vmul.f32 %v2361, 1.442695
    %v2413 = vpow.pop %v2412
    %v2414 = vmul.f32 %v2362, 1.442695
    %v2415 = vpow.pop %v2414
    %v2416 = vmul.f32 %v2363, 1.442695
    %v2417 = vpow.pop %v2416
    %v2418 = vmul.f32 %v2364, 1.442695
    %v2419 = vpow.pop %v2418
    %v2420 = vmul.f32 %v2365, 1.442695
    %v2421 = vpow.pop %v2420
    %v2422 = vmul.f32 %v2366, 1.442695
    %v2423 = vpow.pop %v2422
    %v2424 = vmul.f32 %v2367, 1.442695
    %v2425 = vpow.pop %v2424
    %v2426 = vmul.f32 %v2368, 1.442695
    %v2427 = vpow.pop %v2426
    %v2428 = vmul.f32 %v2369, 1.442695
    %v2429 = vpow.pop %v2428
    %v2430 = vmul.f32 %v2370, 1.442695
    %v2431 = vpow.pop %v2430
    %v2432 = vmul.f32 %v2371, 1.442695
    %v2433 = vpow.pop %v2432
    %v2434 = vmul.f32 %v2372, 1.442695
    %v2435 = vpow.pop %v2434
    %v2436 = vmul.f32 %v2373, 1.442695
    %v2437 = vpow.pop %v2436
    %v2438 = vmul.f32 %v2374, 1.442695
    %v2439 = vpow.pop %v2438
    %v2440 = vmul.f32 %v2375, 1.442695
    %v2441 = vpow.pop %v2440
    %v2442 = vmul.f32 %v2376, 1.442695
    %v2443 = vpow.pop %v2442
    %v2444 = vmul.f32 %v2377, 1.442695
    %v2445 = vpow.pop %v2444
    %v2446 = vmul.f32 %v2378, 1.442695
    %v2447 = vpow.pop %v2446
    %v2448 = vmul.f32 %v2379, 1.442695
    %v2449 = vpow.pop %v2448
    %v2450 = vmul.f32 %v2380, 1.442695
    %v2451 = vpow.pop %v2450
    %v2452 = vmul.f32 %v2381, 1.442695
    %v2453 = vpow.pop %v2452
    %v2454 = vmul.f32 %v2382, 1.442695
    %v2455 = vpow.pop %v2454
    %v2456 = vmul.f32 %v2383, 1.442695
    %v2457 = vpow.pop %v2456
    %v2458 = vmul.f32 %v2384, 1.442695
    %v2459 = vpow.pop %v2458
    %v2460 = vmul.f32 %v2385, 1.442695
    %v2461 = vpow.pop %v2460
    %v2462 = vmul.f32 %v2386, 1.442695
    %v2463 = vpow.pop %v2462
    %v2464 = vmul.f32 %v2387, 1.442695
    %v2465 = vpow.pop %v2464
    %v2466 = vmul.f32 %v2388, 1.442695
    %v2467 = vpow.pop %v2466
    %v2468 = vmul.f32 %v2389, 1.442695
    %v2469 = vpow.pop %v2468
    %v2470 = vmul.f32 %v2391, %v33
    %v2471 = vmul.f32 %v2393, %v34
    %v2472 = vmul.f32 %v2395, %v35
    %v2473 = vmul.f32 %v2397, %v36
    %v2474 = vmul.f32 %v2399, %v37
    %v2475 = vmul.f32 %v2401, %v38
    %v2476 = vmul.f32 %v2403, %v39
    %v2477 = vmul.f32 %v2405, %v40
    %v2478 = vmul.f32 %v2407, %v41
    %v2479 = vmul.f32 %v2409, %v42
    %v2480 = vmul.f32 %v2411, %v33
    %v2481 = vmul.f32 %v2413, %v34
    %v2482 = vmul.f32 %v2415, %v35
    %v2483 = vmul.f32 %v2417, %v36
    %v2484 = vmul.f32 %v2419, %v37
    %v2485 = vmul.f32 %v2421, %v38
    %v2486 = vmul.f32 %v2423, %v39
    %v2487 = vmul.f32 %v2425, %v40
    %v2488 = vmul.f32 %v2427, %v41
    %v2489 = vmul.f32 %v2429, %v42
    %v2490 = vmul.f32 %v2431, %v33
    %v2491 = vmul.f32 %v2433, %v34
    %v2492 = vmul.f32 %v2435, %v35
    %v2493 = vmul.f32 %v2437, %v36
    %v2494 = vmul.f32 %v2439, %v37
    %v2495 = vmul.f32 %v2441, %v38
    %v2496 = vmul.f32 %v2443, %v39
    %v2497 = vmul.f32 %v2445, %v40
    %v2498 = vmul.f32 %v2447, %v41
    %v2499 = vmul.f32 %v2449, %v42
    %v2500 = vmul.f32 %v2451, %v33
    %v2501 = vmul.f32 %v2453, %v34
    %v2502 = vmul.f32 %v2455, %v35
    %v2503 = vmul.f32 %v2457, %v36
    %v2504 = vmul.f32 %v2459, %v37
    %v2505 = vmul.f32 %v2461, %v38
    %v2506 = vmul.f32 %v2463, %v39
    %v2507 = vmul.f32 %v2465, %v40
    %v2508 = vmul.f32 %v2467, %v41
    %v2509 = vmul.f32 %v2469, %v42
    %v2510 = vsel %vm706, %v2470, 0.0
    %2511 = vadd.xlane.f32.xlu0 %v2510
    %v2512 = vpop.xlane.xlu0 %2511
    %v2513 = vsel %vm706, %v2471, 0.0
    %2514 = vadd.xlane.f32.xlu0 %v2513
    %v2515 = vpop.xlane.xlu0 %2514
    %v2516 = vsel %vm706, %v2472, 0.0
    %2517 = vadd.xlane.f32.xlu0 %v2516
    %v2518 = vpop.xlane.xlu0 %2517
    %v2519 = vsel %vm706, %v2473, 0.0
    %2520 = vadd.xlane.f32.xlu0 %v2519
    %v2521 = vpop.xlane.xlu0 %2520
    %v2522 = vsel %vm706, %v2474, 0.0
    %2523 = vadd.xlane.f32.xlu0 %v2522
    %v2524 = vpop.xlane.xlu0 %2523
    %v2525 = vsel %vm706, %v2475, 0.0
    %2526 = vadd.xlane.f32.xlu0 %v2525
    %v2527 = vpop.xlane.xlu0 %2526
    %v2528 = vsel %vm706, %v2476, 0.0
    %2529 = vadd.xlane.f32.xlu0 %v2528
    %v2530 = vpop.xlane.xlu0 %2529
    %v2531 = vsel %vm706, %v2477, 0.0
    %2532 = vadd.xlane.f32.xlu0 %v2531
    %v2533 = vpop.xlane.xlu0 %2532
    %v2534 = vsel %vm706, %v2478, 0.0
    %2535 = vadd.xlane.f32.xlu0 %v2534
    %v2536 = vpop.xlane.xlu0 %2535
    %v2537 = vsel %vm706, %v2479, 0.0
    %2538 = vadd.xlane.f32.xlu0 %v2537
    %v2539 = vpop.xlane.xlu0 %2538
    %v2540 = vsel %vm706, %v2480, 0.0
    %2541 = vadd.xlane.f32.xlu0 %v2540
    %v2542 = vpop.xlane.xlu0 %2541
    %v2543 = vsel %vm706, %v2481, 0.0
    %2544 = vadd.xlane.f32.xlu0 %v2543
    %v2545 = vpop.xlane.xlu0 %2544
    %v2546 = vsel %vm706, %v2482, 0.0
    %2547 = vadd.xlane.f32.xlu0 %v2546
    %v2548 = vpop.xlane.xlu0 %2547
    %v2549 = vsel %vm706, %v2483, 0.0
    %2550 = vadd.xlane.f32.xlu0 %v2549
    %v2551 = vpop.xlane.xlu0 %2550
    %v2552 = vsel %vm706, %v2484, 0.0
    %2553 = vadd.xlane.f32.xlu0 %v2552
    %v2554 = vpop.xlane.xlu0 %2553
    %v2555 = vsel %vm706, %v2485, 0.0
    %2556 = vadd.xlane.f32.xlu0 %v2555
    %v2557 = vpop.xlane.xlu0 %2556
    %v2558 = vsel %vm706, %v2486, 0.0
    %2559 = vadd.xlane.f32.xlu0 %v2558
    %v2560 = vpop.xlane.xlu0 %2559
    %v2561 = vsel %vm706, %v2487, 0.0
    %2562 = vadd.xlane.f32.xlu0 %v2561
    %v2563 = vpop.xlane.xlu0 %2562
    %v2564 = vsel %vm706, %v2488, 0.0
    %2565 = vadd.xlane.f32.xlu0 %v2564
    %v2566 = vpop.xlane.xlu0 %2565
    %v2567 = vsel %vm706, %v2489, 0.0
    %2568 = vadd.xlane.f32.xlu0 %v2567
    %v2569 = vpop.xlane.xlu0 %2568
    %v2570 = vsel %vm706, %v2490, 0.0
    %2571 = vadd.xlane.f32.xlu0 %v2570
    %v2572 = vpop.xlane.xlu0 %2571
    %v2573 = vsel %vm706, %v2491, 0.0
    %2574 = vadd.xlane.f32.xlu0 %v2573
    %v2575 = vpop.xlane.xlu0 %2574
    %v2576 = vsel %vm706, %v2492, 0.0
    %2577 = vadd.xlane.f32.xlu0 %v2576
    %v2578 = vpop.xlane.xlu0 %2577
    %v2579 = vsel %vm706, %v2493, 0.0
    %2580 = vadd.xlane.f32.xlu0 %v2579
    %v2581 = vpop.xlane.xlu0 %2580
    %v2582 = vsel %vm706, %v2494, 0.0
    %2583 = vadd.xlane.f32.xlu0 %v2582
    %v2584 = vpop.xlane.xlu0 %2583
    %v2585 = vsel %vm706, %v2495, 0.0
    %2586 = vadd.xlane.f32.xlu0 %v2585
    %v2587 = vpop.xlane.xlu0 %2586
    %v2588 = vsel %vm706, %v2496, 0.0
    %2589 = vadd.xlane.f32.xlu0 %v2588
    %v2590 = vpop.xlane.xlu0 %2589
    %v2591 = vsel %vm706, %v2497, 0.0
    %2592 = vadd.xlane.f32.xlu0 %v2591
    %v2593 = vpop.xlane.xlu0 %2592
    %v2594 = vsel %vm706, %v2498, 0.0
    %2595 = vadd.xlane.f32.xlu0 %v2594
    %v2596 = vpop.xlane.xlu0 %2595
    %v2597 = vsel %vm706, %v2499, 0.0
    %2598 = vadd.xlane.f32.xlu0 %v2597
    %v2599 = vpop.xlane.xlu0 %2598
    %v2600 = vsel %vm706, %v2500, 0.0
    %2601 = vadd.xlane.f32.xlu0 %v2600
    %v2602 = vpop.xlane.xlu0 %2601
    %v2603 = vsel %vm706, %v2501, 0.0
    %2604 = vadd.xlane.f32.xlu0 %v2603
    %v2605 = vpop.xlane.xlu0 %2604
    %v2606 = vsel %vm706, %v2502, 0.0
    %2607 = vadd.xlane.f32.xlu0 %v2606
    %v2608 = vpop.xlane.xlu0 %2607
    %v2609 = vsel %vm706, %v2503, 0.0
    %2610 = vadd.xlane.f32.xlu0 %v2609
    %v2611 = vpop.xlane.xlu0 %2610
    %v2612 = vsel %vm706, %v2504, 0.0
    %2613 = vadd.xlane.f32.xlu0 %v2612
    %v2614 = vpop.xlane.xlu0 %2613
    %v2615 = vsel %vm706, %v2505, 0.0
    %2616 = vadd.xlane.f32.xlu0 %v2615
    %v2617 = vpop.xlane.xlu0 %2616
    %v2618 = vsel %vm706, %v2506, 0.0
    %2619 = vadd.xlane.f32.xlu0 %v2618
    %v2620 = vpop.xlane.xlu0 %2619
    %v2621 = vsel %vm706, %v2507, 0.0
    %2622 = vadd.xlane.f32.xlu0 %v2621
    %v2623 = vpop.xlane.xlu0 %2622
    %v2624 = vsel %vm706, %v2508, 0.0
    %2625 = vadd.xlane.f32.xlu0 %v2624
    %v2626 = vpop.xlane.xlu0 %2625
    %v2627 = vsel %vm706, %v2509, 0.0
    %2628 = vadd.xlane.f32.xlu0 %v2627
    %v2629 = vpop.xlane.xlu0 %2628
    %v2630 = vadd.f32 %v2512, 1e-16
    %v2631 = vadd.f32 %v2515, 1e-16
    %v2632 = vadd.f32 %v2518, 1e-16
    %v2633 = vadd.f32 %v2521, 1e-16
    %v2634 = vadd.f32 %v2524, 1e-16
    %v2635 = vadd.f32 %v2527, 1e-16
    %v2636 = vadd.f32 %v2530, 1e-16
    %v2637 = vadd.f32 %v2533, 1e-16
    %v2638 = vadd.f32 %v2536, 1e-16
    %v2639 = vadd.f32 %v2539, 1e-16
    %v2640 = vadd.f32 %v2542, 1e-16
    %v2641 = vadd.f32 %v2545, 1e-16
    %v2642 = vadd.f32 %v2548, 1e-16
    %v2643 = vadd.f32 %v2551, 1e-16
    %v2644 = vadd.f32 %v2554, 1e-16
    %v2645 = vadd.f32 %v2557, 1e-16
    %v2646 = vadd.f32 %v2560, 1e-16
    %v2647 = vadd.f32 %v2563, 1e-16
    %v2648 = vadd.f32 %v2566, 1e-16
    %v2649 = vadd.f32 %v2569, 1e-16
    %v2650 = vadd.f32 %v2572, 1e-16
    %v2651 = vadd.f32 %v2575, 1e-16
    %v2652 = vadd.f32 %v2578, 1e-16
    %v2653 = vadd.f32 %v2581, 1e-16
    %v2654 = vadd.f32 %v2584, 1e-16
    %v2655 = vadd.f32 %v2587, 1e-16
    %v2656 = vadd.f32 %v2590, 1e-16
    %v2657 = vadd.f32 %v2593, 1e-16
    %v2658 = vadd.f32 %v2596, 1e-16
    %v2659 = vadd.f32 %v2599, 1e-16
    %v2660 = vadd.f32 %v2602, 1e-16
    %v2661 = vadd.f32 %v2605, 1e-16
    %v2662 = vadd.f32 %v2608, 1e-16
    %v2663 = vadd.f32 %v2611, 1e-16
    %v2664 = vadd.f32 %v2614, 1e-16
    %v2665 = vadd.f32 %v2617, 1e-16
    %v2666 = vadd.f32 %v2620, 1e-16
    %v2667 = vadd.f32 %v2623, 1e-16
    %v2668 = vadd.f32 %v2626, 1e-16
    %v2669 = vadd.f32 %v2629, 1e-16
    %v2670 = vrcp.pop %v2630
    %v2671 = vrcp.pop %v2631
    %v2672 = vrcp.pop %v2632
    %v2673 = vrcp.pop %v2633
    %v2674 = vrcp.pop %v2634
    %v2675 = vrcp.pop %v2635
    %v2676 = vrcp.pop %v2636
    %v2677 = vrcp.pop %v2637
    %v2678 = vrcp.pop %v2638
    %v2679 = vrcp.pop %v2639
    %v2680 = vrcp.pop %v2640
    %v2681 = vrcp.pop %v2641
    %v2682 = vrcp.pop %v2642
    %v2683 = vrcp.pop %v2643
    %v2684 = vrcp.pop %v2644
    %v2685 = vrcp.pop %v2645
    %v2686 = vrcp.pop %v2646
    %v2687 = vrcp.pop %v2647
    %v2688 = vrcp.pop %v2648
    %v2689 = vrcp.pop %v2649
    %v2690 = vrcp.pop %v2650
    %v2691 = vrcp.pop %v2651
    %v2692 = vrcp.pop %v2652
    %v2693 = vrcp.pop %v2653
    %v2694 = vrcp.pop %v2654
    %v2695 = vrcp.pop %v2655
    %v2696 = vrcp.pop %v2656
    %v2697 = vrcp.pop %v2657
    %v2698 = vrcp.pop %v2658
    %v2699 = vrcp.pop %v2659
    %v2700 = vrcp.pop %v2660
    %v2701 = vrcp.pop %v2661
    %v2702 = vrcp.pop %v2662
    %v2703 = vrcp.pop %v2663
    %v2704 = vrcp.pop %v2664
    %v2705 = vrcp.pop %v2665
    %v2706 = vrcp.pop %v2666
    %v2707 = vrcp.pop %v2667
    %v2708 = vrcp.pop %v2668
    %v2709 = vrcp.pop %v2669
    %v2711 = vsel %vm706, %v2470, 0
    %v2714 = vsel %vm706, %v2471, 0
    %v2717 = vsel %vm706, %v2472, 0
    %v2720 = vsel %vm706, %v2473, 0
    %v2723 = vsel %vm706, %v2474, 0
    %v2726 = vsel %vm706, %v2475, 0
    %v2729 = vsel %vm706, %v2476, 0
    %v2732 = vsel %vm706, %v2477, 0
    %v2735 = vsel %vm706, %v2478, 0
    %v2738 = vsel %vm706, %v2479, 0
    %2740 = vmatpush.msra.mxu0 0.0
    %2741 = vmatpush.msra.mxu0 0.0
    %2742 = vmatpush.msra.mxu0 0.0
    %2743 = vmatpush.msra.mxu0 0.0
    %2744 = vmatpush.msra.mxu0 0.0
    %2745 = vmatpush.msra.mxu0 0.0
    %2746 = vmatpush.msra.mxu0 %v1754
    %2747 = vmatpush.msra.mxu0 %v1751
    %2748 = vmatpush.msra.mxu0 %v1748
    %2749 = vmatpush.msra.mxu0 %v1745
    %2750 = vmatpush.msra.mxu0 %v1742
    %2751 = vmatpush.msra.mxu0 %v1739
    %2752 = vmatpush.msra.mxu0 %v1736
    %2753 = vmatpush.msra.mxu0 %v1733
    %2754 = vmatpush.msra.mxu0 %v1730
    %2755 = vmatpush.msra.mxu0 %v1727
    %2756 = vmatmul.f32.gmra.mxu0 %v2711
    %v2757 = vpop.f32.mrf.mxu0
    %v2758 = vadd.f32 0.0, %v2757
    %2759 = vmatmul.f32.gmra.mxu0 %v2714
    %v2760 = vpop.f32.mrf.mxu0
    %v2761 = vadd.f32 0.0, %v2760
    %2762 = vmatmul.f32.gmra.mxu0 %v2717
    %v2763 = vpop.f32.mrf.mxu0
    %v2764 = vadd.f32 0.0, %v2763
    %2765 = vmatmul.f32.gmra.mxu0 %v2720
    %v2766 = vpop.f32.mrf.mxu0
    %v2767 = vadd.f32 0.0, %v2766
    %2768 = vmatmul.f32.gmra.mxu0 %v2723
    %v2769 = vpop.f32.mrf.mxu0
    %v2770 = vadd.f32 0.0, %v2769
    %2771 = vmatmul.f32.gmra.mxu0 %v2726
    %v2772 = vpop.f32.mrf.mxu0
    %v2773 = vadd.f32 0.0, %v2772
    %2774 = vmatmul.f32.gmra.mxu0 %v2729
    %v2775 = vpop.f32.mrf.mxu0
    %v2776 = vadd.f32 0.0, %v2775
    %2777 = vmatmul.f32.gmra.mxu0 %v2732
    %v2778 = vpop.f32.mrf.mxu0
    %v2779 = vadd.f32 0.0, %v2778
    %2780 = vmatmul.f32.gmra.mxu0 %v2735
    %v2781 = vpop.f32.mrf.mxu0
    %v2782 = vadd.f32 0.0, %v2781
    %2783 = vmatmul.f32.gmra.mxu0 %v2738
    %v2784 = vpop.f32.mrf.mxu0
    %v2785 = vadd.f32 0.0, %v2784
    %2786 = vdwg.mxu0
    %v2787 = vmul.f32 %v1265, %v2670
    %v2788 = vmul.f32 %v1265, %v2671
    %v2789 = vmul.f32 %v1265, %v2672
    %v2790 = vmul.f32 %v1265, %v2673
    %v2791 = vmul.f32 %v1265, %v2674
    %v2792 = vmul.f32 %v1265, %v2675
    %v2793 = vmul.f32 %v1265, %v2676
    %v2794 = vmul.f32 %v1265, %v2677
    %v2795 = vmul.f32 %v1265, %v2678
    %v2796 = vmul.f32 %v1265, %v2679
    %v2797 = vmul.f32 %v2758, %v2787
    %v2798 = vmul.f32 %v2761, %v2788
    %v2799 = vmul.f32 %v2764, %v2789
    %v2800 = vmul.f32 %v2767, %v2790
    %v2801 = vmul.f32 %v2770, %v2791
    %v2802 = vmul.f32 %v2773, %v2792
    %v2803 = vmul.f32 %v2776, %v2793
    %v2804 = vmul.f32 %v2779, %v2794
    %v2805 = vmul.f32 %v2782, %v2795
    %v2806 = vmul.f32 %v2785, %v2796
    %v2808 = vsel %vm706, %v2480, 0
    %v2811 = vsel %vm706, %v2481, 0
    %v2814 = vsel %vm706, %v2482, 0
    %v2817 = vsel %vm706, %v2483, 0
    %v2820 = vsel %vm706, %v2484, 0
    %v2823 = vsel %vm706, %v2485, 0
    %v2826 = vsel %vm706, %v2486, 0
    %v2829 = vsel %vm706, %v2487, 0
    %v2832 = vsel %vm706, %v2488, 0
    %v2835 = vsel %vm706, %v2489, 0
    %2837 = vmatpush.msra.mxu0 0.0
    %2838 = vmatpush.msra.mxu0 0.0
    %2839 = vmatpush.msra.mxu0 0.0
    %2840 = vmatpush.msra.mxu0 0.0
    %2841 = vmatpush.msra.mxu0 0.0
    %2842 = vmatpush.msra.mxu0 0.0
    %2843 = vmatpush.msra.mxu0 %v1754
    %2844 = vmatpush.msra.mxu0 %v1751
    %2845 = vmatpush.msra.mxu0 %v1748
    %2846 = vmatpush.msra.mxu0 %v1745
    %2847 = vmatpush.msra.mxu0 %v1742
    %2848 = vmatpush.msra.mxu0 %v1739
    %2849 = vmatpush.msra.mxu0 %v1736
    %2850 = vmatpush.msra.mxu0 %v1733
    %2851 = vmatpush.msra.mxu0 %v1730
    %2852 = vmatpush.msra.mxu0 %v1727
    %2853 = vmatmul.f32.gmra.mxu0 %v2808
    %v2854 = vpop.f32.mrf.mxu0
    %v2855 = vadd.f32 0.0, %v2854
    %2856 = vmatmul.f32.gmra.mxu0 %v2811
    %v2857 = vpop.f32.mrf.mxu0
    %v2858 = vadd.f32 0.0, %v2857
    %2859 = vmatmul.f32.gmra.mxu0 %v2814
    %v2860 = vpop.f32.mrf.mxu0
    %v2861 = vadd.f32 0.0, %v2860
    %2862 = vmatmul.f32.gmra.mxu0 %v2817
    %v2863 = vpop.f32.mrf.mxu0
    %v2864 = vadd.f32 0.0, %v2863
    %2865 = vmatmul.f32.gmra.mxu0 %v2820
    %v2866 = vpop.f32.mrf.mxu0
    %v2867 = vadd.f32 0.0, %v2866
    %2868 = vmatmul.f32.gmra.mxu0 %v2823
    %v2869 = vpop.f32.mrf.mxu0
    %v2870 = vadd.f32 0.0, %v2869
    %2871 = vmatmul.f32.gmra.mxu0 %v2826
    %v2872 = vpop.f32.mrf.mxu0
    %v2873 = vadd.f32 0.0, %v2872
    %2874 = vmatmul.f32.gmra.mxu0 %v2829
    %v2875 = vpop.f32.mrf.mxu0
    %v2876 = vadd.f32 0.0, %v2875
    %2877 = vmatmul.f32.gmra.mxu0 %v2832
    %v2878 = vpop.f32.mrf.mxu0
    %v2879 = vadd.f32 0.0, %v2878
    %2880 = vmatmul.f32.gmra.mxu0 %v2835
    %v2881 = vpop.f32.mrf.mxu0
    %v2882 = vadd.f32 0.0, %v2881
    %2883 = vdwg.mxu0
    %v2884 = vmul.f32 %v1363, %v2680
    %v2885 = vmul.f32 %v1363, %v2681
    %v2886 = vmul.f32 %v1363, %v2682
    %v2887 = vmul.f32 %v1363, %v2683
    %v2888 = vmul.f32 %v1363, %v2684
    %v2889 = vmul.f32 %v1363, %v2685
    %v2890 = vmul.f32 %v1363, %v2686
    %v2891 = vmul.f32 %v1363, %v2687
    %v2892 = vmul.f32 %v1363, %v2688
    %v2893 = vmul.f32 %v1363, %v2689
    %v2894 = vmul.f32 %v2855, %v2884
    %v2895 = vmul.f32 %v2858, %v2885
    %v2896 = vmul.f32 %v2861, %v2886
    %v2897 = vmul.f32 %v2864, %v2887
    %v2898 = vmul.f32 %v2867, %v2888
    %v2899 = vmul.f32 %v2870, %v2889
    %v2900 = vmul.f32 %v2873, %v2890
    %v2901 = vmul.f32 %v2876, %v2891
    %v2902 = vmul.f32 %v2879, %v2892
    %v2903 = vmul.f32 %v2882, %v2893
    %v2904 = vadd.f32 %v2797, %v2894
    %v2905 = vadd.f32 %v2798, %v2895
    %v2906 = vadd.f32 %v2799, %v2896
    %v2907 = vadd.f32 %v2800, %v2897
    %v2908 = vadd.f32 %v2801, %v2898
    %v2909 = vadd.f32 %v2802, %v2899
    %v2910 = vadd.f32 %v2803, %v2900
    %v2911 = vadd.f32 %v2804, %v2901
    %v2912 = vadd.f32 %v2805, %v2902
    %v2913 = vadd.f32 %v2806, %v2903
    %v2915 = vsel %vm706, %v2490, 0
    %v2918 = vsel %vm706, %v2491, 0
    %v2921 = vsel %vm706, %v2492, 0
    %v2924 = vsel %vm706, %v2493, 0
    %v2927 = vsel %vm706, %v2494, 0
    %v2930 = vsel %vm706, %v2495, 0
    %v2933 = vsel %vm706, %v2496, 0
    %v2936 = vsel %vm706, %v2497, 0
    %v2939 = vsel %vm706, %v2498, 0
    %v2942 = vsel %vm706, %v2499, 0
    %2944 = vmatpush.msra.mxu0 0.0
    %2945 = vmatpush.msra.mxu0 0.0
    %2946 = vmatpush.msra.mxu0 0.0
    %2947 = vmatpush.msra.mxu0 0.0
    %2948 = vmatpush.msra.mxu0 0.0
    %2949 = vmatpush.msra.mxu0 0.0
    %2950 = vmatpush.msra.mxu0 %v1754
    %2951 = vmatpush.msra.mxu0 %v1751
    %2952 = vmatpush.msra.mxu0 %v1748
    %2953 = vmatpush.msra.mxu0 %v1745
    %2954 = vmatpush.msra.mxu0 %v1742
    %2955 = vmatpush.msra.mxu0 %v1739
    %2956 = vmatpush.msra.mxu0 %v1736
    %2957 = vmatpush.msra.mxu0 %v1733
    %2958 = vmatpush.msra.mxu0 %v1730
    %2959 = vmatpush.msra.mxu0 %v1727
    %2960 = vmatmul.f32.gmra.mxu0 %v2915
    %v2961 = vpop.f32.mrf.mxu0
    %v2962 = vadd.f32 0.0, %v2961
    %2963 = vmatmul.f32.gmra.mxu0 %v2918
    %v2964 = vpop.f32.mrf.mxu0
    %v2965 = vadd.f32 0.0, %v2964
    %2966 = vmatmul.f32.gmra.mxu0 %v2921
    %v2967 = vpop.f32.mrf.mxu0
    %v2968 = vadd.f32 0.0, %v2967
    %2969 = vmatmul.f32.gmra.mxu0 %v2924
    %v2970 = vpop.f32.mrf.mxu0
    %v2971 = vadd.f32 0.0, %v2970
    %2972 = vmatmul.f32.gmra.mxu0 %v2927
    %v2973 = vpop.f32.mrf.mxu0
    %v2974 = vadd.f32 0.0, %v2973
    %2975 = vmatmul.f32.gmra.mxu0 %v2930
    %v2976 = vpop.f32.mrf.mxu0
    %v2977 = vadd.f32 0.0, %v2976
    %2978 = vmatmul.f32.gmra.mxu0 %v2933
    %v2979 = vpop.f32.mrf.mxu0
    %v2980 = vadd.f32 0.0, %v2979
    %2981 = vmatmul.f32.gmra.mxu0 %v2936
    %v2982 = vpop.f32.mrf.mxu0
    %v2983 = vadd.f32 0.0, %v2982
    %2984 = vmatmul.f32.gmra.mxu0 %v2939
    %v2985 = vpop.f32.mrf.mxu0
    %v2986 = vadd.f32 0.0, %v2985
    %2987 = vmatmul.f32.gmra.mxu0 %v2942
    %v2988 = vpop.f32.mrf.mxu0
    %v2989 = vadd.f32 0.0, %v2988
    %2990 = vdwg.mxu0
    %v2991 = vmul.f32 %v1471, %v2690
    %v2992 = vmul.f32 %v1471, %v2691
    %v2993 = vmul.f32 %v1471, %v2692
    %v2994 = vmul.f32 %v1471, %v2693
    %v2995 = vmul.f32 %v1471, %v2694
    %v2996 = vmul.f32 %v1471, %v2695
    %v2997 = vmul.f32 %v1471, %v2696
    %v2998 = vmul.f32 %v1471, %v2697
    %v2999 = vmul.f32 %v1471, %v2698
    %v3000 = vmul.f32 %v1471, %v2699
    %v3001 = vmul.f32 %v2962, %v2991
    %v3002 = vmul.f32 %v2965, %v2992
    %v3003 = vmul.f32 %v2968, %v2993
    %v3004 = vmul.f32 %v2971, %v2994
    %v3005 = vmul.f32 %v2974, %v2995
    %v3006 = vmul.f32 %v2977, %v2996
    %v3007 = vmul.f32 %v2980, %v2997
    %v3008 = vmul.f32 %v2983, %v2998
    %v3009 = vmul.f32 %v2986, %v2999
    %v3010 = vmul.f32 %v2989, %v3000
    %v3011 = vadd.f32 %v2904, %v3001
    %v3012 = vadd.f32 %v2905, %v3002
    %v3013 = vadd.f32 %v2906, %v3003
    %v3014 = vadd.f32 %v2907, %v3004
    %v3015 = vadd.f32 %v2908, %v3005
    %v3016 = vadd.f32 %v2909, %v3006
    %v3017 = vadd.f32 %v2910, %v3007
    %v3018 = vadd.f32 %v2911, %v3008
    %v3019 = vadd.f32 %v2912, %v3009
    %v3020 = vadd.f32 %v2913, %v3010
    %v3022 = vsel %vm706, %v2500, 0
    %v3025 = vsel %vm706, %v2501, 0
    %v3028 = vsel %vm706, %v2502, 0
    %v3031 = vsel %vm706, %v2503, 0
    %v3034 = vsel %vm706, %v2504, 0
    %v3037 = vsel %vm706, %v2505, 0
    %v3040 = vsel %vm706, %v2506, 0
    %v3043 = vsel %vm706, %v2507, 0
    %v3046 = vsel %vm706, %v2508, 0
    %v3049 = vsel %vm706, %v2509, 0
    %3051 = vmatpush.msra.mxu0 0.0
    %3052 = vmatpush.msra.mxu0 0.0
    %3053 = vmatpush.msra.mxu0 0.0
    %3054 = vmatpush.msra.mxu0 0.0
    %3055 = vmatpush.msra.mxu0 0.0
    %3056 = vmatpush.msra.mxu0 0.0
    %3057 = vmatpush.msra.mxu0 %v1754
    %3058 = vmatpush.msra.mxu0 %v1751
    %3059 = vmatpush.msra.mxu0 %v1748
    %3060 = vmatpush.msra.mxu0 %v1745
    %3061 = vmatpush.msra.mxu0 %v1742
    %3062 = vmatpush.msra.mxu0 %v1739
    %3063 = vmatpush.msra.mxu0 %v1736
    %3064 = vmatpush.msra.mxu0 %v1733
    %3065 = vmatpush.msra.mxu0 %v1730
    %3066 = vmatpush.msra.mxu0 %v1727
    %3067 = vmatmul.f32.gmra.mxu0 %v3022
    %v3068 = vpop.f32.mrf.mxu0
    %v3069 = vadd.f32 0.0, %v3068
    %3070 = vmatmul.f32.gmra.mxu0 %v3025
    %v3071 = vpop.f32.mrf.mxu0
    %v3072 = vadd.f32 0.0, %v3071
    %3073 = vmatmul.f32.gmra.mxu0 %v3028
    %v3074 = vpop.f32.mrf.mxu0
    %v3075 = vadd.f32 0.0, %v3074
    %3076 = vmatmul.f32.gmra.mxu0 %v3031
    %v3077 = vpop.f32.mrf.mxu0
    %v3078 = vadd.f32 0.0, %v3077
    %3079 = vmatmul.f32.gmra.mxu0 %v3034
    %v3080 = vpop.f32.mrf.mxu0
    %v3081 = vadd.f32 0.0, %v3080
    %3082 = vmatmul.f32.gmra.mxu0 %v3037
    %v3083 = vpop.f32.mrf.mxu0
    %v3084 = vadd.f32 0.0, %v3083
    %3085 = vmatmul.f32.gmra.mxu0 %v3040
    %v3086 = vpop.f32.mrf.mxu0
    %v3087 = vadd.f32 0.0, %v3086
    %3088 = vmatmul.f32.gmra.mxu0 %v3043
    %v3089 = vpop.f32.mrf.mxu0
    %v3090 = vadd.f32 0.0, %v3089
    %3091 = vmatmul.f32.gmra.mxu0 %v3046
    %v3092 = vpop.f32.mrf.mxu0
    %v3093 = vadd.f32 0.0, %v3092
    %3094 = vmatmul.f32.gmra.mxu0 %v3049
    %v3095 = vpop.f32.mrf.mxu0
    %v3096 = vadd.f32 0.0, %v3095
    %3097 = vdwg.mxu0
    %v3098 = vmul.f32 %v1579, %v2700
    %v3099 = vmul.f32 %v1579, %v2701
    %v3100 = vmul.f32 %v1579, %v2702
    %v3101 = vmul.f32 %v1579, %v2703
    %v3102 = vmul.f32 %v1579, %v2704
    %v3103 = vmul.f32 %v1579, %v2705
    %v3104 = vmul.f32 %v1579, %v2706
    %v3105 = vmul.f32 %v1579, %v2707
    %v3106 = vmul.f32 %v1579, %v2708
    %v3107 = vmul.f32 %v1579, %v2709
    %v3108 = vmul.f32 %v3069, %v3098
    %v3109 = vmul.f32 %v3072, %v3099
    %v3110 = vmul.f32 %v3075, %v3100
    %v3111 = vmul.f32 %v3078, %v3101
    %v3112 = vmul.f32 %v3081, %v3102
    %v3113 = vmul.f32 %v3084, %v3103
    %v3114 = vmul.f32 %v3087, %v3104
    %v3115 = vmul.f32 %v3090, %v3105
    %v3116 = vmul.f32 %v3093, %v3106
    %v3117 = vmul.f32 %v3096, %v3107
    %v3118 = vadd.f32 %v3011, %v3108
    %v3119 = vadd.f32 %v3012, %v3109
    %v3120 = vadd.f32 %v3013, %v3110
    %v3121 = vadd.f32 %v3014, %v3111
    %v3122 = vadd.f32 %v3015, %v3112
    %v3123 = vadd.f32 %v3016, %v3113
    %v3124 = vadd.f32 %v3017, %v3114
    %v3125 = vadd.f32 %v3018, %v3115
    %v3126 = vadd.f32 %v3019, %v3116
    %v3127 = vadd.f32 %v3020, %v3117
    %vm3128 = vcmp.gt.f32.partialorder %v3118, 0.0
    %vm3129 = vcmp.gt.f32.partialorder %v3119, 0.0
    %vm3130 = vcmp.gt.f32.partialorder %v3120, 0.0
    %vm3131 = vcmp.gt.f32.partialorder %v3121, 0.0
    %vm3132 = vcmp.gt.f32.partialorder %v3122, 0.0
    %vm3133 = vcmp.gt.f32.partialorder %v3123, 0.0
    %vm3134 = vcmp.gt.f32.partialorder %v3124, 0.0
    %vm3135 = vcmp.gt.f32.partialorder %v3125, 0.0
    %vm3136 = vcmp.gt.f32.partialorder %v3126, 0.0
    %vm3137 = vcmp.gt.f32.partialorder %v3127, 0.0
    %v3138 = vmin.f32 %v3118, 0.0
    %v3139 = vmin.f32 %v3119, 0.0
    %v3140 = vmin.f32 %v3120, 0.0
    %v3141 = vmin.f32 %v3121, 0.0
    %v3142 = vmin.f32 %v3122, 0.0
    %v3143 = vmin.f32 %v3123, 0.0
    %v3144 = vmin.f32 %v3124, 0.0
    %v3145 = vmin.f32 %v3125, 0.0
    %v3146 = vmin.f32 %v3126, 0.0
    %v3147 = vmin.f32 %v3127, 0.0
    %v3148 = vmul.f32 %v3138, 1.442695
    %v3149 = vpow.pop %v3148
    %v3150 = vmul.f32 %v3139, 1.442695
    %v3151 = vpow.pop %v3150
    %v3152 = vmul.f32 %v3140, 1.442695
    %v3153 = vpow.pop %v3152
    %v3154 = vmul.f32 %v3141, 1.442695
    %v3155 = vpow.pop %v3154
    %v3156 = vmul.f32 %v3142, 1.442695
    %v3157 = vpow.pop %v3156
    %v3158 = vmul.f32 %v3143, 1.442695
    %v3159 = vpow.pop %v3158
    %v3160 = vmul.f32 %v3144, 1.442695
    %v3161 = vpow.pop %v3160
    %v3162 = vmul.f32 %v3145, 1.442695
    %v3163 = vpow.pop %v3162
    %v3164 = vmul.f32 %v3146, 1.442695
    %v3165 = vpow.pop %v3164
    %v3166 = vmul.f32 %v3147, 1.442695
    %v3167 = vpow.pop %v3166
    %v3168 = vsub.f32 %v3149, 1.0
    %v3169 = vsub.f32 %v3151, 1.0
    %v3170 = vsub.f32 %v3153, 1.0
    %v3171 = vsub.f32 %v3155, 1.0
    %v3172 = vsub.f32 %v3157, 1.0
    %v3173 = vsub.f32 %v3159, 1.0
    %v3174 = vsub.f32 %v3161, 1.0
    %v3175 = vsub.f32 %v3163, 1.0
    %v3176 = vsub.f32 %v3165, 1.0
    %v3177 = vsub.f32 %v3167, 1.0
    %v3178 = vsel %vm3128, %v3118, %v3168
    %v3179 = vsel %vm3129, %v3119, %v3169
    %v3180 = vsel %vm3130, %v3120, %v3170
    %v3181 = vsel %vm3131, %v3121, %v3171
    %v3182 = vsel %vm3132, %v3122, %v3172
    %v3183 = vsel %vm3133, %v3123, %v3173
    %v3184 = vsel %vm3134, %v3124, %v3174
    %v3185 = vsel %vm3135, %v3125, %v3175
    %v3186 = vsel %vm3136, %v3126, %v3176
    %v3187 = vsel %vm3137, %v3127, %v3177
    %v3188 = vld [vmem:[#allocation2 + $0x78] sm:$0xff]
    %v3189 = vld [vmem:[#allocation2 + $0x80] sm:$0xff]
    %v3190 = vld [vmem:[#allocation2 + $0x88] sm:$0xff]
    %v3191 = vld [vmem:[#allocation2 + $0x90] sm:$0xff]
    %v3192 = vld [vmem:[#allocation2 + $0x98] sm:$0x1]
    %v3193 = vld [vmem:[#allocation2 + $0xa0] sm:$0xff]
    %v3194 = vld [vmem:[#allocation2 + $0xa8] sm:$0xff]
    %v3196 = vsel %vm231, %v3178, 0
    %v3199 = vsel %vm231, %v3179, 0
    %v3202 = vsel %vm231, %v3180, 0
    %v3205 = vsel %vm231, %v3181, 0
    %v3208 = vsel %vm231, %v3182, 0
    %v3211 = vsel %vm231, %v3183, 0
    %v3214 = vsel %vm231, %v3184, 0
    %v3217 = vsel %vm231, %v3185, 0
    %v3220 = vsel %vm231, %v3186, 0
    %v3223 = vsel %vm231, %v3187, 0
    %3225 = vmatpush.msra.mxu0 0.0
    %3226 = vmatpush.msra.mxu0 0.0
    %3227 = vmatpush.msra.mxu0 0.0
    %3228 = vmatpush.msra.mxu0 0.0
    %3229 = vmatpush.msra.mxu0 0.0
    %3230 = vmatpush.msra.mxu0 0.0
    %3231 = vmatpush.msra.mxu0 0.0
    %3232 = vmatpush.msra.mxu0 0.0
    %3233 = vmatpush.msra.mxu0 0.0
    %3234 = vmatpush.msra.mxu0 0.0
    %3235 = vmatpush.msra.mxu0 0.0
    %3236 = vmatpush.msra.mxu0 0.0
    %3237 = vmatpush.msra.mxu0 %v3191
    %3238 = vmatpush.msra.mxu0 %v3190
    %3239 = vmatpush.msra.mxu0 %v3189
    %3240 = vmatpush.msra.mxu0 %v3188
    %3241 = vmatmul.f32.gmra.mxu0 %v3196
    %v3242 = vpop.f32.mrf.mxu0
    %v3243 = vadd.f32 0.0, %v3242
    %3244 = vmatmul.f32.gmra.mxu0 %v3199
    %v3245 = vpop.f32.mrf.mxu0
    %v3246 = vadd.f32 0.0, %v3245
    %3247 = vmatmul.f32.gmra.mxu0 %v3202
    %v3248 = vpop.f32.mrf.mxu0
    %v3249 = vadd.f32 0.0, %v3248
    %3250 = vmatmul.f32.gmra.mxu0 %v3205
    %v3251 = vpop.f32.mrf.mxu0
    %v3252 = vadd.f32 0.0, %v3251
    %3253 = vmatmul.f32.gmra.mxu0 %v3208
    %v3254 = vpop.f32.mrf.mxu0
    %v3255 = vadd.f32 0.0, %v3254
    %3256 = vmatmul.f32.gmra.mxu0 %v3211
    %v3257 = vpop.f32.mrf.mxu0
    %v3258 = vadd.f32 0.0, %v3257
    %3259 = vmatmul.f32.gmra.mxu0 %v3214
    %v3260 = vpop.f32.mrf.mxu0
    %v3261 = vadd.f32 0.0, %v3260
    %3262 = vmatmul.f32.gmra.mxu0 %v3217
    %v3263 = vpop.f32.mrf.mxu0
    %v3264 = vadd.f32 0.0, %v3263
    %3265 = vmatmul.f32.gmra.mxu0 %v3220
    %v3266 = vpop.f32.mrf.mxu0
    %v3267 = vadd.f32 0.0, %v3266
    %3268 = vmatmul.f32.gmra.mxu0 %v3223
    %v3269 = vpop.f32.mrf.mxu0
    %v3270 = vadd.f32 0.0, %v3269
    %3271 = vdwg.mxu0
    %vm3272 = vcmask 130048
    %v3274 = vsel %vm3272, %v3192, 0
    %v3277 = vsel %vm3272, %v3243, 0
    %v3280 = vsel %vm3272, %v3246, 0
    %v3283 = vsel %vm3272, %v3249, 0
    %v3286 = vsel %vm3272, %v3252, 0
    %v3289 = vsel %vm3272, %v3255, 0
    %v3292 = vsel %vm3272, %v3258, 0
    %v3295 = vsel %vm3272, %v3261, 0
    %v3298 = vsel %vm3272, %v3264, 0
    %v3301 = vsel %vm3272, %v3267, 0
    %v3304 = vsel %vm3272, %v3270, 0
    %3306 = vmatpush.xpose.msra.mxu0 0.0
    %3307 = vmatpush.xpose.msra.mxu0 0.0
    %3308 = vmatpush.xpose.msra.mxu0 0.0
    %3309 = vmatpush.xpose.msra.mxu0 0.0
    %3310 = vmatpush.xpose.msra.mxu0 0.0
    %3311 = vmatpush.xpose.msra.mxu0 0.0
    %3312 = vmatpush.xpose.msra.mxu0 %v3304
    %3313 = vmatpush.xpose.msra.mxu0 %v3301
    %3314 = vmatpush.xpose.msra.mxu0 %v3298
    %3315 = vmatpush.xpose.msra.mxu0 %v3295
    %3316 = vmatpush.xpose.msra.mxu0 %v3292
    %3317 = vmatpush.xpose.msra.mxu0 %v3289
    %3318 = vmatpush.xpose.msra.mxu0 %v3286
    %3319 = vmatpush.xpose.msra.mxu0 %v3283
    %3320 = vmatpush.xpose.msra.mxu0 %v3280
    %3321 = vmatpush.xpose.msra.mxu0 %v3277
    %3322 = vmatmul.f32.gmra.mxu0 %v3274
    %v3323 = vpop.f32.mrf.mxu0
    %v3324 = vadd.f32 0.0, %v3323
    %3325 = vdwg.mxu0
    %3326 = vmatpush.msra.mxu0 0.0
    %3327 = vmatpush.msra.mxu0 0.0
    %3328 = vmatpush.msra.mxu0 0.0
    %3329 = vmatpush.msra.mxu0 0.0
    %3330 = vmatpush.msra.mxu0 0.0
    %3331 = vmatpush.msra.mxu0 0.0
    %3332 = vmatpush.msra.mxu0 0.0
    %3333 = vmatpush.msra.mxu0 0.0
    %3334 = vmatpush.msra.mxu0 0.0
    %3335 = vmatpush.msra.mxu0 0.0
    %3336 = vmatpush.msra.mxu0 0.0
    %3337 = vmatpush.msra.mxu0 0.0
    %3338 = vmatpush.msra.mxu0 0.0
    %3339 = vmatpush.msra.mxu0 0.0
    %3340 = vmatpush.msra.mxu0 %v3194
    %3341 = vmatpush.msra.mxu0 %v3193
    %3342 = vmatmul.f32.gmra.mxu0 %v3277
    %v3343 = vpop.f32.mrf.mxu0
    %v3344 = vadd.f32 0.0, %v3343
    %3345 = vmatmul.f32.gmra.mxu0 %v3280
    %v3346 = vpop.f32.mrf.mxu0
    %v3347 = vadd.f32 0.0, %v3346
    %3348 = vmatmul.f32.gmra.mxu0 %v3283
    %v3349 = vpop.f32.mrf.mxu0
    %v3350 = vadd.f32 0.0, %v3349
    %3351 = vmatmul.f32.gmra.mxu0 %v3286
    %v3352 = vpop.f32.mrf.mxu0
    %v3353 = vadd.f32 0.0, %v3352
    %3354 = vmatmul.f32.gmra.mxu0 %v3289
    %v3355 = vpop.f32.mrf.mxu0
    %v3356 = vadd.f32 0.0, %v3355
    %3357 = vmatmul.f32.gmra.mxu0 %v3292
    %v3358 = vpop.f32.mrf.mxu0
    %v3359 = vadd.f32 0.0, %v3358
    %3360 = vmatmul.f32.gmra.mxu0 %v3295
    %v3361 = vpop.f32.mrf.mxu0
    %v3362 = vadd.f32 0.0, %v3361
    %3363 = vmatmul.f32.gmra.mxu0 %v3298
    %v3364 = vpop.f32.mrf.mxu0
    %v3365 = vadd.f32 0.0, %v3364
    %3366 = vmatmul.f32.gmra.mxu0 %v3301
    %v3367 = vpop.f32.mrf.mxu0
    %v3368 = vadd.f32 0.0, %v3367
    %3369 = vmatmul.f32.gmra.mxu0 %v3304
    %v3370 = vpop.f32.mrf.mxu0
    %v3371 = vadd.f32 0.0, %v3370
    %3372 = vdwg.mxu0
    %3374 = vset.pattern.permute.xlu0 0
    %3375 = vperm.xlu0 %3374, %v3344
    %v3376 = vpop.permute.xlu0 %3375
    %3379 = vset.pattern.permute.xlu0 0
    %3380 = vperm.xlu0 %3379, %v3347
    %v3381 = vpop.permute.xlu0 %3380
    %3384 = vset.pattern.permute.xlu0 0
    %3385 = vperm.xlu0 %3384, %v3350
    %v3386 = vpop.permute.xlu0 %3385
    %3389 = vset.pattern.permute.xlu0 0
    %3390 = vperm.xlu0 %3389, %v3353
    %v3391 = vpop.permute.xlu0 %3390
    %3394 = vset.pattern.permute.xlu0 0
    %3395 = vperm.xlu0 %3394, %v3356
    %v3396 = vpop.permute.xlu0 %3395
    %3399 = vset.pattern.permute.xlu0 0
    %3400 = vperm.xlu0 %3399, %v3359
    %v3401 = vpop.permute.xlu0 %3400
    %3404 = vset.pattern.permute.xlu0 0
    %3405 = vperm.xlu0 %3404, %v3362
    %v3406 = vpop.permute.xlu0 %3405
    %3409 = vset.pattern.permute.xlu0 0
    %3410 = vperm.xlu0 %3409, %v3365
    %v3411 = vpop.permute.xlu0 %3410
    %3414 = vset.pattern.permute.xlu0 0
    %3415 = vperm.xlu0 %3414, %v3368
    %v3416 = vpop.permute.xlu0 %3415
    %3419 = vset.pattern.permute.xlu0 0
    %3420 = vperm.xlu0 %3419, %v3371
    %v3421 = vpop.permute.xlu0 %3420
    %v3423 = vperm.slane %v3324, 0
    %v3424 = vadd.f32 %v3376, %v3423
    %v3425 = vadd.f32 %v3381, %v3423
    %v3426 = vadd.f32 %v3386, %v3423
    %v3427 = vadd.f32 %v3391, %v3423
    %v3428 = vadd.f32 %v3396, %v3423
    %v3429 = vadd.f32 %v3401, %v3423
    %v3430 = vadd.f32 %v3406, %v3423
    %v3431 = vadd.f32 %v3411, %v3423
    %v3432 = vadd.f32 %v3416, %v3423
    %v3433 = vadd.f32 %v3421, %v3423
    %vm3434 = vcmp.gt.f32.partialorder %v3424, 0.0
    %vm3435 = vcmp.gt.f32.partialorder %v3425, 0.0
    %vm3436 = vcmp.gt.f32.partialorder %v3426, 0.0
    %vm3437 = vcmp.gt.f32.partialorder %v3427, 0.0
    %vm3438 = vcmp.gt.f32.partialorder %v3428, 0.0
    %vm3439 = vcmp.gt.f32.partialorder %v3429, 0.0
    %vm3440 = vcmp.gt.f32.partialorder %v3430, 0.0
    %vm3441 = vcmp.gt.f32.partialorder %v3431, 0.0
    %vm3442 = vcmp.gt.f32.partialorder %v3432, 0.0
    %vm3443 = vcmp.gt.f32.partialorder %v3433, 0.0
    %v3444 = vmul.f32 %v3424, 0.2
    %v3445 = vmul.f32 %v3425, 0.2
    %v3446 = vmul.f32 %v3426, 0.2
    %v3447 = vmul.f32 %v3427, 0.2
    %v3448 = vmul.f32 %v3428, 0.2
    %v3449 = vmul.f32 %v3429, 0.2
    %v3450 = vmul.f32 %v3430, 0.2
    %v3451 = vmul.f32 %v3431, 0.2
    %v3452 = vmul.f32 %v3432, 0.2
    %v3453 = vmul.f32 %v3433, 0.2
    %v3454 = vsel %vm3434, %v3424, %v3444
    %v3455 = vsel %vm3435, %v3425, %v3445
    %v3456 = vsel %vm3436, %v3426, %v3446
    %v3457 = vsel %vm3437, %v3427, %v3447
    %v3458 = vsel %vm3438, %v3428, %v3448
    %v3459 = vsel %vm3439, %v3429, %v3449
    %v3460 = vsel %vm3440, %v3430, %v3450
    %v3461 = vsel %vm3441, %v3431, %v3451
    %v3462 = vsel %vm3442, %v3432, %v3452
    %v3463 = vsel %vm3443, %v3433, %v3453
    %v3464 = vadd.f32 %v3454, %v53
    %v3465 = vadd.f32 %v3455, %v54
    %v3466 = vadd.f32 %v3456, %v55
    %v3467 = vadd.f32 %v3457, %v56
    %v3468 = vadd.f32 %v3458, %v57
    %v3469 = vadd.f32 %v3459, %v58
    %v3470 = vadd.f32 %v3460, %v59
    %v3471 = vadd.f32 %v3461, %v60
    %v3472 = vadd.f32 %v3462, %v61
    %v3473 = vadd.f32 %v3463, %v62
    %v3474 = vsel %vm706, %v3464, -inf
    %3475 = vmax.xlane.f32.xlu0 %v3474
    %v3476 = vpop.xlane.xlu0 %3475
    %v3477 = vsel %vm706, %v3465, -inf
    %3478 = vmax.xlane.f32.xlu0 %v3477
    %v3479 = vpop.xlane.xlu0 %3478
    %v3480 = vsel %vm706, %v3466, -inf
    %3481 = vmax.xlane.f32.xlu0 %v3480
    %v3482 = vpop.xlane.xlu0 %3481
    %v3483 = vsel %vm706, %v3467, -inf
    %3484 = vmax.xlane.f32.xlu0 %v3483
    %v3485 = vpop.xlane.xlu0 %3484
    %v3486 = vsel %vm706, %v3468, -inf
    %3487 = vmax.xlane.f32.xlu0 %v3486
    %v3488 = vpop.xlane.xlu0 %3487
    %v3489 = vsel %vm706, %v3469, -inf
    %3490 = vmax.xlane.f32.xlu0 %v3489
    %v3491 = vpop.xlane.xlu0 %3490
    %v3492 = vsel %vm706, %v3470, -inf
    %3493 = vmax.xlane.f32.xlu0 %v3492
    %v3494 = vpop.xlane.xlu0 %3493
    %v3495 = vsel %vm706, %v3471, -inf
    %3496 = vmax.xlane.f32.xlu0 %v3495
    %v3497 = vpop.xlane.xlu0 %3496
    %v3498 = vsel %vm706, %v3472, -inf
    %3499 = vmax.xlane.f32.xlu0 %v3498
    %v3500 = vpop.xlane.xlu0 %3499
    %v3501 = vsel %vm706, %v3473, -inf
    %3502 = vmax.xlane.f32.xlu0 %v3501
    %v3503 = vpop.xlane.xlu0 %3502
    %v3504 = vsub.f32 %v3464, %v3476
    %v3505 = vsub.f32 %v3465, %v3479
    %v3506 = vsub.f32 %v3466, %v3482
    %v3507 = vsub.f32 %v3467, %v3485
    %v3508 = vsub.f32 %v3468, %v3488
    %v3509 = vsub.f32 %v3469, %v3491
    %v3510 = vsub.f32 %v3470, %v3494
    %v3511 = vsub.f32 %v3471, %v3497
    %v3512 = vsub.f32 %v3472, %v3500
    %v3513 = vsub.f32 %v3473, %v3503
    %v3514 = vmul.f32 %v3504, 1.442695
    %v3515 = vpow.pop %v3514
    %v3516 = vmul.f32 %v3505, 1.442695
    %v3517 = vpow.pop %v3516
    %v3518 = vmul.f32 %v3506, 1.442695
    %v3519 = vpow.pop %v3518
    %v3520 = vmul.f32 %v3507, 1.442695
    %v3521 = vpow.pop %v3520
    %v3522 = vmul.f32 %v3508, 1.442695
    %v3523 = vpow.pop %v3522
    %v3524 = vmul.f32 %v3509, 1.442695
    %v3525 = vpow.pop %v3524
    %v3526 = vmul.f32 %v3510, 1.442695
    %v3527 = vpow.pop %v3526
    %v3528 = vmul.f32 %v3511, 1.442695
    %v3529 = vpow.pop %v3528
    %v3530 = vmul.f32 %v3512, 1.442695
    %v3531 = vpow.pop %v3530
    %v3532 = vmul.f32 %v3513, 1.442695
    %v3533 = vpow.pop %v3532
    %v3534 = vmul.f32 %v3515, %v33
    %v3535 = vmul.f32 %v3517, %v34
    %v3536 = vmul.f32 %v3519, %v35
    %v3537 = vmul.f32 %v3521, %v36
    %v3538 = vmul.f32 %v3523, %v37
    %v3539 = vmul.f32 %v3525, %v38
    %v3540 = vmul.f32 %v3527, %v39
    %v3541 = vmul.f32 %v3529, %v40
    %v3542 = vmul.f32 %v3531, %v41
    %v3543 = vmul.f32 %v3533, %v42
    %v3544 = vsel %vm706, %v3534, 0.0
    %3545 = vadd.xlane.f32.xlu0 %v3544
    %v3546 = vpop.xlane.xlu0 %3545
    %v3547 = vsel %vm706, %v3535, 0.0
    %3548 = vadd.xlane.f32.xlu0 %v3547
    %v3549 = vpop.xlane.xlu0 %3548
    %v3550 = vsel %vm706, %v3536, 0.0
    %3551 = vadd.xlane.f32.xlu0 %v3550
    %v3552 = vpop.xlane.xlu0 %3551
    %v3553 = vsel %vm706, %v3537, 0.0
    %3554 = vadd.xlane.f32.xlu0 %v3553
    %v3555 = vpop.xlane.xlu0 %3554
    %v3556 = vsel %vm706, %v3538, 0.0
    %3557 = vadd.xlane.f32.xlu0 %v3556
    %v3558 = vpop.xlane.xlu0 %3557
    %v3559 = vsel %vm706, %v3539, 0.0
    %3560 = vadd.xlane.f32.xlu0 %v3559
    %v3561 = vpop.xlane.xlu0 %3560
    %v3562 = vsel %vm706, %v3540, 0.0
    %3563 = vadd.xlane.f32.xlu0 %v3562
    %v3564 = vpop.xlane.xlu0 %3563
    %v3565 = vsel %vm706, %v3541, 0.0
    %3566 = vadd.xlane.f32.xlu0 %v3565
    %v3567 = vpop.xlane.xlu0 %3566
    %v3568 = vsel %vm706, %v3542, 0.0
    %3569 = vadd.xlane.f32.xlu0 %v3568
    %v3570 = vpop.xlane.xlu0 %3569
    %v3571 = vsel %vm706, %v3543, 0.0
    %3572 = vadd.xlane.f32.xlu0 %v3571
    %v3573 = vpop.xlane.xlu0 %3572
    %v3574 = vadd.f32 %v3546, 1e-16
    %v3575 = vadd.f32 %v3549, 1e-16
    %v3576 = vadd.f32 %v3552, 1e-16
    %v3577 = vadd.f32 %v3555, 1e-16
    %v3578 = vadd.f32 %v3558, 1e-16
    %v3579 = vadd.f32 %v3561, 1e-16
    %v3580 = vadd.f32 %v3564, 1e-16
    %v3581 = vadd.f32 %v3567, 1e-16
    %v3582 = vadd.f32 %v3570, 1e-16
    %v3583 = vadd.f32 %v3573, 1e-16
    %v3584 = vrcp.pop %v3574
    %v3585 = vrcp.pop %v3575
    %v3586 = vrcp.pop %v3576
    %v3587 = vrcp.pop %v3577
    %v3588 = vrcp.pop %v3578
    %v3589 = vrcp.pop %v3579
    %v3590 = vrcp.pop %v3580
    %v3591 = vrcp.pop %v3581
    %v3592 = vrcp.pop %v3582
    %v3593 = vrcp.pop %v3583
    %v3595 = vsel %vm706, %v3534, 0
    %v3598 = vsel %vm706, %v3535, 0
    %v3601 = vsel %vm706, %v3536, 0
    %v3604 = vsel %vm706, %v3537, 0
    %v3607 = vsel %vm706, %v3538, 0
    %v3610 = vsel %vm706, %v3539, 0
    %v3613 = vsel %vm706, %v3540, 0
    %v3616 = vsel %vm706, %v3541, 0
    %v3619 = vsel %vm706, %v3542, 0
    %v3622 = vsel %vm706, %v3543, 0
    %3624 = vmatpush.msra.mxu0 0.0
    %3625 = vmatpush.msra.mxu0 0.0
    %3626 = vmatpush.msra.mxu0 0.0
    %3627 = vmatpush.msra.mxu0 0.0
    %3628 = vmatpush.msra.mxu0 0.0
    %3629 = vmatpush.msra.mxu0 0.0
    %3630 = vmatpush.msra.mxu0 %v3270
    %3631 = vmatpush.msra.mxu0 %v3267
    %3632 = vmatpush.msra.mxu0 %v3264
    %3633 = vmatpush.msra.mxu0 %v3261
    %3634 = vmatpush.msra.mxu0 %v3258
    %3635 = vmatpush.msra.mxu0 %v3255
    %3636 = vmatpush.msra.mxu0 %v3252
    %3637 = vmatpush.msra.mxu0 %v3249
    %3638 = vmatpush.msra.mxu0 %v3246
    %3639 = vmatpush.msra.mxu0 %v3243
    %3640 = vmatmul.f32.gmra.mxu0 %v3595
    %v3641 = vpop.f32.mrf.mxu0
    %v3642 = vadd.f32 0.0, %v3641
    %3643 = vmatmul.f32.gmra.mxu0 %v3598
    %v3644 = vpop.f32.mrf.mxu0
    %v3645 = vadd.f32 0.0, %v3644
    %3646 = vmatmul.f32.gmra.mxu0 %v3601
    %v3647 = vpop.f32.mrf.mxu0
    %v3648 = vadd.f32 0.0, %v3647
    %3649 = vmatmul.f32.gmra.mxu0 %v3604
    %v3650 = vpop.f32.mrf.mxu0
    %v3651 = vadd.f32 0.0, %v3650
    %3652 = vmatmul.f32.gmra.mxu0 %v3607
    %v3653 = vpop.f32.mrf.mxu0
    %v3654 = vadd.f32 0.0, %v3653
    %3655 = vmatmul.f32.gmra.mxu0 %v3610
    %v3656 = vpop.f32.mrf.mxu0
    %v3657 = vadd.f32 0.0, %v3656
    %3658 = vmatmul.f32.gmra.mxu0 %v3613
    %v3659 = vpop.f32.mrf.mxu0
    %v3660 = vadd.f32 0.0, %v3659
    %3661 = vmatmul.f32.gmra.mxu0 %v3616
    %v3662 = vpop.f32.mrf.mxu0
    %v3663 = vadd.f32 0.0, %v3662
    %3664 = vmatmul.f32.gmra.mxu0 %v3619
    %v3665 = vpop.f32.mrf.mxu0
    %v3666 = vadd.f32 0.0, %v3665
    %3667 = vmatmul.f32.gmra.mxu0 %v3622
    %v3668 = vpop.f32.mrf.mxu0
    %v3669 = vadd.f32 0.0, %v3668
    %3670 = vdwg.mxu0
    %v3671 = vmul.f32 %v3642, %v3584
    %v3672 = vmul.f32 %v3645, %v3585
    %v3673 = vmul.f32 %v3648, %v3586
    %v3674 = vmul.f32 %v3651, %v3587
    %v3675 = vmul.f32 %v3654, %v3588
    %v3676 = vmul.f32 %v3657, %v3589
    %v3677 = vmul.f32 %v3660, %v3590
    %v3678 = vmul.f32 %v3663, %v3591
    %v3679 = vmul.f32 %v3666, %v3592
    %v3680 = vmul.f32 %v3669, %v3593
    %vm3681 = vcmp.gt.f32.partialorder %v3671, 0.0
    %vm3682 = vcmp.gt.f32.partialorder %v3672, 0.0
    %vm3683 = vcmp.gt.f32.partialorder %v3673, 0.0
    %vm3684 = vcmp.gt.f32.partialorder %v3674, 0.0
    %vm3685 = vcmp.gt.f32.partialorder %v3675, 0.0
    %vm3686 = vcmp.gt.f32.partialorder %v3676, 0.0
    %vm3687 = vcmp.gt.f32.partialorder %v3677, 0.0
    %vm3688 = vcmp.gt.f32.partialorder %v3678, 0.0
    %vm3689 = vcmp.gt.f32.partialorder %v3679, 0.0
    %vm3690 = vcmp.gt.f32.partialorder %v3680, 0.0
    %v3691 = vmin.f32 %v3671, 0.0
    %v3692 = vmin.f32 %v3672, 0.0
    %v3693 = vmin.f32 %v3673, 0.0
    %v3694 = vmin.f32 %v3674, 0.0
    %v3695 = vmin.f32 %v3675, 0.0
    %v3696 = vmin.f32 %v3676, 0.0
    %v3697 = vmin.f32 %v3677, 0.0
    %v3698 = vmin.f32 %v3678, 0.0
    %v3699 = vmin.f32 %v3679, 0.0
    %v3700 = vmin.f32 %v3680, 0.0
    %v3701 = vmul.f32 %v3691, 1.442695
    %v3702 = vpow.pop %v3701
    %v3703 = vmul.f32 %v3692, 1.442695
    %v3704 = vpow.pop %v3703
    %v3705 = vmul.f32 %v3693, 1.442695
    %v3706 = vpow.pop %v3705
    %v3707 = vmul.f32 %v3694, 1.442695
    %v3708 = vpow.pop %v3707
    %v3709 = vmul.f32 %v3695, 1.442695
    %v3710 = vpow.pop %v3709
    %v3711 = vmul.f32 %v3696, 1.442695
    %v3712 = vpow.pop %v3711
    %v3713 = vmul.f32 %v3697, 1.442695
    %v3714 = vpow.pop %v3713
    %v3715 = vmul.f32 %v3698, 1.442695
    %v3716 = vpow.pop %v3715
    %v3717 = vmul.f32 %v3699, 1.442695
    %v3718 = vpow.pop %v3717
    %v3719 = vmul.f32 %v3700, 1.442695
    %v3720 = vpow.pop %v3719
    %v3721 = vsub.f32 %v3702, 1.0
    %v3722 = vsub.f32 %v3704, 1.0
    %v3723 = vsub.f32 %v3706, 1.0
    %v3724 = vsub.f32 %v3708, 1.0
    %v3725 = vsub.f32 %v3710, 1.0
    %v3726 = vsub.f32 %v3712, 1.0
    %v3727 = vsub.f32 %v3714, 1.0
    %v3728 = vsub.f32 %v3716, 1.0
    %v3729 = vsub.f32 %v3718, 1.0
    %v3730 = vsub.f32 %v3720, 1.0
    %v3731 = vsel %vm3681, %v3671, %v3721
    %v3732 = vsel %vm3682, %v3672, %v3722
    %v3733 = vsel %vm3683, %v3673, %v3723
    %v3734 = vsel %vm3684, %v3674, %v3724
    %v3735 = vsel %vm3685, %v3675, %v3725
    %v3736 = vsel %vm3686, %v3676, %v3726
    %v3737 = vsel %vm3687, %v3677, %v3727
    %v3738 = vsel %vm3688, %v3678, %v3728
    %v3739 = vsel %vm3689, %v3679, %v3729
    %v3740 = vsel %vm3690, %v3680, %v3730
    %3741 = vst.msk [vmem:[#allocation5] sm:$0xff] %vm3272, %v3731
    %3742 = vst.msk [vmem:[#allocation5 + $0x8] sm:$0xff] %vm3272, %v3732
    %v3743 = vld [vmem:[#allocation2 + $0xb8] sm:$0xff]
    %v3744 = vld [vmem:[#allocation2 + $0xc0] sm:$0xff]
    %v3746 = vsel %vm3272, %v3743, 0
    %v3749 = vsel %vm3272, %v3744, 0
    %v3752 = vsel %vm3272, %v3733, 0
    %v3755 = vsel %vm3272, %v3734, 0
    %v3758 = vsel %vm3272, %v3735, 0
    %v3761 = vsel %vm3272, %v3736, 0
    %v3764 = vsel %vm3272, %v3737, 0
    %v3767 = vsel %vm3272, %v3738, 0
    %v3770 = vsel %vm3272, %v3739, 0
    %v3773 = vsel %vm3272, %v3740, 0
    %3775 = vmatpush.xpose.msra.mxu0 0.0
    %3776 = vmatpush.xpose.msra.mxu0 0.0
    %3777 = vmatpush.xpose.msra.mxu0 0.0
    %3778 = vmatpush.xpose.msra.mxu0 0.0
    %3779 = vmatpush.xpose.msra.mxu0 0.0
    %3780 = vmatpush.xpose.msra.mxu0 0.0
    %3781 = vmatpush.xpose.msra.mxu0 0.0
    %3782 = vmatpush.xpose.msra.mxu0 0.0
    %3783 = vmatpush.xpose.msra.mxu0 %v3773
    %3784 = vmatpush.xpose.msra.mxu0 %v3770
    %3785 = vmatpush.xpose.msra.mxu0 %v3767
    %3786 = vmatpush.xpose.msra.mxu0 %v3764
    %3787 = vmatpush.xpose.msra.mxu0 %v3761
    %3788 = vmatpush.xpose.msra.mxu0 %v3758
    %3789 = vmatpush.xpose.msra.mxu0 %v3755
    %3790 = vmatpush.xpose.msra.mxu0 %v3752
    %3791 = vmatmul.f32.gmra.mxu0 %v3746
    %v3792 = vpop.f32.mrf.mxu0
    %v3793 = vadd.f32 0.0, %v3792
    %3794 = vmatmul.f32.gmra.mxu0 %v3749
    %v3795 = vpop.f32.mrf.mxu0
    %v3796 = vadd.f32 0.0, %v3795
    %3797 = vdwg.mxu0
    %3798 = vst.msk [vmem:[%s3] sm:$0xff] %vm72, %v3793
    %3799 = vst.msk [vmem:[%s3 + $0x8] sm:$0xff] %vm72, %v3796
    // Predicated region
    $region18: #{base_avg_forward.1} parent=1 // pred_check
      _
    $region19: #{base_avg_forward.1} parent=1 // pred_check_branch
      %3801 = sbr.rel (0) target = $region21
    $region20: #{base_avg_forward.1} parent=1 // pred_region
      _
    $region21: #{base_avg_forward.1} parent=1 // pred_fallthru
      _
    // Predicated region
    $region22: #{base_avg_forward.1} parent=1 // pred_check
      _
    $region23: #{base_avg_forward.1} parent=1 // pred_check_branch
      %3803 = sbr.rel (0) target = $region25
    $region24: #{base_avg_forward.1} parent=1 // pred_region
      %3805 = vsyncadd [#allocation4], 0
      %s3806 = sshll.u32 [#allocation5], 4
      %s3807 = int_to_ptr.vmem [resolvable:$true] %s3806
      %s3808 = sshll.u32 %s4, 4
      %s3809 = int_to_ptr.hbm [resolvable:$true] %s3808
      %3814 = dma.vmem_to_hbm [thread:$0]  %s3807, 256, %s3809, [#allocation4], 128, 128, 8
    $region25: #{base_avg_forward.1} parent=1 // pred_fallthru
      _
    // Predicated region
    $region26: #{base_avg_forward.1} parent=1 // pred_check
      _
    $region27: #{base_avg_forward.1} parent=1 // pred_check_branch
      %3816 = sbr.rel (0) target = $region29
    $region28: #{base_avg_forward.1} parent=1 // pred_region
      _
    $region29: #{base_avg_forward.1} parent=1 // pred_fallthru
      _
    // Predicated region
    $region30: #{base_avg_forward.1} parent=1 // pred_check
      _
    $region31: #{base_avg_forward.1} parent=1 // pred_check_branch
      %3818 = sbr.rel (0) target = $region33
    $region32: #{base_avg_forward.1} parent=1 // pred_region
      %3820 = dma.done [#allocation4], 256
    $region33: #{base_avg_forward.1} parent=1 // pred_fallthru
      _
    %3821 = vsyncpa [#allocation3], 1
    %3822 = vsyncpa [#allocation4], 1

</llo_original>
